<compile_context>
chip_gen: v7x
topology: tpu7x:2x2x1
jax: 0.10.0
libtpu: 0.0.40
codegen_flags: <defaults>
</compile_context>

<pallas_src>
import functools

import jax
import jax.numpy as jnp
from jax.experimental import pallas as pl
from jax.experimental.pallas import tpu as pltpu


# ----------------------- 3x3 helpers on (1,1) VPU values -------------------- #

def _det3(m):
    return (m[0][0] * (m[1][1] * m[2][2] - m[1][2] * m[2][1])
            - m[0][1] * (m[1][0] * m[2][2] - m[1][2] * m[2][0])
            + m[0][2] * (m[1][0] * m[2][1] - m[1][1] * m[2][0]))


def _cof3(m):
    """Cofactor matrix; rows are cyclic cross products of the rows of m."""
    return [
        [m[1][1] * m[2][2] - m[1][2] * m[2][1],
         m[1][2] * m[2][0] - m[1][0] * m[2][2],
         m[1][0] * m[2][1] - m[1][1] * m[2][0]],
        [m[2][1] * m[0][2] - m[2][2] * m[0][1],
         m[2][2] * m[0][0] - m[2][0] * m[0][2],
         m[2][0] * m[0][1] - m[2][1] * m[0][0]],
        [m[0][1] * m[1][2] - m[0][2] * m[1][1],
         m[0][2] * m[1][0] - m[0][0] * m[1][2],
         m[0][0] * m[1][1] - m[0][1] * m[1][0]],
    ]


def _polar3_newton(m, iters):
    """Orthogonal polar factor (== U @ Vh of the SVD) of a 3x3 matrix.

    Scaled Newton:  Q <- 0.5 * (mu*Q + (1/mu) * Q^{-T}),  mu = |det Q|^{-1/3},
    with Q^{-T} = cof(Q)/det(Q).  Pure elementwise f32 ops on (1,1) tiles
    (plus one exp/log pair on the EUP per step); ~70 ops / iteration.
    """
    q = [[m[i][j] for j in range(3)] for i in range(3)]
    for _ in range(iters):
        det = _det3(q)
        cof = _cof3(q)
        abs_det = jnp.abs(det) + 1e-30
        mu = jnp.exp(-(1.0 / 3.0) * jnp.log(abs_det))            # |det|^{-1/3}
        det_safe = jnp.where(det < 0.0, det - 1e-30, det + 1e-30)
        inv_scale = 1.0 / (mu * det_safe)
        q = [[0.5 * (mu * q[i][j] + inv_scale * cof[i][j]) for j in range(3)]
             for i in range(3)]
    return q


# --------------------------------- kernel ----------------------------------- #

def _tm_kernel(x_ref, y_ref, o_ref,
               sx_ref, sy_ref, sxy_ref, rot_ref, acc_ref,
               *, n, tile, inv_n, inv_d0_sq, newton_iters):
    phase = pl.program_id(0)          # 0: moment accumulation, 1: TM reduction
    t = pl.program_id(1)              # point-axis tile
    num_tiles = pl.num_programs(1)

    @pl.when((phase == 0) & (t == 0))
    def _init():
        sx_ref[...] = jnp.zeros_like(sx_ref)
        sy_ref[...] = jnp.zeros_like(sy_ref)
        sxy_ref[...] = jnp.zeros_like(sxy_ref)
        acc_ref[...] = jnp.zeros_like(acc_ref)

    x = x_ref[...]                    # (3, tile) f32, padded lanes are zero
    y = y_ref[...]

    # ---- phase 0: accumulate first / second moments (padded lanes add 0) ----
    @pl.when(phase == 0)
    def _phase0():
        sx_ref[...] += jnp.sum(x, axis=1, keepdims=True)
        sy_ref[...] += jnp.sum(y, axis=1, keepdims=True)
        for k in range(3):            # direct column stores, no concatenate
            sxy_ref[:, k:k + 1] += jnp.sum(x * y[k:k + 1, :], axis=1,
                                           keepdims=True)

    # ---- phase boundary: 3x3 Kabsch rotation from the accumulated moments ---
    @pl.when((phase == 1) & (t == 0))
    def _kabsch():
        # C[i,k] = sum_n xc[i,n] yc[k,n] = Sxy[i,k] - Sx[i]*Sy[k]/N
        c = [[sxy_ref[i:i + 1, k:k + 1]
              - sx_ref[i:i + 1, 0:1] * sy_ref[k:k + 1, 0:1] * inv_n
              for k in range(3)] for i in range(3)]
        d_sign = jnp.where(_det3(c) < 0.0, -1.0, 1.0)   # det(U)*det(Vh)
        q = _polar3_newton(c, newton_iters)             # U @ Vh
        for i in range(3):                              # PyTorch quirk: scale
            q[i][2] = q[i][2] * d_sign                  # last COLUMN by d
        for i in range(3):
            for k in range(3):
                rot_ref[i:i + 1, k:k + 1] = q[i][k]

    # ---- phase 1: rotate, per-point distance, masked TM accumulation --------
    @pl.when(phase == 1)
    def _phase1():
        mx = sx_ref[...] * inv_n                        # (3,1) means from sums
        my = sy_ref[...] * inv_n
        xc = x - mx
        yc = y - my
        dist = jnp.zeros_like(xc[0:1, :])               # (1, tile)
        for k in range(3):                              # 9 broadcast FMAs
            xr_k = (rot_ref[0:1, k:k + 1] * xc[0:1, :]
                    + rot_ref[1:2, k:k + 1] * xc[1:2, :]
                    + rot_ref[2:3, k:k + 1] * xc[2:3, :])
            diff = xr_k - yc[k:k + 1, :]
            dist = dist + diff * diff
        s = 1.0 / (1.0 + dist * inv_d0_sq)
        lane = jax.lax.broadcasted_iota(jnp.int32, (1, tile), 1)
        valid = (t * tile + lane) < n                   # mask padded points
        s = jnp.where(valid, s, 0.0)
        acc_ref[...] += jnp.sum(s, axis=1, keepdims=True)

    @pl.when((phase == 1) & (t == num_tiles - 1))
    def _finalize():
        o_ref[...] = acc_ref[...] * inv_n


# -------------------------------- wrapper ------------------------------------ #

def tm_score_forward(inp, tgt, mtype="protein", *, max_tile=16384,
                     newton_iters=12):
    """Equivalent of TMScore(mtype).forward(input, target) for (N, 3) inputs."""
    n = int(inp.shape[0])
    if mtype == "protein":
        d0 = 1.24 * (n - 15) ** (1.0 / 3.0) - 1.8
    elif mtype == "rna":
        d0 = 0.6 * (n - 0.5) ** (1.0 / 3.0) - 2.5
    else:
        raise ValueError(f"unsupported molecule type: {mtype}")

    # Lane-dense layout: point axis on the 128-wide lane axis.
    x_t = inp.astype(jnp.float32).T                     # (3, N)
    y_t = tgt.astype(jnp.float32).T

    lane_pad = ((n + 127) // 128) * 128
    tile = min(max_tile, lane_pad)                      # multiple of 128
    num_tiles = pl.cdiv(lane_pad, tile)
    n_pad = num_tiles * tile
    if n_pad != n:
        pad = ((0, 0), (0, n_pad - n))
        x_t = jnp.pad(x_t, pad)                         # zeros: no-ops in sums
        y_t = jnp.pad(y_t, pad)

    kernel = functools.partial(
        _tm_kernel, n=n, tile=tile,
        inv_n=1.0 / float(n), inv_d0_sq=1.0 / (float(d0) ** 2),
        newton_iters=newton_iters)

    out = pl.pallas_call(
        kernel,
        out_shape=jax.ShapeDtypeStruct((1, 1), jnp.float32),
        grid_spec=pltpu.PrefetchScalarGridSpec(
            num_scalar_prefetch=0,
            grid=(2, num_tiles),                        # (phase, point tiles)
            in_specs=[pl.BlockSpec((3, tile), lambda p, t: (0, t)),
                      pl.BlockSpec((3, tile), lambda p, t: (0, t))],
            out_specs=pl.BlockSpec((1, 1), lambda p, t: (0, 0)),
            scratch_shapes=[
                pltpu.VMEM((3, 1), jnp.float32),        # sum x
                pltpu.VMEM((3, 1), jnp.float32),        # sum y
                pltpu.VMEM((3, 3), jnp.float32),        # sum x y^T
                pltpu.VMEM((3, 3), jnp.float32),        # rotation R
                pltpu.VMEM((1, 1), jnp.float32),        # TM numerator
            ]),
        compiler_params=pltpu.CompilerParams(
            dimension_semantics=("arbitrary", "arbitrary")),
    )(x_t, y_t)
    return out[0, 0]


# ---------------------------- reference (plain JAX) -------------------------- #

def _kabsch_rotation_ref(c):
    u, _, vh = jnp.linalg.svd(c)
    d = jnp.linalg.det(u) * jnp.linalg.det(vh)
    vh = vh.at[:, -1].set(vh[:, -1] * d)   # PyTorch source: last COLUMN of Vh
    return u @ vh


def _reference(inp, tgt, mtype="protein"):
    n = inp.shape[0]
    d0 = (1.24 * (n - 15) ** (1.0 / 3.0) - 1.8 if mtype == "protein"
          else 0.6 * (n - 0.5) ** (1.0 / 3.0) - 2.5)
    xc = inp - inp.mean(0, keepdims=True)
    yc = tgt - tgt.mean(0, keepdims=True)
    c = jnp.einsum("ji,jk->ik", xc, yc)
    r = _kabsch_rotation_ref(c)
    d = ((xc @ r - yc) ** 2).sum(-1)
    return (1.0 / (1.0 + d / d0 ** 2)).mean(-1)


# ----------------------------------- main ------------------------------------ #

if __name__ == "__main__":
    key = jax.random.PRNGKey(0)
    k1, k2 = jax.random.split(key)
    N = 64  # protein d0 factor requires N > 15

    x = jax.random.normal(k1, (N, 3), dtype=jnp.float32) * 3.0
    noise = 0.3 * jax.random.normal(k2, (N, 3), dtype=jnp.float32)

    # Case 1: nearly-aligned clouds (det(C) > 0 branch).
    y = x + noise
    score = jax.block_until_ready(tm_score_forward(x, y, mtype="protein"))
    ref = jax.block_until_ready(_reference(x, y, mtype="protein"))
    assert jnp.allclose(score, ref, rtol=1e-3, atol=1e-3), (score, ref)

    # Case 2: reflected target exercises the det(C) < 0 reflection fix.
    y_flip = x * jnp.array([1.0, 1.0, -1.0], jnp.float32) + noise
    score2 = jax.block_until_ready(tm_score_forward(x, y_flip, mtype="protein"))
    ref2 = jax.block_until_ready(_reference(x, y_flip, mtype="protein"))
    assert jnp.allclose(score2, ref2, rtol=1e-3, atol=1e-3), (score2, ref2)

    print("KERNEL_OK")
</pallas_src>

<mosaic_0001>
module attributes {stable_mosaic.version = 11 : i64} {
  func.func @_tm_kernel(%arg0: i32, %arg1: i32, %arg2: memref<3x128xf32, #tpu.memory_space<vmem>>, %arg3: memref<3x128xf32, #tpu.memory_space<vmem>>, %arg4: memref<1x1xf32, #tpu.memory_space<vmem>>, %arg5: memref<3x1xf32, #tpu.memory_space<vmem>>, %arg6: memref<3x1xf32, #tpu.memory_space<vmem>>, %arg7: memref<3x3xf32, #tpu.memory_space<vmem>>, %arg8: memref<3x3xf32, #tpu.memory_space<vmem>>, %arg9: memref<1x1xf32, #tpu.memory_space<vmem>>) attributes {dimension_semantics = [#tpu.dimension_semantics<arbitrary>, #tpu.dimension_semantics<arbitrary>], iteration_bounds = array<i64: 2, 1>, scalar_prefetch = 0 : i64, scratch_operands = 5 : i64, tpu.core_type = #tpu.core_type<tc>, window_params = [{transform_indices = @transform_0, window_bounds = array<i64: 3, 128>}, {transform_indices = @transform_1, window_bounds = array<i64: 3, 128>}, {pipeline_mode = #tpu.pipeline_mode<synchronous>, transform_indices = @transform_2, window_bounds = array<i64: 1, 1>}]} {
    %c0_i32 = arith.constant 0 : i32
    %0 = arith.cmpi eq, %arg0, %c0_i32 : i32
    %c0_i32_0 = arith.constant 0 : i32
    %1 = arith.cmpi eq, %arg1, %c0_i32_0 : i32
    %2 = arith.andi %0, %1 : i1
    %3 = arith.extui %2 : i1 to i32
    %c0_i32_1 = arith.constant 0 : i32
    %4 = arith.cmpi ne, %3, %c0_i32_1 : i32
    scf.if %4 {
      %cst = arith.constant 0.000000e+00 : f32
      %23 = vector.broadcast %cst : f32 to vector<3x1xf32>
      %c0_14 = arith.constant 0 : index
      %c0_15 = arith.constant 0 : index
      %24 = vector.load %arg5[%c0_14, %c0_15] : memref<3x1xf32, #tpu.memory_space<vmem>>, vector<3x1xf32>
      tpu.vector_store %arg5[%c0_14, %c0_15], %23 {strides = array<i32>} : memref<3x1xf32, #tpu.memory_space<vmem>>, vector<3x1xf32>,
      %cst_16 = arith.constant 0.000000e+00 : f32
      %25 = vector.broadcast %cst_16 : f32 to vector<3x1xf32>
      %c0_17 = arith.constant 0 : index
      %c0_18 = arith.constant 0 : index
      %26 = vector.load %arg6[%c0_17, %c0_18] : memref<3x1xf32, #tpu.memory_space<vmem>>, vector<3x1xf32>
      tpu.vector_store %arg6[%c0_17, %c0_18], %25 {strides = array<i32>} : memref<3x1xf32, #tpu.memory_space<vmem>>, vector<3x1xf32>,
      %cst_19 = arith.constant 0.000000e+00 : f32
      %27 = vector.broadcast %cst_19 : f32 to vector<3x3xf32>
      %c0_20 = arith.constant 0 : index
      %c0_21 = arith.constant 0 : index
      %28 = vector.load %arg7[%c0_20, %c0_21] : memref<3x3xf32, #tpu.memory_space<vmem>>, vector<3x3xf32>
      tpu.vector_store %arg7[%c0_20, %c0_21], %27 {strides = array<i32>} : memref<3x3xf32, #tpu.memory_space<vmem>>, vector<3x3xf32>,
      %cst_22 = arith.constant 0.000000e+00 : f32
      %29 = vector.broadcast %cst_22 : f32 to vector<1x1xf32>
      %c0_23 = arith.constant 0 : index
      %c0_24 = arith.constant 0 : index
      %30 = vector.load %arg9[%c0_23, %c0_24] : memref<1x1xf32, #tpu.memory_space<vmem>>, vector<1x1xf32>
      tpu.vector_store %arg9[%c0_23, %c0_24], %29 {strides = array<i32>} : memref<1x1xf32, #tpu.memory_space<vmem>>, vector<1x1xf32>,
    } else {
    }
    %c0 = arith.constant 0 : index
    %c0_2 = arith.constant 0 : index
    %5 = vector.load %arg2[%c0, %c0_2] : memref<3x128xf32, #tpu.memory_space<vmem>>, vector<3x128xf32>
    %c0_3 = arith.constant 0 : index
    %c0_4 = arith.constant 0 : index
    %6 = vector.load %arg3[%c0_3, %c0_4] : memref<3x128xf32, #tpu.memory_space<vmem>>, vector<3x128xf32>
    %c0_i32_5 = arith.constant 0 : i32
    %7 = arith.cmpi eq, %arg0, %c0_i32_5 : i32
    %8 = arith.extui %7 : i1 to i32
    %c0_i32_6 = arith.constant 0 : i32
    %9 = arith.cmpi ne, %8, %c0_i32_6 : i32
    scf.if %9 {
      %c0_14 = arith.constant 0 : index
      %c0_15 = arith.constant 0 : index
      %23 = vector.load %arg5[%c0_14, %c0_15] : memref<3x1xf32, #tpu.memory_space<vmem>>, vector<3x1xf32>
      %cst = arith.constant dense<0.000000e+00> : vector<3xf32>
      %24 = vector.multi_reduction <add>, %5, %cst [1] : vector<3x128xf32> to vector<3xf32>
      %25 = vector.shape_cast %24 : vector<3xf32> to vector<3x1xf32>
      %26 = arith.addf %23, %25 : vector<3x1xf32>
      %c0_16 = arith.constant 0 : index
      %c0_17 = arith.constant 0 : index
      %27 = vector.load %arg5[%c0_16, %c0_17] : memref<3x1xf32, #tpu.memory_space<vmem>>, vector<3x1xf32>
      tpu.vector_store %arg5[%c0_16, %c0_17], %26 {strides = array<i32>} : memref<3x1xf32, #tpu.memory_space<vmem>>, vector<3x1xf32>,
      %c0_18 = arith.constant 0 : index
      %c0_19 = arith.constant 0 : index
      %28 = vector.load %arg6[%c0_18, %c0_19] : memref<3x1xf32, #tpu.memory_space<vmem>>, vector<3x1xf32>
      %cst_20 = arith.constant dense<0.000000e+00> : vector<3xf32>
      %29 = vector.multi_reduction <add>, %6, %cst_20 [1] : vector<3x128xf32> to vector<3xf32>
      %30 = vector.shape_cast %29 : vector<3xf32> to vector<3x1xf32>
      %31 = arith.addf %28, %30 : vector<3x1xf32>
      %c0_21 = arith.constant 0 : index
      %c0_22 = arith.constant 0 : index
      %32 = vector.load %arg6[%c0_21, %c0_22] : memref<3x1xf32, #tpu.memory_space<vmem>>, vector<3x1xf32>
      tpu.vector_store %arg6[%c0_21, %c0_22], %31 {strides = array<i32>} : memref<3x1xf32, #tpu.memory_space<vmem>>, vector<3x1xf32>,
      %c0_23 = arith.constant 0 : index
      %c0_24 = arith.constant 0 : index
      %33 = vector.load %arg7[%c0_23, %c0_24] : memref<3x3xf32, #tpu.memory_space<vmem>>, vector<3x1xf32>
      %34 = vector.extract_strided_slice %6 {offsets = [0, 0], sizes = [1, 128], strides = [1, 1]} : vector<3x128xf32> to vector<1x128xf32>
      %35 = vector.broadcast %34 : vector<1x128xf32> to vector<3x128xf32>
      %36 = arith.mulf %5, %35 : vector<3x128xf32>
      %cst_25 = arith.constant dense<0.000000e+00> : vector<3xf32>
      %37 = vector.multi_reduction <add>, %36, %cst_25 [1] : vector<3x128xf32> to vector<3xf32>
      %38 = vector.shape_cast %37 : vector<3xf32> to vector<3x1xf32>
      %39 = arith.addf %33, %38 : vector<3x1xf32>
      %c0_26 = arith.constant 0 : index
      %c0_27 = arith.constant 0 : index
      %40 = vector.load %arg7[%c0_26, %c0_27] : memref<3x3xf32, #tpu.memory_space<vmem>>, vector<3x1xf32>
      tpu.vector_store %arg7[%c0_26, %c0_27], %39 {strides = array<i32>} : memref<3x3xf32, #tpu.memory_space<vmem>>, vector<3x1xf32>,
      %c0_28 = arith.constant 0 : index
      %c1 = arith.constant 1 : index
      %41 = vector.load %arg7[%c0_28, %c1] : memref<3x3xf32, #tpu.memory_space<vmem>>, vector<3x1xf32>
      %42 = vector.extract_strided_slice %6 {offsets = [1, 0], sizes = [1, 128], strides = [1, 1]} : vector<3x128xf32> to vector<1x128xf32>
      %43 = vector.broadcast %42 : vector<1x128xf32> to vector<3x128xf32>
      %44 = arith.mulf %5, %43 : vector<3x128xf32>
      %cst_29 = arith.constant dense<0.000000e+00> : vector<3xf32>
      %45 = vector.multi_reduction <add>, %44, %cst_29 [1] : vector<3x128xf32> to vector<3xf32>
      %46 = vector.shape_cast %45 : vector<3xf32> to vector<3x1xf32>
      %47 = arith.addf %41, %46 : vector<3x1xf32>
      %c0_30 = arith.constant 0 : index
      %c1_31 = arith.constant 1 : index
      %48 = vector.load %arg7[%c0_30, %c1_31] : memref<3x3xf32, #tpu.memory_space<vmem>>, vector<3x1xf32>
      tpu.vector_store %arg7[%c0_30, %c1_31], %47 {strides = array<i32>} : memref<3x3xf32, #tpu.memory_space<vmem>>, vector<3x1xf32>,
      %c0_32 = arith.constant 0 : index
      %c2 = arith.constant 2 : index
      %49 = vector.load %arg7[%c0_32, %c2] : memref<3x3xf32, #tpu.memory_space<vmem>>, vector<3x1xf32>
      %50 = vector.extract_strided_slice %6 {offsets = [2, 0], sizes = [1, 128], strides = [1, 1]} : vector<3x128xf32> to vector<1x128xf32>
      %51 = vector.broadcast %50 : vector<1x128xf32> to vector<3x128xf32>
      %52 = arith.mulf %5, %51 : vector<3x128xf32>
      %cst_33 = arith.constant dense<0.000000e+00> : vector<3xf32>
      %53 = vector.multi_reduction <add>, %52, %cst_33 [1] : vector<3x128xf32> to vector<3xf32>
      %54 = vector.shape_cast %53 : vector<3xf32> to vector<3x1xf32>
      %55 = arith.addf %49, %54 : vector<3x1xf32>
      %c0_34 = arith.constant 0 : index
      %c2_35 = arith.constant 2 : index
      %56 = vector.load %arg7[%c0_34, %c2_35] : memref<3x3xf32, #tpu.memory_space<vmem>>, vector<3x1xf32>
      tpu.vector_store %arg7[%c0_34, %c2_35], %55 {strides = array<i32>} : memref<3x3xf32, #tpu.memory_space<vmem>>, vector<3x1xf32>,
    } else {
    }
    %c1_i32 = arith.constant 1 : i32
    %10 = arith.cmpi eq, %arg0, %c1_i32 : i32
    %c0_i32_7 = arith.constant 0 : i32
    %11 = arith.cmpi eq, %arg1, %c0_i32_7 : i32
    %12 = arith.andi %10, %11 : i1
    %13 = arith.extui %12 : i1 to i32
    %c0_i32_8 = arith.constant 0 : i32
    %14 = arith.cmpi ne, %13, %c0_i32_8 : i32
    scf.if %14 {
      %c0_14 = arith.constant 0 : index
      %c0_15 = arith.constant 0 : index
      %23 = vector.load %arg7[%c0_14, %c0_15] : memref<3x3xf32, #tpu.memory_space<vmem>>, vector<1x1xf32>
      %c0_16 = arith.constant 0 : index
      %c0_17 = arith.constant 0 : index
      %24 = vector.load %arg5[%c0_16, %c0_17] : memref<3x1xf32, #tpu.memory_space<vmem>>, vector<1x1xf32>
      %c0_18 = arith.constant 0 : index
      %c0_19 = arith.constant 0 : index
      %25 = vector.load %arg6[%c0_18, %c0_19] : memref<3x1xf32, #tpu.memory_space<vmem>>, vector<1x1xf32>
      %26 = arith.mulf %24, %25 : vector<1x1xf32>
      %cst = arith.constant 1.562500e-02 : f32
      %27 = vector.broadcast %cst : f32 to vector<1x1xf32>
      %28 = arith.mulf %26, %27 : vector<1x1xf32>
      %29 = arith.subf %23, %28 : vector<1x1xf32>
      %c0_20 = arith.constant 0 : index
      %c1 = arith.constant 1 : index
      %30 = vector.load %arg7[%c0_20, %c1] : memref<3x3xf32, #tpu.memory_space<vmem>>, vector<1x1xf32>
      %c0_21 = arith.constant 0 : index
      %c0_22 = arith.constant 0 : index
      %31 = vector.load %arg5[%c0_21, %c0_22] : memref<3x1xf32, #tpu.memory_space<vmem>>, vector<1x1xf32>
      %c1_23 = arith.constant 1 : index
      %c0_24 = arith.constant 0 : index
      %32 = vector.load %arg6[%c1_23, %c0_24] : memref<3x1xf32, #tpu.memory_space<vmem>>, vector<1x1xf32>
      %33 = arith.mulf %31, %32 : vector<1x1xf32>
      %cst_25 = arith.constant 1.562500e-02 : f32
      %34 = vector.broadcast %cst_25 : f32 to vector<1x1xf32>
      %35 = arith.mulf %33, %34 : vector<1x1xf32>
      %36 = arith.subf %30, %35 : vector<1x1xf32>
      %c0_26 = arith.constant 0 : index
      %c2 = arith.constant 2 : index
      %37 = vector.load %arg7[%c0_26, %c2] : memref<3x3xf32, #tpu.memory_space<vmem>>, vector<1x1xf32>
      %c0_27 = arith.constant 0 : index
      %c0_28 = arith.constant 0 : index
      %38 = vector.load %arg5[%c0_27, %c0_28] : memref<3x1xf32, #tpu.memory_space<vmem>>, vector<1x1xf32>
      %c2_29 = arith.constant 2 : index
      %c0_30 = arith.constant 0 : index
      %39 = vector.load %arg6[%c2_29, %c0_30] : memref<3x1xf32, #tpu.memory_space<vmem>>, vector<1x1xf32>
      %40 = arith.mulf %38, %39 : vector<1x1xf32>
      %cst_31 = arith.constant 1.562500e-02 : f32
      %41 = vector.broadcast %cst_31 : f32 to vector<1x1xf32>
      %42 = arith.mulf %40, %41 : vector<1x1xf32>
      %43 = arith.subf %37, %42 : vector<1x1xf32>
      %c1_32 = arith.constant 1 : index
      %c0_33 = arith.constant 0 : index
      %44 = vector.load %arg7[%c1_32, %c0_33] : memref<3x3xf32, #tpu.memory_space<vmem>>, vector<1x1xf32>
      %c1_34 = arith.constant 1 : index
      %c0_35 = arith.constant 0 : index
      %45 = vector.load %arg5[%c1_34, %c0_35] : memref<3x1xf32, #tpu.memory_space<vmem>>, vector<1x1xf32>
      %c0_36 = arith.constant 0 : index
      %c0_37 = arith.constant 0 : index
      %46 = vector.load %arg6[%c0_36, %c0_37] : memref<3x1xf32, #tpu.memory_space<vmem>>, vector<1x1xf32>
      %47 = arith.mulf %45, %46 : vector<1x1xf32>
      %cst_38 = arith.constant 1.562500e-02 : f32
      %48 = vector.broadcast %cst_38 : f32 to vector<1x1xf32>
      %49 = arith.mulf %47, %48 : vector<1x1xf32>
      %50 = arith.subf %44, %49 : vector<1x1xf32>
      %c1_39 = arith.constant 1 : index
      %c1_40 = arith.constant 1 : index
      %51 = vector.load %arg7[%c1_39, %c1_40] : memref<3x3xf32, #tpu.memory_space<vmem>>, vector<1x1xf32>
      %c1_41 = arith.constant 1 : index
      %c0_42 = arith.constant 0 : index
      %52 = vector.load %arg5[%c1_41, %c0_42] : memref<3x1xf32, #tpu.memory_space<vmem>>, vector<1x1xf32>
      %c1_43 = arith.constant 1 : index
      %c0_44 = arith.constant 0 : index
      %53 = vector.load %arg6[%c1_43, %c0_44] : memref<3x1xf32, #tpu.memory_space<vmem>>, vector<1x1xf32>
      %54 = arith.mulf %52, %53 : vector<1x1xf32>
      %cst_45 = arith.constant 1.562500e-02 : f32
      %55 = vector.broadcast %cst_45 : f32 to vector<1x1xf32>
      %56 = arith.mulf %54, %55 : vector<1x1xf32>
      %57 = arith.subf %51, %56 : vector<1x1xf32>
      %c1_46 = arith.constant 1 : index
      %c2_47 = arith.constant 2 : index
      %58 = vector.load %arg7[%c1_46, %c2_47] : memref<3x3xf32, #tpu.memory_space<vmem>>, vector<1x1xf32>
      %c1_48 = arith.constant 1 : index
      %c0_49 = arith.constant 0 : index
      %59 = vector.load %arg5[%c1_48, %c0_49] : memref<3x1xf32, #tpu.memory_space<vmem>>, vector<1x1xf32>
      %c2_50 = arith.constant 2 : index
      %c0_51 = arith.constant 0 : index
      %60 = vector.load %arg6[%c2_50, %c0_51] : memref<3x1xf32, #tpu.memory_space<vmem>>, vector<1x1xf32>
      %61 = arith.mulf %59, %60 : vector<1x1xf32>
      %cst_52 = arith.constant 1.562500e-02 : f32
      %62 = vector.broadcast %cst_52 : f32 to vector<1x1xf32>
      %63 = arith.mulf %61, %62 : vector<1x1xf32>
      %64 = arith.subf %58, %63 : vector<1x1xf32>
      %c2_53 = arith.constant 2 : index
      %c0_54 = arith.constant 0 : index
      %65 = vector.load %arg7[%c2_53, %c0_54] : memref<3x3xf32, #tpu.memory_space<vmem>>, vector<1x1xf32>
      %c2_55 = arith.constant 2 : index
      %c0_56 = arith.constant 0 : index
      %66 = vector.load %arg5[%c2_55, %c0_56] : memref<3x1xf32, #tpu.memory_space<vmem>>, vector<1x1xf32>
      %c0_57 = arith.constant 0 : index
      %c0_58 = arith.constant 0 : index
      %67 = vector.load %arg6[%c0_57, %c0_58] : memref<3x1xf32, #tpu.memory_space<vmem>>, vector<1x1xf32>
      %68 = arith.mulf %66, %67 : vector<1x1xf32>
      %cst_59 = arith.constant 1.562500e-02 : f32
      %69 = vector.broadcast %cst_59 : f32 to vector<1x1xf32>
      %70 = arith.mulf %68, %69 : vector<1x1xf32>
      %71 = arith.subf %65, %70 : vector<1x1xf32>
      %c2_60 = arith.constant 2 : index
      %c1_61 = arith.constant 1 : index
      %72 = vector.load %arg7[%c2_60, %c1_61] : memref<3x3xf32, #tpu.memory_space<vmem>>, vector<1x1xf32>
      %c2_62 = arith.constant 2 : index
      %c0_63 = arith.constant 0 : index
      %73 = vector.load %arg5[%c2_62, %c0_63] : memref<3x1xf32, #tpu.memory_space<vmem>>, vector<1x1xf32>
      %c1_64 = arith.constant 1 : index
      %c0_65 = arith.constant 0 : index
      %74 = vector.load %arg6[%c1_64, %c0_65] : memref<3x1xf32, #tpu.memory_space<vmem>>, vector<1x1xf32>
      %75 = arith.mulf %73, %74 : vector<1x1xf32>
      %cst_66 = arith.constant 1.562500e-02 : f32
      %76 = vector.broadcast %cst_66 : f32 to vector<1x1xf32>
      %77 = arith.mulf %75, %76 : vector<1x1xf32>
      %78 = arith.subf %72, %77 : vector<1x1xf32>
      %c2_67 = arith.constant 2 : index
      %c2_68 = arith.constant 2 : index
      %79 = vector.load %arg7[%c2_67, %c2_68] : memref<3x3xf32, #tpu.memory_space<vmem>>, vector<1x1xf32>
      %c2_69 = arith.constant 2 : index
      %c0_70 = arith.constant 0 : index
      %80 = vector.load %arg5[%c2_69, %c0_70] : memref<3x1xf32, #tpu.memory_space<vmem>>, vector<1x1xf32>
      %c2_71 = arith.constant 2 : index
      %c0_72 = arith.constant 0 : index
      %81 = vector.load %arg6[%c2_71, %c0_72] : memref<3x1xf32, #tpu.memory_space<vmem>>, vector<1x1xf32>
      %82 = arith.mulf %80, %81 : vector<1x1xf32>
      %cst_73 = arith.constant 1.562500e-02 : f32
      %83 = vector.broadcast %cst_73 : f32 to vector<1x1xf32>
      %84 = arith.mulf %82, %83 : vector<1x1xf32>
      %85 = arith.subf %79, %84 : vector<1x1xf32>
      %86 = arith.mulf %57, %85 : vector<1x1xf32>
      %87 = arith.mulf %64, %78 : vector<1x1xf32>
      %88 = arith.subf %86, %87 : vector<1x1xf32>
      %89 = arith.mulf %29, %88 : vector<1x1xf32>
      %90 = arith.mulf %50, %85 : vector<1x1xf32>
      %91 = arith.mulf %64, %71 : vector<1x1xf32>
      %92 = arith.subf %90, %91 : vector<1x1xf32>
      %93 = arith.mulf %36, %92 : vector<1x1xf32>
      %94 = arith.subf %89, %93 : vector<1x1xf32>
      %95 = arith.mulf %50, %78 : vector<1x1xf32>
      %96 = arith.mulf %57, %71 : vector<1x1xf32>
      %97 = arith.subf %95, %96 : vector<1x1xf32>
      %98 = arith.mulf %43, %97 : vector<1x1xf32>
      %99 = arith.addf %94, %98 : vector<1x1xf32>
      %cst_74 = arith.constant 0.000000e+00 : f32
      %100 = vector.broadcast %cst_74 : f32 to vector<1x1xf32>
      %101 = arith.cmpf olt, %99, %100 : vector<1x1xf32>
      %cst_75 = arith.constant -1.000000e+00 : f32
      %cst_76 = arith.constant 1.000000e+00 : f32
      %102 = vector.broadcast %cst_75 : f32 to vector<1x1xf32>
      %103 = vector.broadcast %cst_76 : f32 to vector<1x1xf32>
      %104 = arith.select %101, %102, %103 : vector<1x1xi1>, vector<1x1xf32>
      %105 = arith.mulf %57, %85 : vector<1x1xf32>
      %106 = arith.mulf %64, %78 : vector<1x1xf32>
      %107 = arith.subf %105, %106 : vector<1x1xf32>
      %108 = arith.mulf %29, %107 : vector<1x1xf32>
      %109 = arith.mulf %50, %85 : vector<1x1xf32>
      %110 = arith.mulf %64, %71 : vector<1x1xf32>
      %111 = arith.subf %109, %110 : vector<1x1xf32>
      %112 = arith.mulf %36, %111 : vector<1x1xf32>
      %113 = arith.subf %108, %112 : vector<1x1xf32>
      %114 = arith.mulf %50, %78 : vector<1x1xf32>
      %115 = arith.mulf %57, %71 : vector<1x1xf32>
      %116 = arith.subf %114, %115 : vector<1x1xf32>
      %117 = arith.mulf %43, %116 : vector<1x1xf32>
      %118 = arith.addf %113, %117 : vector<1x1xf32>
      %119 = arith.mulf %57, %85 : vector<1x1xf32>
      %120 = arith.mulf %64, %78 : vector<1x1xf32>
      %121 = arith.subf %119, %120 : vector<1x1xf32>
      %122 = arith.mulf %64, %71 : vector<1x1xf32>
      %123 = arith.mulf %50, %85 : vector<1x1xf32>
      %124 = arith.subf %122, %123 : vector<1x1xf32>
      %125 = arith.mulf %50, %78 : vector<1x1xf32>
      %126 = arith.mulf %57, %71 : vector<1x1xf32>
      %127 = arith.subf %125, %126 : vector<1x1xf32>
      %128 = arith.mulf %78, %43 : vector<1x1xf32>
      %129 = arith.mulf %85, %36 : vector<1x1xf32>
      %130 = arith.subf %128, %129 : vector<1x1xf32>
      %131 = arith.mulf %85, %29 : vector<1x1xf32>
      %132 = arith.mulf %71, %43 : vector<1x1xf32>
      %133 = arith.subf %131, %132 : vector<1x1xf32>
      %134 = arith.mulf %71, %36 : vector<1x1xf32>
      %135 = arith.mulf %78, %29 : vector<1x1xf32>
      %136 = arith.subf %134, %135 : vector<1x1xf32>
      %137 = arith.mulf %36, %64 : vector<1x1xf32>
      %138 = arith.mulf %43, %57 : vector<1x1xf32>
      %139 = arith.subf %137, %138 : vector<1x1xf32>
      %140 = arith.mulf %43, %50 : vector<1x1xf32>
      %141 = arith.mulf %29, %64 : vector<1x1xf32>
      %142 = arith.subf %140, %141 : vector<1x1xf32>
      %143 = arith.mulf %29, %57 : vector<1x1xf32>
      %144 = arith.mulf %36, %50 : vector<1x1xf32>
      %145 = arith.subf %143, %144 : vector<1x1xf32>
      %146 = math.absf %118 : vector<1x1xf32>
      %cst_77 = arith.constant 1.000000e-30 : f32
      %147 = vector.broadcast %cst_77 : f32 to vector<1x1xf32>
      %148 = arith.addf %146, %147 : vector<1x1xf32>
      %149 = math.log %148 : vector<1x1xf32>
      %cst_78 = arith.constant -0.333333343 : f32
      %150 = vector.broadcast %cst_78 : f32 to vector<1x1xf32>
      %151 = arith.mulf %150, %149 : vector<1x1xf32>
      %152 = math.exp %151 : vector<1x1xf32>
      %cst_79 = arith.constant 0.000000e+00 : f32
      %153 = vector.broadcast %cst_79 : f32 to vector<1x1xf32>
      %154 = arith.cmpf olt, %118, %153 : vector<1x1xf32>
      %cst_80 = arith.constant 1.000000e-30 : f32
      %155 = vector.broadcast %cst_80 : f32 to vector<1x1xf32>
      %156 = arith.subf %118, %155 : vector<1x1xf32>
      %cst_81 = arith.constant 1.000000e-30 : f32
      %157 = vector.broadcast %cst_81 : f32 to vector<1x1xf32>
      %158 = arith.addf %118, %157 : vector<1x1xf32>
      %159 = arith.select %154, %156, %158 : vector<1x1xi1>, vector<1x1xf32>
      %160 = arith.mulf %152, %159 : vector<1x1xf32>
      %cst_82 = arith.constant 1.000000e+00 : f32
      %161 = vector.broadcast %cst_82 : f32 to vector<1x1xf32>
      %162 = arith.divf %161, %160 : vector<1x1xf32>
      %163 = arith.mulf %152, %29 : vector<1x1xf32>
      %164 = arith.mulf %162, %121 : vector<1x1xf32>
      %165 = arith.addf %163, %164 : vector<1x1xf32>
      %cst_83 = arith.constant 5.000000e-01 : f32
      %166 = vector.broadcast %cst_83 : f32 to vector<1x1xf32>
      %167 = arith.mulf %166, %165 : vector<1x1xf32>
      %168 = arith.mulf %152, %36 : vector<1x1xf32>
      %169 = arith.mulf %162, %124 : vector<1x1xf32>
      %170 = arith.addf %168, %169 : vector<1x1xf32>
      %cst_84 = arith.constant 5.000000e-01 : f32
      %171 = vector.broadcast %cst_84 : f32 to vector<1x1xf32>
      %172 = arith.mulf %171, %170 : vector<1x1xf32>
      %173 = arith.mulf %152, %43 : vector<1x1xf32>
      %174 = arith.mulf %162, %127 : vector<1x1xf32>
      %175 = arith.addf %173, %174 : vector<1x1xf32>
      %cst_85 = arith.constant 5.000000e-01 : f32
      %176 = vector.broadcast %cst_85 : f32 to vector<1x1xf32>
      %177 = arith.mulf %176, %175 : vector<1x1xf32>
      %178 = arith.mulf %152, %50 : vector<1x1xf32>
      %179 = arith.mulf %162, %130 : vector<1x1xf32>
      %180 = arith.addf %178, %179 : vector<1x1xf32>
      %cst_86 = arith.constant 5.000000e-01 : f32
      %181 = vector.broadcast %cst_86 : f32 to vector<1x1xf32>
      %182 = arith.mulf %181, %180 : vector<1x1xf32>
      %183 = arith.mulf %152, %57 : vector<1x1xf32>
      %184 = arith.mulf %162, %133 : vector<1x1xf32>
      %185 = arith.addf %183, %184 : vector<1x1xf32>
      %cst_87 = arith.constant 5.000000e-01 : f32
      %186 = vector.broadcast %cst_87 : f32 to vector<1x1xf32>
      %187 = arith.mulf %186, %185 : vector<1x1xf32>
      %188 = arith.mulf %152, %64 : vector<1x1xf32>
      %189 = arith.mulf %162, %136 : vector<1x1xf32>
      %190 = arith.addf %188, %189 : vector<1x1xf32>
      %cst_88 = arith.constant 5.000000e-01 : f32
      %191 = vector.broadcast %cst_88 : f32 to vector<1x1xf32>
      %192 = arith.mulf %191, %190 : vector<1x1xf32>
      %193 = arith.mulf %152, %71 : vector<1x1xf32>
      %194 = arith.mulf %162, %139 : vector<1x1xf32>
      %195 = arith.addf %193, %194 : vector<1x1xf32>
      %cst_89 = arith.constant 5.000000e-01 : f32
      %196 = vector.broadcast %cst_89 : f32 to vector<1x1xf32>
      %197 = arith.mulf %196, %195 : vector<1x1xf32>
      %198 = arith.mulf %152, %78 : vector<1x1xf32>
      %199 = arith.mulf %162, %142 : vector<1x1xf32>
      %200 = arith.addf %198, %199 : vector<1x1xf32>
      %cst_90 = arith.constant 5.000000e-01 : f32
      %201 = vector.broadcast %cst_90 : f32 to vector<1x1xf32>
      %202 = arith.mulf %201, %200 : vector<1x1xf32>
      %203 = arith.mulf %152, %85 : vector<1x1xf32>
      %204 = arith.mulf %162, %145 : vector<1x1xf32>
      %205 = arith.addf %203, %204 : vector<1x1xf32>
      %cst_91 = arith.constant 5.000000e-01 : f32
      %206 = vector.broadcast %cst_91 : f32 to vector<1x1xf32>
      %207 = arith.mulf %206, %205 : vector<1x1xf32>
      %208 = arith.mulf %187, %207 : vector<1x1xf32>
      %209 = arith.mulf %192, %202 : vector<1x1xf32>
      %210 = arith.subf %208, %209 : vector<1x1xf32>
      %211 = arith.mulf %167, %210 : vector<1x1xf32>
      %212 = arith.mulf %182, %207 : vector<1x1xf32>
      %213 = arith.mulf %192, %197 : vector<1x1xf32>
      %214 = arith.subf %212, %213 : vector<1x1xf32>
      %215 = arith.mulf %172, %214 : vector<1x1xf32>
      %216 = arith.subf %211, %215 : vector<1x1xf32>
      %217 = arith.mulf %182, %202 : vector<1x1xf32>
      %218 = arith.mulf %187, %197 : vector<1x1xf32>
      %219 = arith.subf %217, %218 : vector<1x1xf32>
      %220 = arith.mulf %177, %219 : vector<1x1xf32>
      %221 = arith.addf %216, %220 : vector<1x1xf32>
      %222 = arith.mulf %187, %207 : vector<1x1xf32>
      %223 = arith.mulf %192, %202 : vector<1x1xf32>
      %224 = arith.subf %222, %223 : vector<1x1xf32>
      %225 = arith.mulf %192, %197 : vector<1x1xf32>
      %226 = arith.mulf %182, %207 : vector<1x1xf32>
      %227 = arith.subf %225, %226 : vector<1x1xf32>
      %228 = arith.mulf %182, %202 : vector<1x1xf32>
      %229 = arith.mulf %187, %197 : vector<1x1xf32>
      %230 = arith.subf %228, %229 : vector<1x1xf32>
      %231 = arith.mulf %202, %177 : vector<1x1xf32>
      %232 = arith.mulf %207, %172 : vector<1x1xf32>
      %233 = arith.subf %231, %232 : vector<1x1xf32>
      %234 = arith.mulf %207, %167 : vector<1x1xf32>
      %235 = arith.mulf %197, %177 : vector<1x1xf32>
      %236 = arith.subf %234, %235 : vector<1x1xf32>
      %237 = arith.mulf %197, %172 : vector<1x1xf32>
      %238 = arith.mulf %202, %167 : vector<1x1xf32>
      %239 = arith.subf %237, %238 : vector<1x1xf32>
      %240 = arith.mulf %172, %192 : vector<1x1xf32>
      %241 = arith.mulf %177, %187 : vector<1x1xf32>
      %242 = arith.subf %240, %241 : vector<1x1xf32>
      %243 = arith.mulf %177, %182 : vector<1x1xf32>
      %244 = arith.mulf %167, %192 : vector<1x1xf32>
      %245 = arith.subf %243, %244 : vector<1x1xf32>
      %246 = arith.mulf %167, %187 : vector<1x1xf32>
      %247 = arith.mulf %172, %182 : vector<1x1xf32>
      %248 = arith.subf %246, %247 : vector<1x1xf32>
      %249 = math.absf %221 : vector<1x1xf32>
      %cst_92 = arith.constant 1.000000e-30 : f32
      %250 = vector.broadcast %cst_92 : f32 to vector<1x1xf32>
      %251 = arith.addf %249, %250 : vector<1x1xf32>
      %252 = math.log %251 : vector<1x1xf32>
      %cst_93 = arith.constant -0.333333343 : f32
      %253 = vector.broadcast %cst_93 : f32 to vector<1x1xf32>
      %254 = arith.mulf %253, %252 : vector<1x1xf32>
      %255 = math.exp %254 : vector<1x1xf32>
      %cst_94 = arith.constant 0.000000e+00 : f32
      %256 = vector.broadcast %cst_94 : f32 to vector<1x1xf32>
      %257 = arith.cmpf olt, %221, %256 : vector<1x1xf32>
      %cst_95 = arith.constant 1.000000e-30 : f32
      %258 = vector.broadcast %cst_95 : f32 to vector<1x1xf32>
      %259 = arith.subf %221, %258 : vector<1x1xf32>
      %cst_96 = arith.constant 1.000000e-30 : f32
      %260 = vector.broadcast %cst_96 : f32 to vector<1x1xf32>
      %261 = arith.addf %221, %260 : vector<1x1xf32>
      %262 = arith.select %257, %259, %261 : vector<1x1xi1>, vector<1x1xf32>
      %263 = arith.mulf %255, %262 : vector<1x1xf32>
      %cst_97 = arith.constant 1.000000e+00 : f32
      %264 = vector.broadcast %cst_97 : f32 to vector<1x1xf32>
      %265 = arith.divf %264, %263 : vector<1x1xf32>
      %266 = arith.mulf %255, %167 : vector<1x1xf32>
      %267 = arith.mulf %265, %224 : vector<1x1xf32>
      %268 = arith.addf %266, %267 : vector<1x1xf32>
      %cst_98 = arith.constant 5.000000e-01 : f32
      %269 = vector.broadcast %cst_98 : f32 to vector<1x1xf32>
      %270 = arith.mulf %269, %268 : vector<1x1xf32>
      %271 = arith.mulf %255, %172 : vector<1x1xf32>
      %272 = arith.mulf %265, %227 : vector<1x1xf32>
      %273 = arith.addf %271, %272 : vector<1x1xf32>
      %cst_99 = arith.constant 5.000000e-01 : f32
      %274 = vector.broadcast %cst_99 : f32 to vector<1x1xf32>
      %275 = arith.mulf %274, %273 : vector<1x1xf32>
      %276 = arith.mulf %255, %177 : vector<1x1xf32>
      %277 = arith.mulf %265, %230 : vector<1x1xf32>
      %278 = arith.addf %276, %277 : vector<1x1xf32>
      %cst_100 = arith.constant 5.000000e-01 : f32
      %279 = vector.broadcast %cst_100 : f32 to vector<1x1xf32>
      %280 = arith.mulf %279, %278 : vector<1x1xf32>
      %281 = arith.mulf %255, %182 : vector<1x1xf32>
      %282 = arith.mulf %265, %233 : vector<1x1xf32>
      %283 = arith.addf %281, %282 : vector<1x1xf32>
      %cst_101 = arith.constant 5.000000e-01 : f32
      %284 = vector.broadcast %cst_101 : f32 to vector<1x1xf32>
      %285 = arith.mulf %284, %283 : vector<1x1xf32>
      %286 = arith.mulf %255, %187 : vector<1x1xf32>
      %287 = arith.mulf %265, %236 : vector<1x1xf32>
      %288 = arith.addf %286, %287 : vector<1x1xf32>
      %cst_102 = arith.constant 5.000000e-01 : f32
      %289 = vector.broadcast %cst_102 : f32 to vector<1x1xf32>
      %290 = arith.mulf %289, %288 : vector<1x1xf32>
      %291 = arith.mulf %255, %192 : vector<1x1xf32>
      %292 = arith.mulf %265, %239 : vector<1x1xf32>
      %293 = arith.addf %291, %292 : vector<1x1xf32>
      %cst_103 = arith.constant 5.000000e-01 : f32
      %294 = vector.broadcast %cst_103 : f32 to vector<1x1xf32>
      %295 = arith.mulf %294, %293 : vector<1x1xf32>
      %296 = arith.mulf %255, %197 : vector<1x1xf32>
      %297 = arith.mulf %265, %242 : vector<1x1xf32>
      %298 = arith.addf %296, %297 : vector<1x1xf32>
      %cst_104 = arith.constant 5.000000e-01 : f32
      %299 = vector.broadcast %cst_104 : f32 to vector<1x1xf32>
      %300 = arith.mulf %299, %298 : vector<1x1xf32>
      %301 = arith.mulf %255, %202 : vector<1x1xf32>
      %302 = arith.mulf %265, %245 : vector<1x1xf32>
      %303 = arith.addf %301, %302 : vector<1x1xf32>
      %cst_105 = arith.constant 5.000000e-01 : f32
      %304 = vector.broadcast %cst_105 : f32 to vector<1x1xf32>
      %305 = arith.mulf %304, %303 : vector<1x1xf32>
      %306 = arith.mulf %255, %207 : vector<1x1xf32>
      %307 = arith.mulf %265, %248 : vector<1x1xf32>
      %308 = arith.addf %306, %307 : vector<1x1xf32>
      %cst_106 = arith.constant 5.000000e-01 : f32
      %309 = vector.broadcast %cst_106 : f32 to vector<1x1xf32>
      %310 = arith.mulf %309, %308 : vector<1x1xf32>
      %311 = arith.mulf %290, %310 : vector<1x1xf32>
      %312 = arith.mulf %295, %305 : vector<1x1xf32>
      %313 = arith.subf %311, %312 : vector<1x1xf32>
      %314 = arith.mulf %270, %313 : vector<1x1xf32>
      %315 = arith.mulf %285, %310 : vector<1x1xf32>
      %316 = arith.mulf %295, %300 : vector<1x1xf32>
      %317 = arith.subf %315, %316 : vector<1x1xf32>
      %318 = arith.mulf %275, %317 : vector<1x1xf32>
      %319 = arith.subf %314, %318 : vector<1x1xf32>
      %320 = arith.mulf %285, %305 : vector<1x1xf32>
      %321 = arith.mulf %290, %300 : vector<1x1xf32>
      %322 = arith.subf %320, %321 : vector<1x1xf32>
      %323 = arith.mulf %280, %322 : vector<1x1xf32>
      %324 = arith.addf %319, %323 : vector<1x1xf32>
      %325 = arith.mulf %290, %310 : vector<1x1xf32>
      %326 = arith.mulf %295, %305 : vector<1x1xf32>
      %327 = arith.subf %325, %326 : vector<1x1xf32>
      %328 = arith.mulf %295, %300 : vector<1x1xf32>
      %329 = arith.mulf %285, %310 : vector<1x1xf32>
      %330 = arith.subf %328, %329 : vector<1x1xf32>
      %331 = arith.mulf %285, %305 : vector<1x1xf32>
      %332 = arith.mulf %290, %300 : vector<1x1xf32>
      %333 = arith.subf %331, %332 : vector<1x1xf32>
      %334 = arith.mulf %305, %280 : vector<1x1xf32>
      %335 = arith.mulf %310, %275 : vector<1x1xf32>
      %336 = arith.subf %334, %335 : vector<1x1xf32>
      %337 = arith.mulf %310, %270 : vector<1x1xf32>
      %338 = arith.mulf %300, %280 : vector<1x1xf32>
      %339 = arith.subf %337, %338 : vector<1x1xf32>
      %340 = arith.mulf %300, %275 : vector<1x1xf32>
      %341 = arith.mulf %305, %270 : vector<1x1xf32>
      %342 = arith.subf %340, %341 : vector<1x1xf32>
      %343 = arith.mulf %275, %295 : vector<1x1xf32>
      %344 = arith.mulf %280, %290 : vector<1x1xf32>
      %345 = arith.subf %343, %344 : vector<1x1xf32>
      %346 = arith.mulf %280, %285 : vector<1x1xf32>
      %347 = arith.mulf %270, %295 : vector<1x1xf32>
      %348 = arith.subf %346, %347 : vector<1x1xf32>
      %349 = arith.mulf %270, %290 : vector<1x1xf32>
      %350 = arith.mulf %275, %285 : vector<1x1xf32>
      %351 = arith.subf %349, %350 : vector<1x1xf32>
      %352 = math.absf %324 : vector<1x1xf32>
      %cst_107 = arith.constant 1.000000e-30 : f32
      %353 = vector.broadcast %cst_107 : f32 to vector<1x1xf32>
      %354 = arith.addf %352, %353 : vector<1x1xf32>
      %355 = math.log %354 : vector<1x1xf32>
      %cst_108 = arith.constant -0.333333343 : f32
      %356 = vector.broadcast %cst_108 : f32 to vector<1x1xf32>
      %357 = arith.mulf %356, %355 : vector<1x1xf32>
      %358 = math.exp %357 : vector<1x1xf32>
      %cst_109 = arith.constant 0.000000e+00 : f32
      %359 = vector.broadcast %cst_109 : f32 to vector<1x1xf32>
      %360 = arith.cmpf olt, %324, %359 : vector<1x1xf32>
      %cst_110 = arith.constant 1.000000e-30 : f32
      %361 = vector.broadcast %cst_110 : f32 to vector<1x1xf32>
      %362 = arith.subf %324, %361 : vector<1x1xf32>
      %cst_111 = arith.constant 1.000000e-30 : f32
      %363 = vector.broadcast %cst_111 : f32 to vector<1x1xf32>
      %364 = arith.addf %324, %363 : vector<1x1xf32>
      %365 = arith.select %360, %362, %364 : vector<1x1xi1>, vector<1x1xf32>
      %366 = arith.mulf %358, %365 : vector<1x1xf32>
      %cst_112 = arith.constant 1.000000e+00 : f32
      %367 = vector.broadcast %cst_112 : f32 to vector<1x1xf32>
      %368 = arith.divf %367, %366 : vector<1x1xf32>
      %369 = arith.mulf %358, %270 : vector<1x1xf32>
      %370 = arith.mulf %368, %327 : vector<1x1xf32>
      %371 = arith.addf %369, %370 : vector<1x1xf32>
      %cst_113 = arith.constant 5.000000e-01 : f32
      %372 = vector.broadcast %cst_113 : f32 to vector<1x1xf32>
      %373 = arith.mulf %372, %371 : vector<1x1xf32>
      %374 = arith.mulf %358, %275 : vector<1x1xf32>
      %375 = arith.mulf %368, %330 : vector<1x1xf32>
      %376 = arith.addf %374, %375 : vector<1x1xf32>
      %cst_114 = arith.constant 5.000000e-01 : f32
      %377 = vector.broadcast %cst_114 : f32 to vector<1x1xf32>
      %378 = arith.mulf %377, %376 : vector<1x1xf32>
      %379 = arith.mulf %358, %280 : vector<1x1xf32>
      %380 = arith.mulf %368, %333 : vector<1x1xf32>
      %381 = arith.addf %379, %380 : vector<1x1xf32>
      %cst_115 = arith.constant 5.000000e-01 : f32
      %382 = vector.broadcast %cst_115 : f32 to vector<1x1xf32>
      %383 = arith.mulf %382, %381 : vector<1x1xf32>
      %384 = arith.mulf %358, %285 : vector<1x1xf32>
      %385 = arith.mulf %368, %336 : vector<1x1xf32>
      %386 = arith.addf %384, %385 : vector<1x1xf32>
      %cst_116 = arith.constant 5.000000e-01 : f32
      %387 = vector.broadcast %cst_116 : f32 to vector<1x1xf32>
      %388 = arith.mulf %387, %386 : vector<1x1xf32>
      %389 = arith.mulf %358, %290 : vector<1x1xf32>
      %390 = arith.mulf %368, %339 : vector<1x1xf32>
      %391 = arith.addf %389, %390 : vector<1x1xf32>
      %cst_117 = arith.constant 5.000000e-01 : f32
      %392 = vector.broadcast %cst_117 : f32 to vector<1x1xf32>
      %393 = arith.mulf %392, %391 : vector<1x1xf32>
      %394 = arith.mulf %358, %295 : vector<1x1xf32>
      %395 = arith.mulf %368, %342 : vector<1x1xf32>
      %396 = arith.addf %394, %395 : vector<1x1xf32>
      %cst_118 = arith.constant 5.000000e-01 : f32
      %397 = vector.broadcast %cst_118 : f32 to vector<1x1xf32>
      %398 = arith.mulf %397, %396 : vector<1x1xf32>
      %399 = arith.mulf %358, %300 : vector<1x1xf32>
      %400 = arith.mulf %368, %345 : vector<1x1xf32>
      %401 = arith.addf %399, %400 : vector<1x1xf32>
      %cst_119 = arith.constant 5.000000e-01 : f32
      %402 = vector.broadcast %cst_119 : f32 to vector<1x1xf32>
      %403 = arith.mulf %402, %401 : vector<1x1xf32>
      %404 = arith.mulf %358, %305 : vector<1x1xf32>
      %405 = arith.mulf %368, %348 : vector<1x1xf32>
      %406 = arith.addf %404, %405 : vector<1x1xf32>
      %cst_120 = arith.constant 5.000000e-01 : f32
      %407 = vector.broadcast %cst_120 : f32 to vector<1x1xf32>
      %408 = arith.mulf %407, %406 : vector<1x1xf32>
      %409 = arith.mulf %358, %310 : vector<1x1xf32>
      %410 = arith.mulf %368, %351 : vector<1x1xf32>
      %411 = arith.addf %409, %410 : vector<1x1xf32>
      %cst_121 = arith.constant 5.000000e-01 : f32
      %412 = vector.broadcast %cst_121 : f32 to vector<1x1xf32>
      %413 = arith.mulf %412, %411 : vector<1x1xf32>
      %414 = arith.mulf %393, %413 : vector<1x1xf32>
      %415 = arith.mulf %398, %408 : vector<1x1xf32>
      %416 = arith.subf %414, %415 : vector<1x1xf32>
      %417 = arith.mulf %373, %416 : vector<1x1xf32>
      %418 = arith.mulf %388, %413 : vector<1x1xf32>
      %419 = arith.mulf %398, %403 : vector<1x1xf32>
      %420 = arith.subf %418, %419 : vector<1x1xf32>
      %421 = arith.mulf %378, %420 : vector<1x1xf32>
      %422 = arith.subf %417, %421 : vector<1x1xf32>
      %423 = arith.mulf %388, %408 : vector<1x1xf32>
      %424 = arith.mulf %393, %403 : vector<1x1xf32>
      %425 = arith.subf %423, %424 : vector<1x1xf32>
      %426 = arith.mulf %383, %425 : vector<1x1xf32>
      %427 = arith.addf %422, %426 : vector<1x1xf32>
      %428 = arith.mulf %393, %413 : vector<1x1xf32>
      %429 = arith.mulf %398, %408 : vector<1x1xf32>
      %430 = arith.subf %428, %429 : vector<1x1xf32>
      %431 = arith.mulf %398, %403 : vector<1x1xf32>
      %432 = arith.mulf %388, %413 : vector<1x1xf32>
      %433 = arith.subf %431, %432 : vector<1x1xf32>
      %434 = arith.mulf %388, %408 : vector<1x1xf32>
      %435 = arith.mulf %393, %403 : vector<1x1xf32>
      %436 = arith.subf %434, %435 : vector<1x1xf32>
      %437 = arith.mulf %408, %383 : vector<1x1xf32>
      %438 = arith.mulf %413, %378 : vector<1x1xf32>
      %439 = arith.subf %437, %438 : vector<1x1xf32>
      %440 = arith.mulf %413, %373 : vector<1x1xf32>
      %441 = arith.mulf %403, %383 : vector<1x1xf32>
      %442 = arith.subf %440, %441 : vector<1x1xf32>
      %443 = arith.mulf %403, %378 : vector<1x1xf32>
      %444 = arith.mulf %408, %373 : vector<1x1xf32>
      %445 = arith.subf %443, %444 : vector<1x1xf32>
      %446 = arith.mulf %378, %398 : vector<1x1xf32>
      %447 = arith.mulf %383, %393 : vector<1x1xf32>
      %448 = arith.subf %446, %447 : vector<1x1xf32>
      %449 = arith.mulf %383, %388 : vector<1x1xf32>
      %450 = arith.mulf %373, %398 : vector<1x1xf32>
      %451 = arith.subf %449, %450 : vector<1x1xf32>
      %452 = arith.mulf %373, %393 : vector<1x1xf32>
      %453 = arith.mulf %378, %388 : vector<1x1xf32>
      %454 = arith.subf %452, %453 : vector<1x1xf32>
      %455 = math.absf %427 : vector<1x1xf32>
      %cst_122 = arith.constant 1.000000e-30 : f32
      %456 = vector.broadcast %cst_122 : f32 to vector<1x1xf32>
      %457 = arith.addf %455, %456 : vector<1x1xf32>
      %458 = math.log %457 : vector<1x1xf32>
      %cst_123 = arith.constant -0.333333343 : f32
      %459 = vector.broadcast %cst_123 : f32 to vector<1x1xf32>
      %460 = arith.mulf %459, %458 : vector<1x1xf32>
      %461 = math.exp %460 : vector<1x1xf32>
      %cst_124 = arith.constant 0.000000e+00 : f32
      %462 = vector.broadcast %cst_124 : f32 to vector<1x1xf32>
      %463 = arith.cmpf olt, %427, %462 : vector<1x1xf32>
      %cst_125 = arith.constant 1.000000e-30 : f32
      %464 = vector.broadcast %cst_125 : f32 to vector<1x1xf32>
      %465 = arith.subf %427, %464 : vector<1x1xf32>
      %cst_126 = arith.constant 1.000000e-30 : f32
      %466 = vector.broadcast %cst_126 : f32 to vector<1x1xf32>
      %467 = arith.addf %427, %466 : vector<1x1xf32>
      %468 = arith.select %463, %465, %467 : vector<1x1xi1>, vector<1x1xf32>
      %469 = arith.mulf %461, %468 : vector<1x1xf32>
      %cst_127 = arith.constant 1.000000e+00 : f32
      %470 = vector.broadcast %cst_127 : f32 to vector<1x1xf32>
      %471 = arith.divf %470, %469 : vector<1x1xf32>
      %472 = arith.mulf %461, %373 : vector<1x1xf32>
      %473 = arith.mulf %471, %430 : vector<1x1xf32>
      %474 = arith.addf %472, %473 : vector<1x1xf32>
      %cst_128 = arith.constant 5.000000e-01 : f32
      %475 = vector.broadcast %cst_128 : f32 to vector<1x1xf32>
      %476 = arith.mulf %475, %474 : vector<1x1xf32>
      %477 = arith.mulf %461, %378 : vector<1x1xf32>
      %478 = arith.mulf %471, %433 : vector<1x1xf32>
      %479 = arith.addf %477, %478 : vector<1x1xf32>
      %cst_129 = arith.constant 5.000000e-01 : f32
      %480 = vector.broadcast %cst_129 : f32 to vector<1x1xf32>
      %481 = arith.mulf %480, %479 : vector<1x1xf32>
      %482 = arith.mulf %461, %383 : vector<1x1xf32>
      %483 = arith.mulf %471, %436 : vector<1x1xf32>
      %484 = arith.addf %482, %483 : vector<1x1xf32>
      %cst_130 = arith.constant 5.000000e-01 : f32
      %485 = vector.broadcast %cst_130 : f32 to vector<1x1xf32>
      %486 = arith.mulf %485, %484 : vector<1x1xf32>
      %487 = arith.mulf %461, %388 : vector<1x1xf32>
      %488 = arith.mulf %471, %439 : vector<1x1xf32>
      %489 = arith.addf %487, %488 : vector<1x1xf32>
      %cst_131 = arith.constant 5.000000e-01 : f32
      %490 = vector.broadcast %cst_131 : f32 to vector<1x1xf32>
      %491 = arith.mulf %490, %489 : vector<1x1xf32>
      %492 = arith.mulf %461, %393 : vector<1x1xf32>
      %493 = arith.mulf %471, %442 : vector<1x1xf32>
      %494 = arith.addf %492, %493 : vector<1x1xf32>
      %cst_132 = arith.constant 5.000000e-01 : f32
      %495 = vector.broadcast %cst_132 : f32 to vector<1x1xf32>
      %496 = arith.mulf %495, %494 : vector<1x1xf32>
      %497 = arith.mulf %461, %398 : vector<1x1xf32>
      %498 = arith.mulf %471, %445 : vector<1x1xf32>
      %499 = arith.addf %497, %498 : vector<1x1xf32>
      %cst_133 = arith.constant 5.000000e-01 : f32
      %500 = vector.broadcast %cst_133 : f32 to vector<1x1xf32>
      %501 = arith.mulf %500, %499 : vector<1x1xf32>
      %502 = arith.mulf %461, %403 : vector<1x1xf32>
      %503 = arith.mulf %471, %448 : vector<1x1xf32>
      %504 = arith.addf %502, %503 : vector<1x1xf32>
      %cst_134 = arith.constant 5.000000e-01 : f32
      %505 = vector.broadcast %cst_134 : f32 to vector<1x1xf32>
      %506 = arith.mulf %505, %504 : vector<1x1xf32>
      %507 = arith.mulf %461, %408 : vector<1x1xf32>
      %508 = arith.mulf %471, %451 : vector<1x1xf32>
      %509 = arith.addf %507, %508 : vector<1x1xf32>
      %cst_135 = arith.constant 5.000000e-01 : f32
      %510 = vector.broadcast %cst_135 : f32 to vector<1x1xf32>
      %511 = arith.mulf %510, %509 : vector<1x1xf32>
      %512 = arith.mulf %461, %413 : vector<1x1xf32>
      %513 = arith.mulf %471, %454 : vector<1x1xf32>
      %514 = arith.addf %512, %513 : vector<1x1xf32>
      %cst_136 = arith.constant 5.000000e-01 : f32
      %515 = vector.broadcast %cst_136 : f32 to vector<1x1xf32>
      %516 = arith.mulf %515, %514 : vector<1x1xf32>
      %517 = arith.mulf %496, %516 : vector<1x1xf32>
      %518 = arith.mulf %501, %511 : vector<1x1xf32>
      %519 = arith.subf %517, %518 : vector<1x1xf32>
      %520 = arith.mulf %476, %519 : vector<1x1xf32>
      %521 = arith.mulf %491, %516 : vector<1x1xf32>
      %522 = arith.mulf %501, %506 : vector<1x1xf32>
      %523 = arith.subf %521, %522 : vector<1x1xf32>
      %524 = arith.mulf %481, %523 : vector<1x1xf32>
      %525 = arith.subf %520, %524 : vector<1x1xf32>
      %526 = arith.mulf %491, %511 : vector<1x1xf32>
      %527 = arith.mulf %496, %506 : vector<1x1xf32>
      %528 = arith.subf %526, %527 : vector<1x1xf32>
      %529 = arith.mulf %486, %528 : vector<1x1xf32>
      %530 = arith.addf %525, %529 : vector<1x1xf32>
      %531 = arith.mulf %496, %516 : vector<1x1xf32>
      %532 = arith.mulf %501, %511 : vector<1x1xf32>
      %533 = arith.subf %531, %532 : vector<1x1xf32>
      %534 = arith.mulf %501, %506 : vector<1x1xf32>
      %535 = arith.mulf %491, %516 : vector<1x1xf32>
      %536 = arith.subf %534, %535 : vector<1x1xf32>
      %537 = arith.mulf %491, %511 : vector<1x1xf32>
      %538 = arith.mulf %496, %506 : vector<1x1xf32>
      %539 = arith.subf %537, %538 : vector<1x1xf32>
      %540 = arith.mulf %511, %486 : vector<1x1xf32>
      %541 = arith.mulf %516, %481 : vector<1x1xf32>
      %542 = arith.subf %540, %541 : vector<1x1xf32>
      %543 = arith.mulf %516, %476 : vector<1x1xf32>
      %544 = arith.mulf %506, %486 : vector<1x1xf32>
      %545 = arith.subf %543, %544 : vector<1x1xf32>
      %546 = arith.mulf %506, %481 : vector<1x1xf32>
      %547 = arith.mulf %511, %476 : vector<1x1xf32>
      %548 = arith.subf %546, %547 : vector<1x1xf32>
      %549 = arith.mulf %481, %501 : vector<1x1xf32>
      %550 = arith.mulf %486, %496 : vector<1x1xf32>
      %551 = arith.subf %549, %550 : vector<1x1xf32>
      %552 = arith.mulf %486, %491 : vector<1x1xf32>
      %553 = arith.mulf %476, %501 : vector<1x1xf32>
      %554 = arith.subf %552, %553 : vector<1x1xf32>
      %555 = arith.mulf %476, %496 : vector<1x1xf32>
      %556 = arith.mulf %481, %491 : vector<1x1xf32>
      %557 = arith.subf %555, %556 : vector<1x1xf32>
      %558 = math.absf %530 : vector<1x1xf32>
      %cst_137 = arith.constant 1.000000e-30 : f32
      %559 = vector.broadcast %cst_137 : f32 to vector<1x1xf32>
      %560 = arith.addf %558, %559 : vector<1x1xf32>
      %561 = math.log %560 : vector<1x1xf32>
      %cst_138 = arith.constant -0.333333343 : f32
      %562 = vector.broadcast %cst_138 : f32 to vector<1x1xf32>
      %563 = arith.mulf %562, %561 : vector<1x1xf32>
      %564 = math.exp %563 : vector<1x1xf32>
      %cst_139 = arith.constant 0.000000e+00 : f32
      %565 = vector.broadcast %cst_139 : f32 to vector<1x1xf32>
      %566 = arith.cmpf olt, %530, %565 : vector<1x1xf32>
      %cst_140 = arith.constant 1.000000e-30 : f32
      %567 = vector.broadcast %cst_140 : f32 to vector<1x1xf32>
      %568 = arith.subf %530, %567 : vector<1x1xf32>
      %cst_141 = arith.constant 1.000000e-30 : f32
      %569 = vector.broadcast %cst_141 : f32 to vector<1x1xf32>
      %570 = arith.addf %530, %569 : vector<1x1xf32>
      %571 = arith.select %566, %568, %570 : vector<1x1xi1>, vector<1x1xf32>
      %572 = arith.mulf %564, %571 : vector<1x1xf32>
      %cst_142 = arith.constant 1.000000e+00 : f32
      %573 = vector.broadcast %cst_142 : f32 to vector<1x1xf32>
      %574 = arith.divf %573, %572 : vector<1x1xf32>
      %575 = arith.mulf %564, %476 : vector<1x1xf32>
      %576 = arith.mulf %574, %533 : vector<1x1xf32>
      %577 = arith.addf %575, %576 : vector<1x1xf32>
      %cst_143 = arith.constant 5.000000e-01 : f32
      %578 = vector.broadcast %cst_143 : f32 to vector<1x1xf32>
      %579 = arith.mulf %578, %577 : vector<1x1xf32>
      %580 = arith.mulf %564, %481 : vector<1x1xf32>
      %581 = arith.mulf %574, %536 : vector<1x1xf32>
      %582 = arith.addf %580, %581 : vector<1x1xf32>
      %cst_144 = arith.constant 5.000000e-01 : f32
      %583 = vector.broadcast %cst_144 : f32 to vector<1x1xf32>
      %584 = arith.mulf %583, %582 : vector<1x1xf32>
      %585 = arith.mulf %564, %486 : vector<1x1xf32>
      %586 = arith.mulf %574, %539 : vector<1x1xf32>
      %587 = arith.addf %585, %586 : vector<1x1xf32>
      %cst_145 = arith.constant 5.000000e-01 : f32
      %588 = vector.broadcast %cst_145 : f32 to vector<1x1xf32>
      %589 = arith.mulf %588, %587 : vector<1x1xf32>
      %590 = arith.mulf %564, %491 : vector<1x1xf32>
      %591 = arith.mulf %574, %542 : vector<1x1xf32>
      %592 = arith.addf %590, %591 : vector<1x1xf32>
      %cst_146 = arith.constant 5.000000e-01 : f32
      %593 = vector.broadcast %cst_146 : f32 to vector<1x1xf32>
      %594 = arith.mulf %593, %592 : vector<1x1xf32>
      %595 = arith.mulf %564, %496 : vector<1x1xf32>
      %596 = arith.mulf %574, %545 : vector<1x1xf32>
      %597 = arith.addf %595, %596 : vector<1x1xf32>
      %cst_147 = arith.constant 5.000000e-01 : f32
      %598 = vector.broadcast %cst_147 : f32 to vector<1x1xf32>
      %599 = arith.mulf %598, %597 : vector<1x1xf32>
      %600 = arith.mulf %564, %501 : vector<1x1xf32>
      %601 = arith.mulf %574, %548 : vector<1x1xf32>
      %602 = arith.addf %600, %601 : vector<1x1xf32>
      %cst_148 = arith.constant 5.000000e-01 : f32
      %603 = vector.broadcast %cst_148 : f32 to vector<1x1xf32>
      %604 = arith.mulf %603, %602 : vector<1x1xf32>
      %605 = arith.mulf %564, %506 : vector<1x1xf32>
      %606 = arith.mulf %574, %551 : vector<1x1xf32>
      %607 = arith.addf %605, %606 : vector<1x1xf32>
      %cst_149 = arith.constant 5.000000e-01 : f32
      %608 = vector.broadcast %cst_149 : f32 to vector<1x1xf32>
      %609 = arith.mulf %608, %607 : vector<1x1xf32>
      %610 = arith.mulf %564, %511 : vector<1x1xf32>
      %611 = arith.mulf %574, %554 : vector<1x1xf32>
      %612 = arith.addf %610, %611 : vector<1x1xf32>
      %cst_150 = arith.constant 5.000000e-01 : f32
      %613 = vector.broadcast %cst_150 : f32 to vector<1x1xf32>
      %614 = arith.mulf %613, %612 : vector<1x1xf32>
      %615 = arith.mulf %564, %516 : vector<1x1xf32>
      %616 = arith.mulf %574, %557 : vector<1x1xf32>
      %617 = arith.addf %615, %616 : vector<1x1xf32>
      %cst_151 = arith.constant 5.000000e-01 : f32
      %618 = vector.broadcast %cst_151 : f32 to vector<1x1xf32>
      %619 = arith.mulf %618, %617 : vector<1x1xf32>
      %620 = arith.mulf %599, %619 : vector<1x1xf32>
      %621 = arith.mulf %604, %614 : vector<1x1xf32>
      %622 = arith.subf %620, %621 : vector<1x1xf32>
      %623 = arith.mulf %579, %622 : vector<1x1xf32>
      %624 = arith.mulf %594, %619 : vector<1x1xf32>
      %625 = arith.mulf %604, %609 : vector<1x1xf32>
      %626 = arith.subf %624, %625 : vector<1x1xf32>
      %627 = arith.mulf %584, %626 : vector<1x1xf32>
      %628 = arith.subf %623, %627 : vector<1x1xf32>
      %629 = arith.mulf %594, %614 : vector<1x1xf32>
      %630 = arith.mulf %599, %609 : vector<1x1xf32>
      %631 = arith.subf %629, %630 : vector<1x1xf32>
      %632 = arith.mulf %589, %631 : vector<1x1xf32>
      %633 = arith.addf %628, %632 : vector<1x1xf32>
      %634 = arith.mulf %599, %619 : vector<1x1xf32>
      %635 = arith.mulf %604, %614 : vector<1x1xf32>
      %636 = arith.subf %634, %635 : vector<1x1xf32>
      %637 = arith.mulf %604, %609 : vector<1x1xf32>
      %638 = arith.mulf %594, %619 : vector<1x1xf32>
      %639 = arith.subf %637, %638 : vector<1x1xf32>
      %640 = arith.mulf %594, %614 : vector<1x1xf32>
      %641 = arith.mulf %599, %609 : vector<1x1xf32>
      %642 = arith.subf %640, %641 : vector<1x1xf32>
      %643 = arith.mulf %614, %589 : vector<1x1xf32>
      %644 = arith.mulf %619, %584 : vector<1x1xf32>
      %645 = arith.subf %643, %644 : vector<1x1xf32>
      %646 = arith.mulf %619, %579 : vector<1x1xf32>
      %647 = arith.mulf %609, %589 : vector<1x1xf32>
      %648 = arith.subf %646, %647 : vector<1x1xf32>
      %649 = arith.mulf %609, %584 : vector<1x1xf32>
      %650 = arith.mulf %614, %579 : vector<1x1xf32>
      %651 = arith.subf %649, %650 : vector<1x1xf32>
      %652 = arith.mulf %584, %604 : vector<1x1xf32>
      %653 = arith.mulf %589, %599 : vector<1x1xf32>
      %654 = arith.subf %652, %653 : vector<1x1xf32>
      %655 = arith.mulf %589, %594 : vector<1x1xf32>
      %656 = arith.mulf %579, %604 : vector<1x1xf32>
      %657 = arith.subf %655, %656 : vector<1x1xf32>
      %658 = arith.mulf %579, %599 : vector<1x1xf32>
      %659 = arith.mulf %584, %594 : vector<1x1xf32>
      %660 = arith.subf %658, %659 : vector<1x1xf32>
      %661 = math.absf %633 : vector<1x1xf32>
      %cst_152 = arith.constant 1.000000e-30 : f32
      %662 = vector.broadcast %cst_152 : f32 to vector<1x1xf32>
      %663 = arith.addf %661, %662 : vector<1x1xf32>
      %664 = math.log %663 : vector<1x1xf32>
      %cst_153 = arith.constant -0.333333343 : f32
      %665 = vector.broadcast %cst_153 : f32 to vector<1x1xf32>
      %666 = arith.mulf %665, %664 : vector<1x1xf32>
      %667 = math.exp %666 : vector<1x1xf32>
      %cst_154 = arith.constant 0.000000e+00 : f32
      %668 = vector.broadcast %cst_154 : f32 to vector<1x1xf32>
      %669 = arith.cmpf olt, %633, %668 : vector<1x1xf32>
      %cst_155 = arith.constant 1.000000e-30 : f32
      %670 = vector.broadcast %cst_155 : f32 to vector<1x1xf32>
      %671 = arith.subf %633, %670 : vector<1x1xf32>
      %cst_156 = arith.constant 1.000000e-30 : f32
      %672 = vector.broadcast %cst_156 : f32 to vector<1x1xf32>
      %673 = arith.addf %633, %672 : vector<1x1xf32>
      %674 = arith.select %669, %671, %673 : vector<1x1xi1>, vector<1x1xf32>
      %675 = arith.mulf %667, %674 : vector<1x1xf32>
      %cst_157 = arith.constant 1.000000e+00 : f32
      %676 = vector.broadcast %cst_157 : f32 to vector<1x1xf32>
      %677 = arith.divf %676, %675 : vector<1x1xf32>
      %678 = arith.mulf %667, %579 : vector<1x1xf32>
      %679 = arith.mulf %677, %636 : vector<1x1xf32>
      %680 = arith.addf %678, %679 : vector<1x1xf32>
      %cst_158 = arith.constant 5.000000e-01 : f32
      %681 = vector.broadcast %cst_158 : f32 to vector<1x1xf32>
      %682 = arith.mulf %681, %680 : vector<1x1xf32>
      %683 = arith.mulf %667, %584 : vector<1x1xf32>
      %684 = arith.mulf %677, %639 : vector<1x1xf32>
      %685 = arith.addf %683, %684 : vector<1x1xf32>
      %cst_159 = arith.constant 5.000000e-01 : f32
      %686 = vector.broadcast %cst_159 : f32 to vector<1x1xf32>
      %687 = arith.mulf %686, %685 : vector<1x1xf32>
      %688 = arith.mulf %667, %589 : vector<1x1xf32>
      %689 = arith.mulf %677, %642 : vector<1x1xf32>
      %690 = arith.addf %688, %689 : vector<1x1xf32>
      %cst_160 = arith.constant 5.000000e-01 : f32
      %691 = vector.broadcast %cst_160 : f32 to vector<1x1xf32>
      %692 = arith.mulf %691, %690 : vector<1x1xf32>
      %693 = arith.mulf %667, %594 : vector<1x1xf32>
      %694 = arith.mulf %677, %645 : vector<1x1xf32>
      %695 = arith.addf %693, %694 : vector<1x1xf32>
      %cst_161 = arith.constant 5.000000e-01 : f32
      %696 = vector.broadcast %cst_161 : f32 to vector<1x1xf32>
      %697 = arith.mulf %696, %695 : vector<1x1xf32>
      %698 = arith.mulf %667, %599 : vector<1x1xf32>
      %699 = arith.mulf %677, %648 : vector<1x1xf32>
      %700 = arith.addf %698, %699 : vector<1x1xf32>
      %cst_162 = arith.constant 5.000000e-01 : f32
      %701 = vector.broadcast %cst_162 : f32 to vector<1x1xf32>
      %702 = arith.mulf %701, %700 : vector<1x1xf32>
      %703 = arith.mulf %667, %604 : vector<1x1xf32>
      %704 = arith.mulf %677, %651 : vector<1x1xf32>
      %705 = arith.addf %703, %704 : vector<1x1xf32>
      %cst_163 = arith.constant 5.000000e-01 : f32
      %706 = vector.broadcast %cst_163 : f32 to vector<1x1xf32>
      %707 = arith.mulf %706, %705 : vector<1x1xf32>
      %708 = arith.mulf %667, %609 : vector<1x1xf32>
      %709 = arith.mulf %677, %654 : vector<1x1xf32>
      %710 = arith.addf %708, %709 : vector<1x1xf32>
      %cst_164 = arith.constant 5.000000e-01 : f32
      %711 = vector.broadcast %cst_164 : f32 to vector<1x1xf32>
      %712 = arith.mulf %711, %710 : vector<1x1xf32>
      %713 = arith.mulf %667, %614 : vector<1x1xf32>
      %714 = arith.mulf %677, %657 : vector<1x1xf32>
      %715 = arith.addf %713, %714 : vector<1x1xf32>
      %cst_165 = arith.constant 5.000000e-01 : f32
      %716 = vector.broadcast %cst_165 : f32 to vector<1x1xf32>
      %717 = arith.mulf %716, %715 : vector<1x1xf32>
      %718 = arith.mulf %667, %619 : vector<1x1xf32>
      %719 = arith.mulf %677, %660 : vector<1x1xf32>
      %720 = arith.addf %718, %719 : vector<1x1xf32>
      %cst_166 = arith.constant 5.000000e-01 : f32
      %721 = vector.broadcast %cst_166 : f32 to vector<1x1xf32>
      %722 = arith.mulf %721, %720 : vector<1x1xf32>
      %723 = arith.mulf %702, %722 : vector<1x1xf32>
      %724 = arith.mulf %707, %717 : vector<1x1xf32>
      %725 = arith.subf %723, %724 : vector<1x1xf32>
      %726 = arith.mulf %682, %725 : vector<1x1xf32>
      %727 = arith.mulf %697, %722 : vector<1x1xf32>
      %728 = arith.mulf %707, %712 : vector<1x1xf32>
      %729 = arith.subf %727, %728 : vector<1x1xf32>
      %730 = arith.mulf %687, %729 : vector<1x1xf32>
      %731 = arith.subf %726, %730 : vector<1x1xf32>
      %732 = arith.mulf %697, %717 : vector<1x1xf32>
      %733 = arith.mulf %702, %712 : vector<1x1xf32>
      %734 = arith.subf %732, %733 : vector<1x1xf32>
      %735 = arith.mulf %692, %734 : vector<1x1xf32>
      %736 = arith.addf %731, %735 : vector<1x1xf32>
      %737 = arith.mulf %702, %722 : vector<1x1xf32>
      %738 = arith.mulf %707, %717 : vector<1x1xf32>
      %739 = arith.subf %737, %738 : vector<1x1xf32>
      %740 = arith.mulf %707, %712 : vector<1x1xf32>
      %741 = arith.mulf %697, %722 : vector<1x1xf32>
      %742 = arith.subf %740, %741 : vector<1x1xf32>
      %743 = arith.mulf %697, %717 : vector<1x1xf32>
      %744 = arith.mulf %702, %712 : vector<1x1xf32>
      %745 = arith.subf %743, %744 : vector<1x1xf32>
      %746 = arith.mulf %717, %692 : vector<1x1xf32>
      %747 = arith.mulf %722, %687 : vector<1x1xf32>
      %748 = arith.subf %746, %747 : vector<1x1xf32>
      %749 = arith.mulf %722, %682 : vector<1x1xf32>
      %750 = arith.mulf %712, %692 : vector<1x1xf32>
      %751 = arith.subf %749, %750 : vector<1x1xf32>
      %752 = arith.mulf %712, %687 : vector<1x1xf32>
      %753 = arith.mulf %717, %682 : vector<1x1xf32>
      %754 = arith.subf %752, %753 : vector<1x1xf32>
      %755 = arith.mulf %687, %707 : vector<1x1xf32>
      %756 = arith.mulf %692, %702 : vector<1x1xf32>
      %757 = arith.subf %755, %756 : vector<1x1xf32>
      %758 = arith.mulf %692, %697 : vector<1x1xf32>
      %759 = arith.mulf %682, %707 : vector<1x1xf32>
      %760 = arith.subf %758, %759 : vector<1x1xf32>
      %761 = arith.mulf %682, %702 : vector<1x1xf32>
      %762 = arith.mulf %687, %697 : vector<1x1xf32>
      %763 = arith.subf %761, %762 : vector<1x1xf32>
      %764 = math.absf %736 : vector<1x1xf32>
      %cst_167 = arith.constant 1.000000e-30 : f32
      %765 = vector.broadcast %cst_167 : f32 to vector<1x1xf32>
      %766 = arith.addf %764, %765 : vector<1x1xf32>
      %767 = math.log %766 : vector<1x1xf32>
      %cst_168 = arith.constant -0.333333343 : f32
      %768 = vector.broadcast %cst_168 : f32 to vector<1x1xf32>
      %769 = arith.mulf %768, %767 : vector<1x1xf32>
      %770 = math.exp %769 : vector<1x1xf32>
      %cst_169 = arith.constant 0.000000e+00 : f32
      %771 = vector.broadcast %cst_169 : f32 to vector<1x1xf32>
      %772 = arith.cmpf olt, %736, %771 : vector<1x1xf32>
      %cst_170 = arith.constant 1.000000e-30 : f32
      %773 = vector.broadcast %cst_170 : f32 to vector<1x1xf32>
      %774 = arith.subf %736, %773 : vector<1x1xf32>
      %cst_171 = arith.constant 1.000000e-30 : f32
      %775 = vector.broadcast %cst_171 : f32 to vector<1x1xf32>
      %776 = arith.addf %736, %775 : vector<1x1xf32>
      %777 = arith.select %772, %774, %776 : vector<1x1xi1>, vector<1x1xf32>
      %778 = arith.mulf %770, %777 : vector<1x1xf32>
      %cst_172 = arith.constant 1.000000e+00 : f32
      %779 = vector.broadcast %cst_172 : f32 to vector<1x1xf32>
      %780 = arith.divf %779, %778 : vector<1x1xf32>
      %781 = arith.mulf %770, %682 : vector<1x1xf32>
      %782 = arith.mulf %780, %739 : vector<1x1xf32>
      %783 = arith.addf %781, %782 : vector<1x1xf32>
      %cst_173 = arith.constant 5.000000e-01 : f32
      %784 = vector.broadcast %cst_173 : f32 to vector<1x1xf32>
      %785 = arith.mulf %784, %783 : vector<1x1xf32>
      %786 = arith.mulf %770, %687 : vector<1x1xf32>
      %787 = arith.mulf %780, %742 : vector<1x1xf32>
      %788 = arith.addf %786, %787 : vector<1x1xf32>
      %cst_174 = arith.constant 5.000000e-01 : f32
      %789 = vector.broadcast %cst_174 : f32 to vector<1x1xf32>
      %790 = arith.mulf %789, %788 : vector<1x1xf32>
      %791 = arith.mulf %770, %692 : vector<1x1xf32>
      %792 = arith.mulf %780, %745 : vector<1x1xf32>
      %793 = arith.addf %791, %792 : vector<1x1xf32>
      %cst_175 = arith.constant 5.000000e-01 : f32
      %794 = vector.broadcast %cst_175 : f32 to vector<1x1xf32>
      %795 = arith.mulf %794, %793 : vector<1x1xf32>
      %796 = arith.mulf %770, %697 : vector<1x1xf32>
      %797 = arith.mulf %780, %748 : vector<1x1xf32>
      %798 = arith.addf %796, %797 : vector<1x1xf32>
      %cst_176 = arith.constant 5.000000e-01 : f32
      %799 = vector.broadcast %cst_176 : f32 to vector<1x1xf32>
      %800 = arith.mulf %799, %798 : vector<1x1xf32>
      %801 = arith.mulf %770, %702 : vector<1x1xf32>
      %802 = arith.mulf %780, %751 : vector<1x1xf32>
      %803 = arith.addf %801, %802 : vector<1x1xf32>
      %cst_177 = arith.constant 5.000000e-01 : f32
      %804 = vector.broadcast %cst_177 : f32 to vector<1x1xf32>
      %805 = arith.mulf %804, %803 : vector<1x1xf32>
      %806 = arith.mulf %770, %707 : vector<1x1xf32>
      %807 = arith.mulf %780, %754 : vector<1x1xf32>
      %808 = arith.addf %806, %807 : vector<1x1xf32>
      %cst_178 = arith.constant 5.000000e-01 : f32
      %809 = vector.broadcast %cst_178 : f32 to vector<1x1xf32>
      %810 = arith.mulf %809, %808 : vector<1x1xf32>
      %811 = arith.mulf %770, %712 : vector<1x1xf32>
      %812 = arith.mulf %780, %757 : vector<1x1xf32>
      %813 = arith.addf %811, %812 : vector<1x1xf32>
      %cst_179 = arith.constant 5.000000e-01 : f32
      %814 = vector.broadcast %cst_179 : f32 to vector<1x1xf32>
      %815 = arith.mulf %814, %813 : vector<1x1xf32>
      %816 = arith.mulf %770, %717 : vector<1x1xf32>
      %817 = arith.mulf %780, %760 : vector<1x1xf32>
      %818 = arith.addf %816, %817 : vector<1x1xf32>
      %cst_180 = arith.constant 5.000000e-01 : f32
      %819 = vector.broadcast %cst_180 : f32 to vector<1x1xf32>
      %820 = arith.mulf %819, %818 : vector<1x1xf32>
      %821 = arith.mulf %770, %722 : vector<1x1xf32>
      %822 = arith.mulf %780, %763 : vector<1x1xf32>
      %823 = arith.addf %821, %822 : vector<1x1xf32>
      %cst_181 = arith.constant 5.000000e-01 : f32
      %824 = vector.broadcast %cst_181 : f32 to vector<1x1xf32>
      %825 = arith.mulf %824, %823 : vector<1x1xf32>
      %826 = arith.mulf %805, %825 : vector<1x1xf32>
      %827 = arith.mulf %810, %820 : vector<1x1xf32>
      %828 = arith.subf %826, %827 : vector<1x1xf32>
      %829 = arith.mulf %785, %828 : vector<1x1xf32>
      %830 = arith.mulf %800, %825 : vector<1x1xf32>
      %831 = arith.mulf %810, %815 : vector<1x1xf32>
      %832 = arith.subf %830, %831 : vector<1x1xf32>
      %833 = arith.mulf %790, %832 : vector<1x1xf32>
      %834 = arith.subf %829, %833 : vector<1x1xf32>
      %835 = arith.mulf %800, %820 : vector<1x1xf32>
      %836 = arith.mulf %805, %815 : vector<1x1xf32>
      %837 = arith.subf %835, %836 : vector<1x1xf32>
      %838 = arith.mulf %795, %837 : vector<1x1xf32>
      %839 = arith.addf %834, %838 : vector<1x1xf32>
      %840 = arith.mulf %805, %825 : vector<1x1xf32>
      %841 = arith.mulf %810, %820 : vector<1x1xf32>
      %842 = arith.subf %840, %841 : vector<1x1xf32>
      %843 = arith.mulf %810, %815 : vector<1x1xf32>
      %844 = arith.mulf %800, %825 : vector<1x1xf32>
      %845 = arith.subf %843, %844 : vector<1x1xf32>
      %846 = arith.mulf %800, %820 : vector<1x1xf32>
      %847 = arith.mulf %805, %815 : vector<1x1xf32>
      %848 = arith.subf %846, %847 : vector<1x1xf32>
      %849 = arith.mulf %820, %795 : vector<1x1xf32>
      %850 = arith.mulf %825, %790 : vector<1x1xf32>
      %851 = arith.subf %849, %850 : vector<1x1xf32>
      %852 = arith.mulf %825, %785 : vector<1x1xf32>
      %853 = arith.mulf %815, %795 : vector<1x1xf32>
      %854 = arith.subf %852, %853 : vector<1x1xf32>
      %855 = arith.mulf %815, %790 : vector<1x1xf32>
      %856 = arith.mulf %820, %785 : vector<1x1xf32>
      %857 = arith.subf %855, %856 : vector<1x1xf32>
      %858 = arith.mulf %790, %810 : vector<1x1xf32>
      %859 = arith.mulf %795, %805 : vector<1x1xf32>
      %860 = arith.subf %858, %859 : vector<1x1xf32>
      %861 = arith.mulf %795, %800 : vector<1x1xf32>
      %862 = arith.mulf %785, %810 : vector<1x1xf32>
      %863 = arith.subf %861, %862 : vector<1x1xf32>
      %864 = arith.mulf %785, %805 : vector<1x1xf32>
      %865 = arith.mulf %790, %800 : vector<1x1xf32>
      %866 = arith.subf %864, %865 : vector<1x1xf32>
      %867 = math.absf %839 : vector<1x1xf32>
      %cst_182 = arith.constant 1.000000e-30 : f32
      %868 = vector.broadcast %cst_182 : f32 to vector<1x1xf32>
      %869 = arith.addf %867, %868 : vector<1x1xf32>
      %870 = math.log %869 : vector<1x1xf32>
      %cst_183 = arith.constant -0.333333343 : f32
      %871 = vector.broadcast %cst_183 : f32 to vector<1x1xf32>
      %872 = arith.mulf %871, %870 : vector<1x1xf32>
      %873 = math.exp %872 : vector<1x1xf32>
      %cst_184 = arith.constant 0.000000e+00 : f32
      %874 = vector.broadcast %cst_184 : f32 to vector<1x1xf32>
      %875 = arith.cmpf olt, %839, %874 : vector<1x1xf32>
      %cst_185 = arith.constant 1.000000e-30 : f32
      %876 = vector.broadcast %cst_185 : f32 to vector<1x1xf32>
      %877 = arith.subf %839, %876 : vector<1x1xf32>
      %cst_186 = arith.constant 1.000000e-30 : f32
      %878 = vector.broadcast %cst_186 : f32 to vector<1x1xf32>
      %879 = arith.addf %839, %878 : vector<1x1xf32>
      %880 = arith.select %875, %877, %879 : vector<1x1xi1>, vector<1x1xf32>
      %881 = arith.mulf %873, %880 : vector<1x1xf32>
      %cst_187 = arith.constant 1.000000e+00 : f32
      %882 = vector.broadcast %cst_187 : f32 to vector<1x1xf32>
      %883 = arith.divf %882, %881 : vector<1x1xf32>
      %884 = arith.mulf %873, %785 : vector<1x1xf32>
      %885 = arith.mulf %883, %842 : vector<1x1xf32>
      %886 = arith.addf %884, %885 : vector<1x1xf32>
      %cst_188 = arith.constant 5.000000e-01 : f32
      %887 = vector.broadcast %cst_188 : f32 to vector<1x1xf32>
      %888 = arith.mulf %887, %886 : vector<1x1xf32>
      %889 = arith.mulf %873, %790 : vector<1x1xf32>
      %890 = arith.mulf %883, %845 : vector<1x1xf32>
      %891 = arith.addf %889, %890 : vector<1x1xf32>
      %cst_189 = arith.constant 5.000000e-01 : f32
      %892 = vector.broadcast %cst_189 : f32 to vector<1x1xf32>
      %893 = arith.mulf %892, %891 : vector<1x1xf32>
      %894 = arith.mulf %873, %795 : vector<1x1xf32>
      %895 = arith.mulf %883, %848 : vector<1x1xf32>
      %896 = arith.addf %894, %895 : vector<1x1xf32>
      %cst_190 = arith.constant 5.000000e-01 : f32
      %897 = vector.broadcast %cst_190 : f32 to vector<1x1xf32>
      %898 = arith.mulf %897, %896 : vector<1x1xf32>
      %899 = arith.mulf %873, %800 : vector<1x1xf32>
      %900 = arith.mulf %883, %851 : vector<1x1xf32>
      %901 = arith.addf %899, %900 : vector<1x1xf32>
      %cst_191 = arith.constant 5.000000e-01 : f32
      %902 = vector.broadcast %cst_191 : f32 to vector<1x1xf32>
      %903 = arith.mulf %902, %901 : vector<1x1xf32>
      %904 = arith.mulf %873, %805 : vector<1x1xf32>
      %905 = arith.mulf %883, %854 : vector<1x1xf32>
      %906 = arith.addf %904, %905 : vector<1x1xf32>
      %cst_192 = arith.constant 5.000000e-01 : f32
      %907 = vector.broadcast %cst_192 : f32 to vector<1x1xf32>
      %908 = arith.mulf %907, %906 : vector<1x1xf32>
      %909 = arith.mulf %873, %810 : vector<1x1xf32>
      %910 = arith.mulf %883, %857 : vector<1x1xf32>
      %911 = arith.addf %909, %910 : vector<1x1xf32>
      %cst_193 = arith.constant 5.000000e-01 : f32
      %912 = vector.broadcast %cst_193 : f32 to vector<1x1xf32>
      %913 = arith.mulf %912, %911 : vector<1x1xf32>
      %914 = arith.mulf %873, %815 : vector<1x1xf32>
      %915 = arith.mulf %883, %860 : vector<1x1xf32>
      %916 = arith.addf %914, %915 : vector<1x1xf32>
      %cst_194 = arith.constant 5.000000e-01 : f32
      %917 = vector.broadcast %cst_194 : f32 to vector<1x1xf32>
      %918 = arith.mulf %917, %916 : vector<1x1xf32>
      %919 = arith.mulf %873, %820 : vector<1x1xf32>
      %920 = arith.mulf %883, %863 : vector<1x1xf32>
      %921 = arith.addf %919, %920 : vector<1x1xf32>
      %cst_195 = arith.constant 5.000000e-01 : f32
      %922 = vector.broadcast %cst_195 : f32 to vector<1x1xf32>
      %923 = arith.mulf %922, %921 : vector<1x1xf32>
      %924 = arith.mulf %873, %825 : vector<1x1xf32>
      %925 = arith.mulf %883, %866 : vector<1x1xf32>
      %926 = arith.addf %924, %925 : vector<1x1xf32>
      %cst_196 = arith.constant 5.000000e-01 : f32
      %927 = vector.broadcast %cst_196 : f32 to vector<1x1xf32>
      %928 = arith.mulf %927, %926 : vector<1x1xf32>
      %929 = arith.mulf %908, %928 : vector<1x1xf32>
      %930 = arith.mulf %913, %923 : vector<1x1xf32>
      %931 = arith.subf %929, %930 : vector<1x1xf32>
      %932 = arith.mulf %888, %931 : vector<1x1xf32>
      %933 = arith.mulf %903, %928 : vector<1x1xf32>
      %934 = arith.mulf %913, %918 : vector<1x1xf32>
      %935 = arith.subf %933, %934 : vector<1x1xf32>
      %936 = arith.mulf %893, %935 : vector<1x1xf32>
      %937 = arith.subf %932, %936 : vector<1x1xf32>
      %938 = arith.mulf %903, %923 : vector<1x1xf32>
      %939 = arith.mulf %908, %918 : vector<1x1xf32>
      %940 = arith.subf %938, %939 : vector<1x1xf32>
      %941 = arith.mulf %898, %940 : vector<1x1xf32>
      %942 = arith.addf %937, %941 : vector<1x1xf32>
      %943 = arith.mulf %908, %928 : vector<1x1xf32>
      %944 = arith.mulf %913, %923 : vector<1x1xf32>
      %945 = arith.subf %943, %944 : vector<1x1xf32>
      %946 = arith.mulf %913, %918 : vector<1x1xf32>
      %947 = arith.mulf %903, %928 : vector<1x1xf32>
      %948 = arith.subf %946, %947 : vector<1x1xf32>
      %949 = arith.mulf %903, %923 : vector<1x1xf32>
      %950 = arith.mulf %908, %918 : vector<1x1xf32>
      %951 = arith.subf %949, %950 : vector<1x1xf32>
      %952 = arith.mulf %923, %898 : vector<1x1xf32>
      %953 = arith.mulf %928, %893 : vector<1x1xf32>
      %954 = arith.subf %952, %953 : vector<1x1xf32>
      %955 = arith.mulf %928, %888 : vector<1x1xf32>
      %956 = arith.mulf %918, %898 : vector<1x1xf32>
      %957 = arith.subf %955, %956 : vector<1x1xf32>
      %958 = arith.mulf %918, %893 : vector<1x1xf32>
      %959 = arith.mulf %923, %888 : vector<1x1xf32>
      %960 = arith.subf %958, %959 : vector<1x1xf32>
      %961 = arith.mulf %893, %913 : vector<1x1xf32>
      %962 = arith.mulf %898, %908 : vector<1x1xf32>
      %963 = arith.subf %961, %962 : vector<1x1xf32>
      %964 = arith.mulf %898, %903 : vector<1x1xf32>
      %965 = arith.mulf %888, %913 : vector<1x1xf32>
      %966 = arith.subf %964, %965 : vector<1x1xf32>
      %967 = arith.mulf %888, %908 : vector<1x1xf32>
      %968 = arith.mulf %893, %903 : vector<1x1xf32>
      %969 = arith.subf %967, %968 : vector<1x1xf32>
      %970 = math.absf %942 : vector<1x1xf32>
      %cst_197 = arith.constant 1.000000e-30 : f32
      %971 = vector.broadcast %cst_197 : f32 to vector<1x1xf32>
      %972 = arith.addf %970, %971 : vector<1x1xf32>
      %973 = math.log %972 : vector<1x1xf32>
      %cst_198 = arith.constant -0.333333343 : f32
      %974 = vector.broadcast %cst_198 : f32 to vector<1x1xf32>
      %975 = arith.mulf %974, %973 : vector<1x1xf32>
      %976 = math.exp %975 : vector<1x1xf32>
      %cst_199 = arith.constant 0.000000e+00 : f32
      %977 = vector.broadcast %cst_199 : f32 to vector<1x1xf32>
      %978 = arith.cmpf olt, %942, %977 : vector<1x1xf32>
      %cst_200 = arith.constant 1.000000e-30 : f32
      %979 = vector.broadcast %cst_200 : f32 to vector<1x1xf32>
      %980 = arith.subf %942, %979 : vector<1x1xf32>
      %cst_201 = arith.constant 1.000000e-30 : f32
      %981 = vector.broadcast %cst_201 : f32 to vector<1x1xf32>
      %982 = arith.addf %942, %981 : vector<1x1xf32>
      %983 = arith.select %978, %980, %982 : vector<1x1xi1>, vector<1x1xf32>
      %984 = arith.mulf %976, %983 : vector<1x1xf32>
      %cst_202 = arith.constant 1.000000e+00 : f32
      %985 = vector.broadcast %cst_202 : f32 to vector<1x1xf32>
      %986 = arith.divf %985, %984 : vector<1x1xf32>
      %987 = arith.mulf %976, %888 : vector<1x1xf32>
      %988 = arith.mulf %986, %945 : vector<1x1xf32>
      %989 = arith.addf %987, %988 : vector<1x1xf32>
      %cst_203 = arith.constant 5.000000e-01 : f32
      %990 = vector.broadcast %cst_203 : f32 to vector<1x1xf32>
      %991 = arith.mulf %990, %989 : vector<1x1xf32>
      %992 = arith.mulf %976, %893 : vector<1x1xf32>
      %993 = arith.mulf %986, %948 : vector<1x1xf32>
      %994 = arith.addf %992, %993 : vector<1x1xf32>
      %cst_204 = arith.constant 5.000000e-01 : f32
      %995 = vector.broadcast %cst_204 : f32 to vector<1x1xf32>
      %996 = arith.mulf %995, %994 : vector<1x1xf32>
      %997 = arith.mulf %976, %898 : vector<1x1xf32>
      %998 = arith.mulf %986, %951 : vector<1x1xf32>
      %999 = arith.addf %997, %998 : vector<1x1xf32>
      %cst_205 = arith.constant 5.000000e-01 : f32
      %1000 = vector.broadcast %cst_205 : f32 to vector<1x1xf32>
      %1001 = arith.mulf %1000, %999 : vector<1x1xf32>
      %1002 = arith.mulf %976, %903 : vector<1x1xf32>
      %1003 = arith.mulf %986, %954 : vector<1x1xf32>
      %1004 = arith.addf %1002, %1003 : vector<1x1xf32>
      %cst_206 = arith.constant 5.000000e-01 : f32
      %1005 = vector.broadcast %cst_206 : f32 to vector<1x1xf32>
      %1006 = arith.mulf %1005, %1004 : vector<1x1xf32>
      %1007 = arith.mulf %976, %908 : vector<1x1xf32>
      %1008 = arith.mulf %986, %957 : vector<1x1xf32>
      %1009 = arith.addf %1007, %1008 : vector<1x1xf32>
      %cst_207 = arith.constant 5.000000e-01 : f32
      %1010 = vector.broadcast %cst_207 : f32 to vector<1x1xf32>
      %1011 = arith.mulf %1010, %1009 : vector<1x1xf32>
      %1012 = arith.mulf %976, %913 : vector<1x1xf32>
      %1013 = arith.mulf %986, %960 : vector<1x1xf32>
      %1014 = arith.addf %1012, %1013 : vector<1x1xf32>
      %cst_208 = arith.constant 5.000000e-01 : f32
      %1015 = vector.broadcast %cst_208 : f32 to vector<1x1xf32>
      %1016 = arith.mulf %1015, %1014 : vector<1x1xf32>
      %1017 = arith.mulf %976, %918 : vector<1x1xf32>
      %1018 = arith.mulf %986, %963 : vector<1x1xf32>
      %1019 = arith.addf %1017, %1018 : vector<1x1xf32>
      %cst_209 = arith.constant 5.000000e-01 : f32
      %1020 = vector.broadcast %cst_209 : f32 to vector<1x1xf32>
      %1021 = arith.mulf %1020, %1019 : vector<1x1xf32>
      %1022 = arith.mulf %976, %923 : vector<1x1xf32>
      %1023 = arith.mulf %986, %966 : vector<1x1xf32>
      %1024 = arith.addf %1022, %1023 : vector<1x1xf32>
      %cst_210 = arith.constant 5.000000e-01 : f32
      %1025 = vector.broadcast %cst_210 : f32 to vector<1x1xf32>
      %1026 = arith.mulf %1025, %1024 : vector<1x1xf32>
      %1027 = arith.mulf %976, %928 : vector<1x1xf32>
      %1028 = arith.mulf %986, %969 : vector<1x1xf32>
      %1029 = arith.addf %1027, %1028 : vector<1x1xf32>
      %cst_211 = arith.constant 5.000000e-01 : f32
      %1030 = vector.broadcast %cst_211 : f32 to vector<1x1xf32>
      %1031 = arith.mulf %1030, %1029 : vector<1x1xf32>
      %1032 = arith.mulf %1011, %1031 : vector<1x1xf32>
      %1033 = arith.mulf %1016, %1026 : vector<1x1xf32>
      %1034 = arith.subf %1032, %1033 : vector<1x1xf32>
      %1035 = arith.mulf %991, %1034 : vector<1x1xf32>
      %1036 = arith.mulf %1006, %1031 : vector<1x1xf32>
      %1037 = arith.mulf %1016, %1021 : vector<1x1xf32>
      %1038 = arith.subf %1036, %1037 : vector<1x1xf32>
      %1039 = arith.mulf %996, %1038 : vector<1x1xf32>
      %1040 = arith.subf %1035, %1039 : vector<1x1xf32>
      %1041 = arith.mulf %1006, %1026 : vector<1x1xf32>
      %1042 = arith.mulf %1011, %1021 : vector<1x1xf32>
      %1043 = arith.subf %1041, %1042 : vector<1x1xf32>
      %1044 = arith.mulf %1001, %1043 : vector<1x1xf32>
      %1045 = arith.addf %1040, %1044 : vector<1x1xf32>
      %1046 = arith.mulf %1011, %1031 : vector<1x1xf32>
      %1047 = arith.mulf %1016, %1026 : vector<1x1xf32>
      %1048 = arith.subf %1046, %1047 : vector<1x1xf32>
      %1049 = arith.mulf %1016, %1021 : vector<1x1xf32>
      %1050 = arith.mulf %1006, %1031 : vector<1x1xf32>
      %1051 = arith.subf %1049, %1050 : vector<1x1xf32>
      %1052 = arith.mulf %1006, %1026 : vector<1x1xf32>
      %1053 = arith.mulf %1011, %1021 : vector<1x1xf32>
      %1054 = arith.subf %1052, %1053 : vector<1x1xf32>
      %1055 = arith.mulf %1026, %1001 : vector<1x1xf32>
      %1056 = arith.mulf %1031, %996 : vector<1x1xf32>
      %1057 = arith.subf %1055, %1056 : vector<1x1xf32>
      %1058 = arith.mulf %1031, %991 : vector<1x1xf32>
      %1059 = arith.mulf %1021, %1001 : vector<1x1xf32>
      %1060 = arith.subf %1058, %1059 : vector<1x1xf32>
      %1061 = arith.mulf %1021, %996 : vector<1x1xf32>
      %1062 = arith.mulf %1026, %991 : vector<1x1xf32>
      %1063 = arith.subf %1061, %1062 : vector<1x1xf32>
      %1064 = arith.mulf %996, %1016 : vector<1x1xf32>
      %1065 = arith.mulf %1001, %1011 : vector<1x1xf32>
      %1066 = arith.subf %1064, %1065 : vector<1x1xf32>
      %1067 = arith.mulf %1001, %1006 : vector<1x1xf32>
      %1068 = arith.mulf %991, %1016 : vector<1x1xf32>
      %1069 = arith.subf %1067, %1068 : vector<1x1xf32>
      %1070 = arith.mulf %991, %1011 : vector<1x1xf32>
      %1071 = arith.mulf %996, %1006 : vector<1x1xf32>
      %1072 = arith.subf %1070, %1071 : vector<1x1xf32>
      %1073 = math.absf %1045 : vector<1x1xf32>
      %cst_212 = arith.constant 1.000000e-30 : f32
      %1074 = vector.broadcast %cst_212 : f32 to vector<1x1xf32>
      %1075 = arith.addf %1073, %1074 : vector<1x1xf32>
      %1076 = math.log %1075 : vector<1x1xf32>
      %cst_213 = arith.constant -0.333333343 : f32
      %1077 = vector.broadcast %cst_213 : f32 to vector<1x1xf32>
      %1078 = arith.mulf %1077, %1076 : vector<1x1xf32>
      %1079 = math.exp %1078 : vector<1x1xf32>
      %cst_214 = arith.constant 0.000000e+00 : f32
      %1080 = vector.broadcast %cst_214 : f32 to vector<1x1xf32>
      %1081 = arith.cmpf olt, %1045, %1080 : vector<1x1xf32>
      %cst_215 = arith.constant 1.000000e-30 : f32
      %1082 = vector.broadcast %cst_215 : f32 to vector<1x1xf32>
      %1083 = arith.subf %1045, %1082 : vector<1x1xf32>
      %cst_216 = arith.constant 1.000000e-30 : f32
      %1084 = vector.broadcast %cst_216 : f32 to vector<1x1xf32>
      %1085 = arith.addf %1045, %1084 : vector<1x1xf32>
      %1086 = arith.select %1081, %1083, %1085 : vector<1x1xi1>, vector<1x1xf32>
      %1087 = arith.mulf %1079, %1086 : vector<1x1xf32>
      %cst_217 = arith.constant 1.000000e+00 : f32
      %1088 = vector.broadcast %cst_217 : f32 to vector<1x1xf32>
      %1089 = arith.divf %1088, %1087 : vector<1x1xf32>
      %1090 = arith.mulf %1079, %991 : vector<1x1xf32>
      %1091 = arith.mulf %1089, %1048 : vector<1x1xf32>
      %1092 = arith.addf %1090, %1091 : vector<1x1xf32>
      %cst_218 = arith.constant 5.000000e-01 : f32
      %1093 = vector.broadcast %cst_218 : f32 to vector<1x1xf32>
      %1094 = arith.mulf %1093, %1092 : vector<1x1xf32>
      %1095 = arith.mulf %1079, %996 : vector<1x1xf32>
      %1096 = arith.mulf %1089, %1051 : vector<1x1xf32>
      %1097 = arith.addf %1095, %1096 : vector<1x1xf32>
      %cst_219 = arith.constant 5.000000e-01 : f32
      %1098 = vector.broadcast %cst_219 : f32 to vector<1x1xf32>
      %1099 = arith.mulf %1098, %1097 : vector<1x1xf32>
      %1100 = arith.mulf %1079, %1001 : vector<1x1xf32>
      %1101 = arith.mulf %1089, %1054 : vector<1x1xf32>
      %1102 = arith.addf %1100, %1101 : vector<1x1xf32>
      %cst_220 = arith.constant 5.000000e-01 : f32
      %1103 = vector.broadcast %cst_220 : f32 to vector<1x1xf32>
      %1104 = arith.mulf %1103, %1102 : vector<1x1xf32>
      %1105 = arith.mulf %1079, %1006 : vector<1x1xf32>
      %1106 = arith.mulf %1089, %1057 : vector<1x1xf32>
      %1107 = arith.addf %1105, %1106 : vector<1x1xf32>
      %cst_221 = arith.constant 5.000000e-01 : f32
      %1108 = vector.broadcast %cst_221 : f32 to vector<1x1xf32>
      %1109 = arith.mulf %1108, %1107 : vector<1x1xf32>
      %1110 = arith.mulf %1079, %1011 : vector<1x1xf32>
      %1111 = arith.mulf %1089, %1060 : vector<1x1xf32>
      %1112 = arith.addf %1110, %1111 : vector<1x1xf32>
      %cst_222 = arith.constant 5.000000e-01 : f32
      %1113 = vector.broadcast %cst_222 : f32 to vector<1x1xf32>
      %1114 = arith.mulf %1113, %1112 : vector<1x1xf32>
      %1115 = arith.mulf %1079, %1016 : vector<1x1xf32>
      %1116 = arith.mulf %1089, %1063 : vector<1x1xf32>
      %1117 = arith.addf %1115, %1116 : vector<1x1xf32>
      %cst_223 = arith.constant 5.000000e-01 : f32
      %1118 = vector.broadcast %cst_223 : f32 to vector<1x1xf32>
      %1119 = arith.mulf %1118, %1117 : vector<1x1xf32>
      %1120 = arith.mulf %1079, %1021 : vector<1x1xf32>
      %1121 = arith.mulf %1089, %1066 : vector<1x1xf32>
      %1122 = arith.addf %1120, %1121 : vector<1x1xf32>
      %cst_224 = arith.constant 5.000000e-01 : f32
      %1123 = vector.broadcast %cst_224 : f32 to vector<1x1xf32>
      %1124 = arith.mulf %1123, %1122 : vector<1x1xf32>
      %1125 = arith.mulf %1079, %1026 : vector<1x1xf32>
      %1126 = arith.mulf %1089, %1069 : vector<1x1xf32>
      %1127 = arith.addf %1125, %1126 : vector<1x1xf32>
      %cst_225 = arith.constant 5.000000e-01 : f32
      %1128 = vector.broadcast %cst_225 : f32 to vector<1x1xf32>
      %1129 = arith.mulf %1128, %1127 : vector<1x1xf32>
      %1130 = arith.mulf %1079, %1031 : vector<1x1xf32>
      %1131 = arith.mulf %1089, %1072 : vector<1x1xf32>
      %1132 = arith.addf %1130, %1131 : vector<1x1xf32>
      %cst_226 = arith.constant 5.000000e-01 : f32
      %1133 = vector.broadcast %cst_226 : f32 to vector<1x1xf32>
      %1134 = arith.mulf %1133, %1132 : vector<1x1xf32>
      %1135 = arith.mulf %1114, %1134 : vector<1x1xf32>
      %1136 = arith.mulf %1119, %1129 : vector<1x1xf32>
      %1137 = arith.subf %1135, %1136 : vector<1x1xf32>
      %1138 = arith.mulf %1094, %1137 : vector<1x1xf32>
      %1139 = arith.mulf %1109, %1134 : vector<1x1xf32>
      %1140 = arith.mulf %1119, %1124 : vector<1x1xf32>
      %1141 = arith.subf %1139, %1140 : vector<1x1xf32>
      %1142 = arith.mulf %1099, %1141 : vector<1x1xf32>
      %1143 = arith.subf %1138, %1142 : vector<1x1xf32>
      %1144 = arith.mulf %1109, %1129 : vector<1x1xf32>
      %1145 = arith.mulf %1114, %1124 : vector<1x1xf32>
      %1146 = arith.subf %1144, %1145 : vector<1x1xf32>
      %1147 = arith.mulf %1104, %1146 : vector<1x1xf32>
      %1148 = arith.addf %1143, %1147 : vector<1x1xf32>
      %1149 = arith.mulf %1114, %1134 : vector<1x1xf32>
      %1150 = arith.mulf %1119, %1129 : vector<1x1xf32>
      %1151 = arith.subf %1149, %1150 : vector<1x1xf32>
      %1152 = arith.mulf %1119, %1124 : vector<1x1xf32>
      %1153 = arith.mulf %1109, %1134 : vector<1x1xf32>
      %1154 = arith.subf %1152, %1153 : vector<1x1xf32>
      %1155 = arith.mulf %1109, %1129 : vector<1x1xf32>
      %1156 = arith.mulf %1114, %1124 : vector<1x1xf32>
      %1157 = arith.subf %1155, %1156 : vector<1x1xf32>
      %1158 = arith.mulf %1129, %1104 : vector<1x1xf32>
      %1159 = arith.mulf %1134, %1099 : vector<1x1xf32>
      %1160 = arith.subf %1158, %1159 : vector<1x1xf32>
      %1161 = arith.mulf %1134, %1094 : vector<1x1xf32>
      %1162 = arith.mulf %1124, %1104 : vector<1x1xf32>
      %1163 = arith.subf %1161, %1162 : vector<1x1xf32>
      %1164 = arith.mulf %1124, %1099 : vector<1x1xf32>
      %1165 = arith.mulf %1129, %1094 : vector<1x1xf32>
      %1166 = arith.subf %1164, %1165 : vector<1x1xf32>
      %1167 = arith.mulf %1099, %1119 : vector<1x1xf32>
      %1168 = arith.mulf %1104, %1114 : vector<1x1xf32>
      %1169 = arith.subf %1167, %1168 : vector<1x1xf32>
      %1170 = arith.mulf %1104, %1109 : vector<1x1xf32>
      %1171 = arith.mulf %1094, %1119 : vector<1x1xf32>
      %1172 = arith.subf %1170, %1171 : vector<1x1xf32>
      %1173 = arith.mulf %1094, %1114 : vector<1x1xf32>
      %1174 = arith.mulf %1099, %1109 : vector<1x1xf32>
      %1175 = arith.subf %1173, %1174 : vector<1x1xf32>
      %1176 = math.absf %1148 : vector<1x1xf32>
      %cst_227 = arith.constant 1.000000e-30 : f32
      %1177 = vector.broadcast %cst_227 : f32 to vector<1x1xf32>
      %1178 = arith.addf %1176, %1177 : vector<1x1xf32>
      %1179 = math.log %1178 : vector<1x1xf32>
      %cst_228 = arith.constant -0.333333343 : f32
      %1180 = vector.broadcast %cst_228 : f32 to vector<1x1xf32>
      %1181 = arith.mulf %1180, %1179 : vector<1x1xf32>
      %1182 = math.exp %1181 : vector<1x1xf32>
      %cst_229 = arith.constant 0.000000e+00 : f32
      %1183 = vector.broadcast %cst_229 : f32 to vector<1x1xf32>
      %1184 = arith.cmpf olt, %1148, %1183 : vector<1x1xf32>
      %cst_230 = arith.constant 1.000000e-30 : f32
      %1185 = vector.broadcast %cst_230 : f32 to vector<1x1xf32>
      %1186 = arith.subf %1148, %1185 : vector<1x1xf32>
      %cst_231 = arith.constant 1.000000e-30 : f32
      %1187 = vector.broadcast %cst_231 : f32 to vector<1x1xf32>
      %1188 = arith.addf %1148, %1187 : vector<1x1xf32>
      %1189 = arith.select %1184, %1186, %1188 : vector<1x1xi1>, vector<1x1xf32>
      %1190 = arith.mulf %1182, %1189 : vector<1x1xf32>
      %cst_232 = arith.constant 1.000000e+00 : f32
      %1191 = vector.broadcast %cst_232 : f32 to vector<1x1xf32>
      %1192 = arith.divf %1191, %1190 : vector<1x1xf32>
      %1193 = arith.mulf %1182, %1094 : vector<1x1xf32>
      %1194 = arith.mulf %1192, %1151 : vector<1x1xf32>
      %1195 = arith.addf %1193, %1194 : vector<1x1xf32>
      %cst_233 = arith.constant 5.000000e-01 : f32
      %1196 = vector.broadcast %cst_233 : f32 to vector<1x1xf32>
      %1197 = arith.mulf %1196, %1195 : vector<1x1xf32>
      %1198 = arith.mulf %1182, %1099 : vector<1x1xf32>
      %1199 = arith.mulf %1192, %1154 : vector<1x1xf32>
      %1200 = arith.addf %1198, %1199 : vector<1x1xf32>
      %cst_234 = arith.constant 5.000000e-01 : f32
      %1201 = vector.broadcast %cst_234 : f32 to vector<1x1xf32>
      %1202 = arith.mulf %1201, %1200 : vector<1x1xf32>
      %1203 = arith.mulf %1182, %1104 : vector<1x1xf32>
      %1204 = arith.mulf %1192, %1157 : vector<1x1xf32>
      %1205 = arith.addf %1203, %1204 : vector<1x1xf32>
      %cst_235 = arith.constant 5.000000e-01 : f32
      %1206 = vector.broadcast %cst_235 : f32 to vector<1x1xf32>
      %1207 = arith.mulf %1206, %1205 : vector<1x1xf32>
      %1208 = arith.mulf %1182, %1109 : vector<1x1xf32>
      %1209 = arith.mulf %1192, %1160 : vector<1x1xf32>
      %1210 = arith.addf %1208, %1209 : vector<1x1xf32>
      %cst_236 = arith.constant 5.000000e-01 : f32
      %1211 = vector.broadcast %cst_236 : f32 to vector<1x1xf32>
      %1212 = arith.mulf %1211, %1210 : vector<1x1xf32>
      %1213 = arith.mulf %1182, %1114 : vector<1x1xf32>
      %1214 = arith.mulf %1192, %1163 : vector<1x1xf32>
      %1215 = arith.addf %1213, %1214 : vector<1x1xf32>
      %cst_237 = arith.constant 5.000000e-01 : f32
      %1216 = vector.broadcast %cst_237 : f32 to vector<1x1xf32>
      %1217 = arith.mulf %1216, %1215 : vector<1x1xf32>
      %1218 = arith.mulf %1182, %1119 : vector<1x1xf32>
      %1219 = arith.mulf %1192, %1166 : vector<1x1xf32>
      %1220 = arith.addf %1218, %1219 : vector<1x1xf32>
      %cst_238 = arith.constant 5.000000e-01 : f32
      %1221 = vector.broadcast %cst_238 : f32 to vector<1x1xf32>
      %1222 = arith.mulf %1221, %1220 : vector<1x1xf32>
      %1223 = arith.mulf %1182, %1124 : vector<1x1xf32>
      %1224 = arith.mulf %1192, %1169 : vector<1x1xf32>
      %1225 = arith.addf %1223, %1224 : vector<1x1xf32>
      %cst_239 = arith.constant 5.000000e-01 : f32
      %1226 = vector.broadcast %cst_239 : f32 to vector<1x1xf32>
      %1227 = arith.mulf %1226, %1225 : vector<1x1xf32>
      %1228 = arith.mulf %1182, %1129 : vector<1x1xf32>
      %1229 = arith.mulf %1192, %1172 : vector<1x1xf32>
      %1230 = arith.addf %1228, %1229 : vector<1x1xf32>
      %cst_240 = arith.constant 5.000000e-01 : f32
      %1231 = vector.broadcast %cst_240 : f32 to vector<1x1xf32>
      %1232 = arith.mulf %1231, %1230 : vector<1x1xf32>
      %1233 = arith.mulf %1182, %1134 : vector<1x1xf32>
      %1234 = arith.mulf %1192, %1175 : vector<1x1xf32>
      %1235 = arith.addf %1233, %1234 : vector<1x1xf32>
      %cst_241 = arith.constant 5.000000e-01 : f32
      %1236 = vector.broadcast %cst_241 : f32 to vector<1x1xf32>
      %1237 = arith.mulf %1236, %1235 : vector<1x1xf32>
      %1238 = arith.mulf %1217, %1237 : vector<1x1xf32>
      %1239 = arith.mulf %1222, %1232 : vector<1x1xf32>
      %1240 = arith.subf %1238, %1239 : vector<1x1xf32>
      %1241 = arith.mulf %1197, %1240 : vector<1x1xf32>
      %1242 = arith.mulf %1212, %1237 : vector<1x1xf32>
      %1243 = arith.mulf %1222, %1227 : vector<1x1xf32>
      %1244 = arith.subf %1242, %1243 : vector<1x1xf32>
      %1245 = arith.mulf %1202, %1244 : vector<1x1xf32>
      %1246 = arith.subf %1241, %1245 : vector<1x1xf32>
      %1247 = arith.mulf %1212, %1232 : vector<1x1xf32>
      %1248 = arith.mulf %1217, %1227 : vector<1x1xf32>
      %1249 = arith.subf %1247, %1248 : vector<1x1xf32>
      %1250 = arith.mulf %1207, %1249 : vector<1x1xf32>
      %1251 = arith.addf %1246, %1250 : vector<1x1xf32>
      %1252 = arith.mulf %1217, %1237 : vector<1x1xf32>
      %1253 = arith.mulf %1222, %1232 : vector<1x1xf32>
      %1254 = arith.subf %1252, %1253 : vector<1x1xf32>
      %1255 = arith.mulf %1222, %1227 : vector<1x1xf32>
      %1256 = arith.mulf %1212, %1237 : vector<1x1xf32>
      %1257 = arith.subf %1255, %1256 : vector<1x1xf32>
      %1258 = arith.mulf %1212, %1232 : vector<1x1xf32>
      %1259 = arith.mulf %1217, %1227 : vector<1x1xf32>
      %1260 = arith.subf %1258, %1259 : vector<1x1xf32>
      %1261 = arith.mulf %1232, %1207 : vector<1x1xf32>
      %1262 = arith.mulf %1237, %1202 : vector<1x1xf32>
      %1263 = arith.subf %1261, %1262 : vector<1x1xf32>
      %1264 = arith.mulf %1237, %1197 : vector<1x1xf32>
      %1265 = arith.mulf %1227, %1207 : vector<1x1xf32>
      %1266 = arith.subf %1264, %1265 : vector<1x1xf32>
      %1267 = arith.mulf %1227, %1202 : vector<1x1xf32>
      %1268 = arith.mulf %1232, %1197 : vector<1x1xf32>
      %1269 = arith.subf %1267, %1268 : vector<1x1xf32>
      %1270 = arith.mulf %1202, %1222 : vector<1x1xf32>
      %1271 = arith.mulf %1207, %1217 : vector<1x1xf32>
      %1272 = arith.subf %1270, %1271 : vector<1x1xf32>
      %1273 = arith.mulf %1207, %1212 : vector<1x1xf32>
      %1274 = arith.mulf %1197, %1222 : vector<1x1xf32>
      %1275 = arith.subf %1273, %1274 : vector<1x1xf32>
      %1276 = arith.mulf %1197, %1217 : vector<1x1xf32>
      %1277 = arith.mulf %1202, %1212 : vector<1x1xf32>
      %1278 = arith.subf %1276, %1277 : vector<1x1xf32>
      %1279 = math.absf %1251 : vector<1x1xf32>
      %cst_242 = arith.constant 1.000000e-30 : f32
      %1280 = vector.broadcast %cst_242 : f32 to vector<1x1xf32>
      %1281 = arith.addf %1279, %1280 : vector<1x1xf32>
      %1282 = math.log %1281 : vector<1x1xf32>
      %cst_243 = arith.constant -0.333333343 : f32
      %1283 = vector.broadcast %cst_243 : f32 to vector<1x1xf32>
      %1284 = arith.mulf %1283, %1282 : vector<1x1xf32>
      %1285 = math.exp %1284 : vector<1x1xf32>
      %cst_244 = arith.constant 0.000000e+00 : f32
      %1286 = vector.broadcast %cst_244 : f32 to vector<1x1xf32>
      %1287 = arith.cmpf olt, %1251, %1286 : vector<1x1xf32>
      %cst_245 = arith.constant 1.000000e-30 : f32
      %1288 = vector.broadcast %cst_245 : f32 to vector<1x1xf32>
      %1289 = arith.subf %1251, %1288 : vector<1x1xf32>
      %cst_246 = arith.constant 1.000000e-30 : f32
      %1290 = vector.broadcast %cst_246 : f32 to vector<1x1xf32>
      %1291 = arith.addf %1251, %1290 : vector<1x1xf32>
      %1292 = arith.select %1287, %1289, %1291 : vector<1x1xi1>, vector<1x1xf32>
      %1293 = arith.mulf %1285, %1292 : vector<1x1xf32>
      %cst_247 = arith.constant 1.000000e+00 : f32
      %1294 = vector.broadcast %cst_247 : f32 to vector<1x1xf32>
      %1295 = arith.divf %1294, %1293 : vector<1x1xf32>
      %1296 = arith.mulf %1285, %1197 : vector<1x1xf32>
      %1297 = arith.mulf %1295, %1254 : vector<1x1xf32>
      %1298 = arith.addf %1296, %1297 : vector<1x1xf32>
      %cst_248 = arith.constant 5.000000e-01 : f32
      %1299 = vector.broadcast %cst_248 : f32 to vector<1x1xf32>
      %1300 = arith.mulf %1299, %1298 : vector<1x1xf32>
      %1301 = arith.mulf %1285, %1202 : vector<1x1xf32>
      %1302 = arith.mulf %1295, %1257 : vector<1x1xf32>
      %1303 = arith.addf %1301, %1302 : vector<1x1xf32>
      %cst_249 = arith.constant 5.000000e-01 : f32
      %1304 = vector.broadcast %cst_249 : f32 to vector<1x1xf32>
      %1305 = arith.mulf %1304, %1303 : vector<1x1xf32>
      %1306 = arith.mulf %1285, %1207 : vector<1x1xf32>
      %1307 = arith.mulf %1295, %1260 : vector<1x1xf32>
      %1308 = arith.addf %1306, %1307 : vector<1x1xf32>
      %cst_250 = arith.constant 5.000000e-01 : f32
      %1309 = vector.broadcast %cst_250 : f32 to vector<1x1xf32>
      %1310 = arith.mulf %1309, %1308 : vector<1x1xf32>
      %1311 = arith.mulf %1285, %1212 : vector<1x1xf32>
      %1312 = arith.mulf %1295, %1263 : vector<1x1xf32>
      %1313 = arith.addf %1311, %1312 : vector<1x1xf32>
      %cst_251 = arith.constant 5.000000e-01 : f32
      %1314 = vector.broadcast %cst_251 : f32 to vector<1x1xf32>
      %1315 = arith.mulf %1314, %1313 : vector<1x1xf32>
      %1316 = arith.mulf %1285, %1217 : vector<1x1xf32>
      %1317 = arith.mulf %1295, %1266 : vector<1x1xf32>
      %1318 = arith.addf %1316, %1317 : vector<1x1xf32>
      %cst_252 = arith.constant 5.000000e-01 : f32
      %1319 = vector.broadcast %cst_252 : f32 to vector<1x1xf32>
      %1320 = arith.mulf %1319, %1318 : vector<1x1xf32>
      %1321 = arith.mulf %1285, %1222 : vector<1x1xf32>
      %1322 = arith.mulf %1295, %1269 : vector<1x1xf32>
      %1323 = arith.addf %1321, %1322 : vector<1x1xf32>
      %cst_253 = arith.constant 5.000000e-01 : f32
      %1324 = vector.broadcast %cst_253 : f32 to vector<1x1xf32>
      %1325 = arith.mulf %1324, %1323 : vector<1x1xf32>
      %1326 = arith.mulf %1285, %1227 : vector<1x1xf32>
      %1327 = arith.mulf %1295, %1272 : vector<1x1xf32>
      %1328 = arith.addf %1326, %1327 : vector<1x1xf32>
      %cst_254 = arith.constant 5.000000e-01 : f32
      %1329 = vector.broadcast %cst_254 : f32 to vector<1x1xf32>
      %1330 = arith.mulf %1329, %1328 : vector<1x1xf32>
      %1331 = arith.mulf %1285, %1232 : vector<1x1xf32>
      %1332 = arith.mulf %1295, %1275 : vector<1x1xf32>
      %1333 = arith.addf %1331, %1332 : vector<1x1xf32>
      %cst_255 = arith.constant 5.000000e-01 : f32
      %1334 = vector.broadcast %cst_255 : f32 to vector<1x1xf32>
      %1335 = arith.mulf %1334, %1333 : vector<1x1xf32>
      %1336 = arith.mulf %1285, %1237 : vector<1x1xf32>
      %1337 = arith.mulf %1295, %1278 : vector<1x1xf32>
      %1338 = arith.addf %1336, %1337 : vector<1x1xf32>
      %cst_256 = arith.constant 5.000000e-01 : f32
      %1339 = vector.broadcast %cst_256 : f32 to vector<1x1xf32>
      %1340 = arith.mulf %1339, %1338 : vector<1x1xf32>
      %1341 = arith.mulf %1310, %104 : vector<1x1xf32>
      %1342 = arith.mulf %1325, %104 : vector<1x1xf32>
      %1343 = arith.mulf %1340, %104 : vector<1x1xf32>
      %c0_257 = arith.constant 0 : index
      %c0_258 = arith.constant 0 : index
      %1344 = vector.load %arg8[%c0_257, %c0_258] : memref<3x3xf32, #tpu.memory_space<vmem>>, vector<1x1xf32>
      tpu.vector_store %arg8[%c0_257, %c0_258], %1300 {strides = array<i32>} : memref<3x3xf32, #tpu.memory_space<vmem>>, vector<1x1xf32>,
      %c0_259 = arith.constant 0 : index
      %c1_260 = arith.constant 1 : index
      %1345 = vector.load %arg8[%c0_259, %c1_260] : memref<3x3xf32, #tpu.memory_space<vmem>>, vector<1x1xf32>
      tpu.vector_store %arg8[%c0_259, %c1_260], %1305 {strides = array<i32>} : memref<3x3xf32, #tpu.memory_space<vmem>>, vector<1x1xf32>,
      %c0_261 = arith.constant 0 : index
      %c2_262 = arith.constant 2 : index
      %1346 = vector.load %arg8[%c0_261, %c2_262] : memref<3x3xf32, #tpu.memory_space<vmem>>, vector<1x1xf32>
      tpu.vector_store %arg8[%c0_261, %c2_262], %1341 {strides = array<i32>} : memref<3x3xf32, #tpu.memory_space<vmem>>, vector<1x1xf32>,
      %c1_263 = arith.constant 1 : index
      %c0_264 = arith.constant 0 : index
      %1347 = vector.load %arg8[%c1_263, %c0_264] : memref<3x3xf32, #tpu.memory_space<vmem>>, vector<1x1xf32>
      tpu.vector_store %arg8[%c1_263, %c0_264], %1315 {strides = array<i32>} : memref<3x3xf32, #tpu.memory_space<vmem>>, vector<1x1xf32>,
      %c1_265 = arith.constant 1 : index
      %c1_266 = arith.constant 1 : index
      %1348 = vector.load %arg8[%c1_265, %c1_266] : memref<3x3xf32, #tpu.memory_space<vmem>>, vector<1x1xf32>
      tpu.vector_store %arg8[%c1_265, %c1_266], %1320 {strides = array<i32>} : memref<3x3xf32, #tpu.memory_space<vmem>>, vector<1x1xf32>,
      %c1_267 = arith.constant 1 : index
      %c2_268 = arith.constant 2 : index
      %1349 = vector.load %arg8[%c1_267, %c2_268] : memref<3x3xf32, #tpu.memory_space<vmem>>, vector<1x1xf32>
      tpu.vector_store %arg8[%c1_267, %c2_268], %1342 {strides = array<i32>} : memref<3x3xf32, #tpu.memory_space<vmem>>, vector<1x1xf32>,
      %c2_269 = arith.constant 2 : index
      %c0_270 = arith.constant 0 : index
      %1350 = vector.load %arg8[%c2_269, %c0_270] : memref<3x3xf32, #tpu.memory_space<vmem>>, vector<1x1xf32>
      tpu.vector_store %arg8[%c2_269, %c0_270], %1330 {strides = array<i32>} : memref<3x3xf32, #tpu.memory_space<vmem>>, vector<1x1xf32>,
      %c2_271 = arith.constant 2 : index
      %c1_272 = arith.constant 1 : index
      %1351 = vector.load %arg8[%c2_271, %c1_272] : memref<3x3xf32, #tpu.memory_space<vmem>>, vector<1x1xf32>
      tpu.vector_store %arg8[%c2_271, %c1_272], %1335 {strides = array<i32>} : memref<3x3xf32, #tpu.memory_space<vmem>>, vector<1x1xf32>,
      %c2_273 = arith.constant 2 : index
      %c2_274 = arith.constant 2 : index
      %1352 = vector.load %arg8[%c2_273, %c2_274] : memref<3x3xf32, #tpu.memory_space<vmem>>, vector<1x1xf32>
      tpu.vector_store %arg8[%c2_273, %c2_274], %1343 {strides = array<i32>} : memref<3x3xf32, #tpu.memory_space<vmem>>, vector<1x1xf32>,
    } else {
    }
    %c1_i32_9 = arith.constant 1 : i32
    %15 = arith.cmpi eq, %arg0, %c1_i32_9 : i32
    %16 = arith.extui %15 : i1 to i32
    %c0_i32_10 = arith.constant 0 : i32
    %17 = arith.cmpi ne, %16, %c0_i32_10 : i32
    scf.if %17 {
      %c0_14 = arith.constant 0 : index
      %c0_15 = arith.constant 0 : index
      %23 = vector.load %arg5[%c0_14, %c0_15] : memref<3x1xf32, #tpu.memory_space<vmem>>, vector<3x1xf32>
      %cst = arith.constant 1.562500e-02 : f32
      %24 = vector.broadcast %cst : f32 to vector<3x1xf32>
      %25 = arith.mulf %23, %24 : vector<3x1xf32>
      %c0_16 = arith.constant 0 : index
      %c0_17 = arith.constant 0 : index
      %26 = vector.load %arg6[%c0_16, %c0_17] : memref<3x1xf32, #tpu.memory_space<vmem>>, vector<3x1xf32>
      %cst_18 = arith.constant 1.562500e-02 : f32
      %27 = vector.broadcast %cst_18 : f32 to vector<3x1xf32>
      %28 = arith.mulf %26, %27 : vector<3x1xf32>
      %29 = vector.broadcast %25 : vector<3x1xf32> to vector<3x128xf32>
      %30 = arith.subf %5, %29 : vector<3x128xf32>
      %31 = vector.broadcast %28 : vector<3x1xf32> to vector<3x128xf32>
      %32 = arith.subf %6, %31 : vector<3x128xf32>
      %cst_19 = arith.constant 0.000000e+00 : f32
      %33 = vector.broadcast %cst_19 : f32 to vector<1x128xf32>
      %c0_20 = arith.constant 0 : index
      %c0_21 = arith.constant 0 : index
      %34 = vector.load %arg8[%c0_20, %c0_21] : memref<3x3xf32, #tpu.memory_space<vmem>>, vector<1x1xf32>
      %35 = vector.extract_strided_slice %30 {offsets = [0, 0], sizes = [1, 128], strides = [1, 1]} : vector<3x128xf32> to vector<1x128xf32>
      %36 = vector.broadcast %34 : vector<1x1xf32> to vector<1x128xf32>
      %37 = arith.mulf %36, %35 : vector<1x128xf32>
      %c1 = arith.constant 1 : index
      %c0_22 = arith.constant 0 : index
      %38 = vector.load %arg8[%c1, %c0_22] : memref<3x3xf32, #tpu.memory_space<vmem>>, vector<1x1xf32>
      %39 = vector.extract_strided_slice %30 {offsets = [1, 0], sizes = [1, 128], strides = [1, 1]} : vector<3x128xf32> to vector<1x128xf32>
      %40 = vector.broadcast %38 : vector<1x1xf32> to vector<1x128xf32>
      %41 = arith.mulf %40, %39 : vector<1x128xf32>
      %42 = arith.addf %37, %41 : vector<1x128xf32>
      %c2 = arith.constant 2 : index
      %c0_23 = arith.constant 0 : index
      %43 = vector.load %arg8[%c2, %c0_23] : memref<3x3xf32, #tpu.memory_space<vmem>>, vector<1x1xf32>
      %44 = vector.extract_strided_slice %30 {offsets = [2, 0], sizes = [1, 128], strides = [1, 1]} : vector<3x128xf32> to vector<1x128xf32>
      %45 = vector.broadcast %43 : vector<1x1xf32> to vector<1x128xf32>
      %46 = arith.mulf %45, %44 : vector<1x128xf32>
      %47 = arith.addf %42, %46 : vector<1x128xf32>
      %48 = vector.extract_strided_slice %32 {offsets = [0, 0], sizes = [1, 128], strides = [1, 1]} : vector<3x128xf32> to vector<1x128xf32>
      %49 = arith.subf %47, %48 : vector<1x128xf32>
      %50 = arith.mulf %49, %49 : vector<1x128xf32>
      %51 = arith.addf %33, %50 : vector<1x128xf32>
      %c0_24 = arith.constant 0 : index
      %c1_25 = arith.constant 1 : index
      %52 = vector.load %arg8[%c0_24, %c1_25] : memref<3x3xf32, #tpu.memory_space<vmem>>, vector<1x1xf32>
      %53 = vector.extract_strided_slice %30 {offsets = [0, 0], sizes = [1, 128], strides = [1, 1]} : vector<3x128xf32> to vector<1x128xf32>
      %54 = vector.broadcast %52 : vector<1x1xf32> to vector<1x128xf32>
      %55 = arith.mulf %54, %53 : vector<1x128xf32>
      %c1_26 = arith.constant 1 : index
      %c1_27 = arith.constant 1 : index
      %56 = vector.load %arg8[%c1_26, %c1_27] : memref<3x3xf32, #tpu.memory_space<vmem>>, vector<1x1xf32>
      %57 = vector.extract_strided_slice %30 {offsets = [1, 0], sizes = [1, 128], strides = [1, 1]} : vector<3x128xf32> to vector<1x128xf32>
      %58 = vector.broadcast %56 : vector<1x1xf32> to vector<1x128xf32>
      %59 = arith.mulf %58, %57 : vector<1x128xf32>
      %60 = arith.addf %55, %59 : vector<1x128xf32>
      %c2_28 = arith.constant 2 : index
      %c1_29 = arith.constant 1 : index
      %61 = vector.load %arg8[%c2_28, %c1_29] : memref<3x3xf32, #tpu.memory_space<vmem>>, vector<1x1xf32>
      %62 = vector.extract_strided_slice %30 {offsets = [2, 0], sizes = [1, 128], strides = [1, 1]} : vector<3x128xf32> to vector<1x128xf32>
      %63 = vector.broadcast %61 : vector<1x1xf32> to vector<1x128xf32>
      %64 = arith.mulf %63, %62 : vector<1x128xf32>
      %65 = arith.addf %60, %64 : vector<1x128xf32>
      %66 = vector.extract_strided_slice %32 {offsets = [1, 0], sizes = [1, 128], strides = [1, 1]} : vector<3x128xf32> to vector<1x128xf32>
      %67 = arith.subf %65, %66 : vector<1x128xf32>
      %68 = arith.mulf %67, %67 : vector<1x128xf32>
      %69 = arith.addf %51, %68 : vector<1x128xf32>
      %c0_30 = arith.constant 0 : index
      %c2_31 = arith.constant 2 : index
      %70 = vector.load %arg8[%c0_30, %c2_31] : memref<3x3xf32, #tpu.memory_space<vmem>>, vector<1x1xf32>
      %71 = vector.extract_strided_slice %30 {offsets = [0, 0], sizes = [1, 128], strides = [1, 1]} : vector<3x128xf32> to vector<1x128xf32>
      %72 = vector.broadcast %70 : vector<1x1xf32> to vector<1x128xf32>
      %73 = arith.mulf %72, %71 : vector<1x128xf32>
      %c1_32 = arith.constant 1 : index
      %c2_33 = arith.constant 2 : index
      %74 = vector.load %arg8[%c1_32, %c2_33] : memref<3x3xf32, #tpu.memory_space<vmem>>, vector<1x1xf32>
      %75 = vector.extract_strided_slice %30 {offsets = [1, 0], sizes = [1, 128], strides = [1, 1]} : vector<3x128xf32> to vector<1x128xf32>
      %76 = vector.broadcast %74 : vector<1x1xf32> to vector<1x128xf32>
      %77 = arith.mulf %76, %75 : vector<1x128xf32>
      %78 = arith.addf %73, %77 : vector<1x128xf32>
      %c2_34 = arith.constant 2 : index
      %c2_35 = arith.constant 2 : index
      %79 = vector.load %arg8[%c2_34, %c2_35] : memref<3x3xf32, #tpu.memory_space<vmem>>, vector<1x1xf32>
      %80 = vector.extract_strided_slice %30 {offsets = [2, 0], sizes = [1, 128], strides = [1, 1]} : vector<3x128xf32> to vector<1x128xf32>
      %81 = vector.broadcast %79 : vector<1x1xf32> to vector<1x128xf32>
      %82 = arith.mulf %81, %80 : vector<1x128xf32>
      %83 = arith.addf %78, %82 : vector<1x128xf32>
      %84 = vector.extract_strided_slice %32 {offsets = [2, 0], sizes = [1, 128], strides = [1, 1]} : vector<3x128xf32> to vector<1x128xf32>
      %85 = arith.subf %83, %84 : vector<1x128xf32>
      %86 = arith.mulf %85, %85 : vector<1x128xf32>
      %87 = arith.addf %69, %86 : vector<1x128xf32>
      %cst_36 = arith.constant 0.133437946 : f32
      %88 = vector.broadcast %cst_36 : f32 to vector<1x128xf32>
      %89 = arith.mulf %87, %88 : vector<1x128xf32>
      %cst_37 = arith.constant 1.000000e+00 : f32
      %90 = vector.broadcast %cst_37 : f32 to vector<1x128xf32>
      %91 = arith.addf %90, %89 : vector<1x128xf32>
      %cst_38 = arith.constant 1.000000e+00 : f32
      %92 = vector.broadcast %cst_38 : f32 to vector<1x128xf32>
      %93 = arith.divf %92, %91 : vector<1x128xf32>
      %94 = tpu.iota {dimensions = array<i32: 1>} : vector<1x128xi32>
      %c128_i32 = arith.constant 128 : i32
      %95 = arith.muli %arg1, %c128_i32 : i32
      %96 = vector.broadcast %95 : i32 to vector<1x128xi32>
      %97 = arith.addi %96, %94 : vector<1x128xi32>
      %c64_i32 = arith.constant 64 : i32
      %98 = vector.broadcast %c64_i32 : i32 to vector<1x128xi32>
      %99 = arith.cmpi slt, %97, %98 : vector<1x128xi32>
      %cst_39 = arith.constant 0.000000e+00 : f32
      %100 = vector.broadcast %cst_39 : f32 to vector<1x128xf32>
      %101 = arith.select %99, %93, %100 : vector<1x128xi1>, vector<1x128xf32>
      %c0_40 = arith.constant 0 : index
      %c0_41 = arith.constant 0 : index
      %102 = vector.load %arg9[%c0_40, %c0_41] : memref<1x1xf32, #tpu.memory_space<vmem>>, vector<1x1xf32>
      %cst_42 = arith.constant dense<0.000000e+00> : vector<1xf32>
      %103 = vector.multi_reduction <add>, %101, %cst_42 [1] : vector<1x128xf32> to vector<1xf32>
      %104 = vector.shape_cast %103 : vector<1xf32> to vector<1x1xf32>
      %105 = arith.addf %102, %104 : vector<1x1xf32>
      %c0_43 = arith.constant 0 : index
      %c0_44 = arith.constant 0 : index
      %106 = vector.load %arg9[%c0_43, %c0_44] : memref<1x1xf32, #tpu.memory_space<vmem>>, vector<1x1xf32>
      tpu.vector_store %arg9[%c0_43, %c0_44], %105 {strides = array<i32>} : memref<1x1xf32, #tpu.memory_space<vmem>>, vector<1x1xf32>,
    } else {
    }
    %c1_i32_11 = arith.constant 1 : i32
    %18 = arith.cmpi eq, %arg0, %c1_i32_11 : i32
    %c0_i32_12 = arith.constant 0 : i32
    %19 = arith.cmpi eq, %arg1, %c0_i32_12 : i32
    %20 = arith.andi %18, %19 : i1
    %21 = arith.extui %20 : i1 to i32
    %c0_i32_13 = arith.constant 0 : i32
    %22 = arith.cmpi ne, %21, %c0_i32_13 : i32
    scf.if %22 {
      %c0_14 = arith.constant 0 : index
      %c0_15 = arith.constant 0 : index
      %23 = vector.load %arg9[%c0_14, %c0_15] : memref<1x1xf32, #tpu.memory_space<vmem>>, vector<1x1xf32>
      %cst = arith.constant 1.562500e-02 : f32
      %24 = vector.broadcast %cst : f32 to vector<1x1xf32>
      %25 = arith.mulf %23, %24 : vector<1x1xf32>
      %c0_16 = arith.constant 0 : index
      %c0_17 = arith.constant 0 : index
      %26 = vector.load %arg4[%c0_16, %c0_17] : memref<1x1xf32, #tpu.memory_space<vmem>>, vector<1x1xf32>
      tpu.vector_store %arg4[%c0_16, %c0_17], %25 {strides = array<i32>} : memref<1x1xf32, #tpu.memory_space<vmem>>, vector<1x1xf32>,
    } else {
    }
    return
  }
  func.func @transform_0(%arg0: i32, %arg1: i32) -> (i32, i32) {
    %c0_i32 = arith.constant 0 : i32
    %c0_i32_0 = arith.constant 0 : i32
    return %c0_i32, %arg1 : i32, i32
  }
  func.func @transform_1(%arg0: i32, %arg1: i32) -> (i32, i32) {
    %c0_i32 = arith.constant 0 : i32
    %c0_i32_0 = arith.constant 0 : i32
    return %c0_i32, %arg1 : i32, i32
  }
  func.func @transform_2(%arg0: i32, %arg1: i32) -> (i32, i32) {
    %c0_i32 = arith.constant 0 : i32
    %c0_i32_0 = arith.constant 0 : i32
    %c0_i32_1 = arith.constant 0 : i32
    return %c0_i32, %c0_i32_0 : i32, i32
  }
}

</mosaic_0001>

<llo_original>
// kernel: tpu_custom_call.1
$region0: #{tpu_custom_call.1}
  #allocation0 [shape = 'u32[]', space=smem, size = 0x4, offset = 0x4, fixed_abs, tag = 'smem constant byte address 0x4 - core index']
  #allocation1 [shape = 'u32[144,128]{1,0:T(1,128)}', space=vmem, size = 0x12000, scoped, tag = 'internal scratch']
  #allocation2 [shape = 'f32[3,1]{1,0:T(4,128)}', space=vmem, size = 0x800, scoped, tag = 'scratch operand']
  #allocation3 [shape = 'f32[3,1]{1,0:T(4,128)}', space=vmem, size = 0x800, scoped, tag = 'scratch operand']
  #allocation4 [shape = 'f32[3,3]{1,0:T(4,128)}', space=vmem, size = 0x800, scoped, tag = 'scratch operand']
  #allocation5 [shape = 'f32[3,3]{1,0:T(4,128)}', space=vmem, size = 0x800, scoped, tag = 'scratch operand']
  #allocation6 [shape = 'f32[1,1]{1,0:T(1,128)}', space=vmem, size = 0x200, scoped, tag = 'scratch operand']
  %s0 = inlined_call_operand.hbm [shape: f32[3,128], index: 0, kind: input, shape index: {}]
  %s1 = inlined_call_operand.hbm [shape: f32[3,128], index: 1, kind: input, shape index: {}]
  %s2 = inlined_call_operand.hbm [shape: f32[1,1], index: 2, kind: output, shape index: {}]
  %s3 = sld [smem:[#allocation0]]
  $region69: #{tpu_custom_call.1} parent=0
    _
  %s5 = ssub.s32 1, %s3
  %s6 = scalar_select 0, %s5, %s3
  $region1: #{tpu_custom_call.1} parent=0
    #allocation7 [shape = 'u8[2048]{0}', space=vmem, size = 0x800, scoped, tag = 'input window, operand 0, single buffered']
    #allocation8 [shape = 's32[2]{0}', space=sflag, size = 0x8, scoped, tag = 'scoped memory for tpu_custom_call.1']
    #allocation9 [shape = 's32[2]{0}', space=sflag, size = 0x8, scoped, tag = 'scoped memory for tpu_custom_call.1']
    #allocation10 [shape = 'u8[2048]{0}', space=vmem, size = 0x800, scoped, tag = 'input window, operand 1, single buffered']
    #allocation11 [shape = 's32[1]{0}', space=sflag, size = 0x4, scoped, tag = 'scoped memory for tpu_custom_call.1']
    #allocation12 [shape = 'u8[512]{0}', space=vmem, size = 0x400, scoped, tag = 'output window, operand 0, single buffered']
    %7 = vsyncpa [#allocation8], 0
    %8 = vsyncpa [#allocation11], 0
    %9 = vsyncpa [#allocation9], 0
    loop: start=0, step=1, limit=4
    $region2: #{tpu_custom_call.1} parent=1 // loop_pre_header
      _
    $region3: #{tpu_custom_call.1} parent=1 // loop_header
      %s11 = sphi 0, %s15
      %p12 = scmp.ge.s32.totalorder %s11, 4
      %s18 = sphi 0, %s30
      %s19 = sphi 0, %s26
      %s20 = sphi 0, %s18
      %s21 = sphi 0, %s19
      %s22 = sphi 0, %s20
      %s23 = sphi 0, %s21
      %s33 = sphi 0, %s35
      %s36 = sphi 0, %s33
      %s37 = sphi 0, %s36
      %s53 = sphi 0, %s37
      %s59 = sphi 0, %s61
      %s62 = sphi 0, %s59
      %s63 = sphi 0, %s62
      %s79 = sphi 0, %s63
      %s83 = sphi 0, %s83
      %s85 = sphi 0, %s83
      %s86 = sphi 0, %s85
      %s100 = sphi 0, %s86
    $region4: #{tpu_custom_call.1} parent=1 // loop_header_branch
      %14 = sbr.rel (%p12) target = $region8
    $region5: #{tpu_custom_call.1} parent=1 // loop_body
      %s16 = ssub.s32 %s11, 1
      %s17 = ssub.s32 %s11, 2
      %s24 = sadd.s32 1, %s19
      %p25 = scmp.ge.s32.totalorder %s24, 1
      %s26 = scalar_select %p25, 0, %s24
      %s27 = sadd.s32 1, %s18
      %s28 = scalar_select %p25, %s27, %s18
      %p29 = scmp.ge.s32.totalorder %s28, 2
      %s30 = scalar_select %p29, 0, %s28
      %s31 = ssub.s32 %s19, %s26
      %p32 = scmp.eq.s32.totalorder %s31, 0
      %s34 = sadd.s32 %s33, 1
      %s35 = scalar_select %p32, %s33, %s34
      %p38 = pneg %p32
      %p39 = scmp.eq.s32.totalorder %s11, 1
      %p40 = por %p38, %p39
      %p41 = scmp.ne.s32.totalorder %s33, %s36
      %p42 = scmp.eq.s32.totalorder %s11, 0
      %p43 = por %p41, %p42
      %p44 = scmp.ne.s32.totalorder %s33, %s36
      %p45 = scmp.eq.s32.totalorder %s16, 1
      %p46 = por %p44, %p45
      %p47 = scmp.ne.s32.totalorder %s36, %s37
      %p48 = scmp.eq.s32.totalorder %s16, 0
      %p49 = por %p47, %p48
      %p50 = scmp.ne.s32.totalorder %s36, %s37
      %p51 = scmp.eq.s32.totalorder %s17, 1
      %p52 = por %p50, %p51
      %p54 = scmp.ne.s32.totalorder %s37, %s53
      %p55 = scmp.eq.s32.totalorder %s17, 0
      %p56 = por %p54, %p55
      %s57 = ssub.s32 %s19, %s26
      %p58 = scmp.eq.s32.totalorder %s57, 0
      %s60 = sadd.s32 %s59, 1
      %s61 = scalar_select %p58, %s59, %s60
      %p64 = pneg %p58
      %p65 = scmp.eq.s32.totalorder %s11, 1
      %p66 = por %p64, %p65
      %p67 = scmp.ne.s32.totalorder %s59, %s62
      %p68 = scmp.eq.s32.totalorder %s11, 0
      %p69 = por %p67, %p68
      %p70 = scmp.ne.s32.totalorder %s59, %s62
      %p71 = scmp.eq.s32.totalorder %s16, 1
      %p72 = por %p70, %p71
      %p73 = scmp.ne.s32.totalorder %s62, %s63
      %p74 = scmp.eq.s32.totalorder %s16, 0
      %p75 = por %p73, %p74
      %p76 = scmp.ne.s32.totalorder %s62, %s63
      %p77 = scmp.eq.s32.totalorder %s17, 1
      %p78 = por %p76, %p77
      %p80 = scmp.ne.s32.totalorder %s63, %s79
      %p81 = scmp.eq.s32.totalorder %s17, 0
      %p82 = por %p80, %p81
      %s84 = sadd.s32 %s83, 1
      %p87 = scmp.eq.s32.totalorder %s11, 1
      %p88 = scmp.ne.s32.totalorder %s83, %s85
      %p89 = scmp.eq.s32.totalorder %s11, 0
      %p90 = por %p88, %p89
      %p91 = scmp.ne.s32.totalorder %s83, %s85
      %p92 = scmp.eq.s32.totalorder %s16, 1
      %p93 = por %p91, %p92
      %p94 = scmp.ne.s32.totalorder %s85, %s86
      %p95 = scmp.eq.s32.totalorder %s16, 0
      %p96 = por %p94, %p95
      %p97 = scmp.ne.s32.totalorder %s85, %s86
      %p98 = scmp.eq.s32.totalorder %s17, 1
      %p99 = por %p97, %p98
      %p101 = scmp.ne.s32.totalorder %s86, %s100
      %p102 = scmp.eq.s32.totalorder %s17, 0
      %p103 = por %p101, %p102
      %p104 = scmp.le.s32.totalorder 1, %s11
      %p105 = scmp.lt.s32.totalorder %s11, 3
      %p106 = pnand %p104, %p105
      %p107 = pneg %p106
      // Predicated region
      $region9: #{tpu_custom_call.1} parent=5 // pred_check
        _
      $region10: #{tpu_custom_call.1} parent=5 // pred_check_branch
        %109 = sbr.rel (%p106) target = $region12
      $region11: #{tpu_custom_call.1} parent=5 // pred_region
        %s110 = ssub.s32 %s11, 1
        // Predicated region
        $region13: #{tpu_custom_call.1} parent=11 // pred_check
          %p111 = pneg %p49
        $region14: #{tpu_custom_call.1} parent=11 // pred_check_branch
          %113 = sbr.rel (%p111) target = $region16
        $region15: #{tpu_custom_call.1} parent=11 // pred_region
          %s115 = ssub.s32 64, 64
          %116 = vsyncadd [#allocation8], %s115
          %s117 = smul.addr %s21, 64
          %s118 = scalar_lea.hbm %s0, %s117
          %s120 = sshll.u32 [#allocation7], 4
          %s121 = int_to_ptr.vmem [resolvable:$true] %s120
          %123 = dma.hbm_to_vmem [thread:$0]  %s118, 64, %s121, [#allocation8]
        $region16: #{tpu_custom_call.1} parent=11 // pred_fallthru
          _
        // Predicated region
        $region17: #{tpu_custom_call.1} parent=11 // pred_check
          %p124 = pneg %p75
        $region18: #{tpu_custom_call.1} parent=11 // pred_check_branch
          %126 = sbr.rel (%p124) target = $region20
        $region19: #{tpu_custom_call.1} parent=11 // pred_region
          %s128 = ssub.s32 64, 64
          %129 = vsyncadd [#allocation11], %s128
          %s130 = smul.addr %s21, 64
          %s131 = scalar_lea.hbm %s1, %s130
          %s133 = sshll.u32 [#allocation10], 4
          %s134 = int_to_ptr.vmem [resolvable:$true] %s133
          %136 = dma.hbm_to_vmem [thread:$0]  %s131, 64, %s134, [#allocation11]
        $region20: #{tpu_custom_call.1} parent=11 // pred_fallthru
          _
      $region12: #{tpu_custom_call.1} parent=5 // pred_fallthru
        _
      %p137 = scmp.lt.s32.totalorder %s11, 2
      // Predicated region
      $region21: #{tpu_custom_call.1} parent=5 // pred_check
        %p138 = pneg %p137
      $region22: #{tpu_custom_call.1} parent=5 // pred_check_branch
        %140 = sbr.rel (%p138) target = $region24
      $region23: #{tpu_custom_call.1} parent=5 // pred_region
        _
      $region24: #{tpu_custom_call.1} parent=5 // pred_fallthru
        _
      %p141 = scmp.le.s32.totalorder 1, %s11
      %p142 = scmp.lt.s32.totalorder %s11, 3
      %p143 = pnand %p141, %p142
      %p144 = pneg %p143
      // Predicated region
      $region25: #{tpu_custom_call.1} parent=5 // pred_check
        _
      $region26: #{tpu_custom_call.1} parent=5 // pred_check_branch
        %146 = sbr.rel (%p143) target = $region28
      $region27: #{tpu_custom_call.1} parent=5 // pred_region
        %s147 = ssub.s32 %s11, 1
        // Predicated region
        $region29: #{tpu_custom_call.1} parent=27 // pred_check
          %p148 = pneg %p49
        $region30: #{tpu_custom_call.1} parent=27 // pred_check_branch
          %150 = sbr.rel (%p148) target = $region32
        $region31: #{tpu_custom_call.1} parent=27 // pred_region
          %151 = dma.done [#allocation8], 64
        $region32: #{tpu_custom_call.1} parent=27 // pred_fallthru
          _
        // Predicated region
        $region33: #{tpu_custom_call.1} parent=27 // pred_check
          %p152 = pneg %p75
        $region34: #{tpu_custom_call.1} parent=27 // pred_check_branch
          %154 = sbr.rel (%p152) target = $region36
        $region35: #{tpu_custom_call.1} parent=27 // pred_region
          %155 = dma.done [#allocation11], 64
        $region36: #{tpu_custom_call.1} parent=27 // pred_fallthru
          _
        %p156 = pneg %p49
        %p157 = pneg %p46
        %p158 = pneg %p75
        %p159 = pneg %p72
        %p160 = pneg %p96
        %p161 = pneg %p93
        %p162 = scmp.eq.s32.totalorder %s20, 0
        %p163 = scmp.eq.s32.totalorder %s21, 0
        %p164 = pnand %p162, %p163
        %p165 = pneg %p164
        // Predicated region
        $region37: #{tpu_custom_call.1} parent=27 // pred_check
          _
        $region38: #{tpu_custom_call.1} parent=27 // pred_check_branch
          %167 = sbr.rel (%p164) target = $region40
        $region39: #{tpu_custom_call.1} parent=27 // pred_region
          %vm168 = vcmask 2048
          %169 = vst.msk [vmem:[#allocation2] sm:$0x7] %vm168, 0.0
          %170 = vst.msk [vmem:[#allocation3] sm:$0x7] %vm168, 0.0
          %vm171 = vcmask 18432
          %172 = vst.msk [vmem:[#allocation4] sm:$0x7] %vm171, 0.0
          %vm173 = vcmask 0
          %174 = vst.msk [vmem:[#allocation6] sm:$0x1] %vm173, 0.0
        $region40: #{tpu_custom_call.1} parent=27 // pred_fallthru
          _
        %v175 = vld [vmem:[#allocation7] sm:$0x7]
        %v176 = vld [vmem:[#allocation10] sm:$0x7]
        // Predicated region
        $region41: #{tpu_custom_call.1} parent=27 // pred_check
          %p177 = pneg %p162
        $region42: #{tpu_custom_call.1} parent=27 // pred_check_branch
          %179 = sbr.rel (%p177) target = $region44
        $region43: #{tpu_custom_call.1} parent=27 // pred_region
          %v180 = vld [vmem:[#allocation2] sm:$0x7]
          %vm181 = vcmask 1042432
          %v182 = vsel %vm181, %v175, 0.0
          %183 = vadd.xlane.f32.xlu0 %v182
          %v184 = vpop.xlane.xlu0 %183
          %v185 = vadd.f32 %v180, %v184
          %vm186 = vcmask 2048
          %187 = vst.msk [vmem:[#allocation2] sm:$0x7] %vm186, %v185
          %v188 = vld [vmem:[#allocation3] sm:$0x7]
          %v189 = vsel %vm181, %v176, 0.0
          %190 = vadd.xlane.f32.xlu0 %v189
          %v191 = vpop.xlane.xlu0 %190
          %v192 = vadd.f32 %v188, %v191
          %193 = vst.msk [vmem:[#allocation3] sm:$0x7] %vm186, %v192
          %v194 = vld [vmem:[#allocation4] sm:$0x7]
          %v195 = vlaneseq
          %v196 = vshrl.u32 %v195, 7
          %v197 = vsub.s32 0, %v196
          %v198 = vrot.slane %v176, %v197
          %v199 = vmul.f32 %v175, %v198
          %v200 = vsel %vm181, %v199, 0.0
          %201 = vadd.xlane.f32.xlu0 %v200
          %v202 = vpop.xlane.xlu0 %201
          %v203 = vadd.f32 %v194, %v202
          %204 = vst.msk [vmem:[#allocation4] sm:$0x7] %vm186, %v203
          %v205 = vld [vmem:[#allocation4] sm:$0x7]
          %v206 = vlaneseq
          %v207 = vshrl.u32 %v206, 7
          %v208 = vsub.s32 1, %v207
          %v209 = vrot.slane %v176, %v208
          %v210 = vmul.f32 %v175, %v209
          %v211 = vsel %vm181, %v210, 0.0
          %212 = vadd.xlane.f32.xlu0 %v211
          %v213 = vpop.xlane.xlu0 %212
          %v214 = vadd.f32 %v205, %v213
          %vm215 = vcmask 10248
          %216 = vst.msk [vmem:[#allocation4] sm:$0x7] %vm215, %v214
          %v217 = vld [vmem:[#allocation4] sm:$0x7]
          %v218 = vlaneseq
          %v219 = vshrl.u32 %v218, 7
          %v220 = vsub.s32 2, %v219
          %v221 = vrot.slane %v176, %v220
          %v222 = vmul.f32 %v175, %v221
          %v223 = vsel %vm181, %v222, 0.0
          %224 = vadd.xlane.f32.xlu0 %v223
          %v225 = vpop.xlane.xlu0 %224
          %v226 = vadd.f32 %v217, %v225
          %vm227 = vcmask 18448
          %228 = vst.msk [vmem:[#allocation4] sm:$0x7] %vm227, %v226
        $region44: #{tpu_custom_call.1} parent=27 // pred_fallthru
          _
        %p229 = scmp.eq.s32.totalorder %s20, 1
        %p230 = pnand %p229, %p163
        %p231 = pneg %p230
        // Predicated region
        $region45: #{tpu_custom_call.1} parent=27 // pred_check
          _
        $region46: #{tpu_custom_call.1} parent=27 // pred_check_branch
          %233 = sbr.rel (%p230) target = $region48
        $region47: #{tpu_custom_call.1} parent=27 // pred_region
          %v234 = vld [vmem:[#allocation4] sm:$0x1]
          %v235 = vld [vmem:[#allocation2] sm:$0x1]
          %v236 = vld [vmem:[#allocation3] sm:$0x1]
          %v237 = vmul.f32 %v235, %v236
          %v238 = vmul.f32 %v237, 0.015625
          %v239 = vsub.f32 %v234, %v238
          %v240 = vld [vmem:[#allocation3 + $0x1] sm:$0x1]
          %v241 = vmul.f32 %v235, %v240
          %v242 = vmul.f32 %v241, 0.015625
          %244 = vrot.lane.b32.xlu0 %v242, 1
          %v245 = vpop.permute.xlu0 %244
          %v247 = vsub.f32 %v234, %v245
          %v248 = vld [vmem:[#allocation3 + $0x2] sm:$0x1]
          %v249 = vmul.f32 %v235, %v248
          %v250 = vmul.f32 %v249, 0.015625
          %252 = vrot.lane.b32.xlu0 %v250, 2
          %v253 = vpop.permute.xlu0 %252
          %v255 = vsub.f32 %v234, %v253
          %v256 = vld [vmem:[#allocation4 + $0x1] sm:$0x1]
          %v257 = vld [vmem:[#allocation2 + $0x1] sm:$0x1]
          %v258 = vmul.f32 %v257, %v236
          %v259 = vmul.f32 %v258, 0.015625
          %v260 = vsub.f32 %v256, %v259
          %v261 = vmul.f32 %v257, %v240
          %v262 = vmul.f32 %v261, 0.015625
          %264 = vrot.lane.b32.xlu0 %v262, 1
          %v265 = vpop.permute.xlu0 %264
          %v267 = vsub.f32 %v256, %v265
          %v268 = vmul.f32 %v257, %v248
          %v269 = vmul.f32 %v268, 0.015625
          %271 = vrot.lane.b32.xlu0 %v269, 2
          %v272 = vpop.permute.xlu0 %271
          %v274 = vsub.f32 %v256, %v272
          %v275 = vld [vmem:[#allocation4 + $0x2] sm:$0x1]
          %v276 = vld [vmem:[#allocation2 + $0x2] sm:$0x1]
          %v277 = vmul.f32 %v276, %v236
          %v278 = vmul.f32 %v277, 0.015625
          %v279 = vsub.f32 %v275, %v278
          %v280 = vmul.f32 %v276, %v240
          %v281 = vmul.f32 %v280, 0.015625
          %283 = vrot.lane.b32.xlu0 %v281, 1
          %v284 = vpop.permute.xlu0 %283
          %v286 = vsub.f32 %v275, %v284
          %v287 = vmul.f32 %v276, %v248
          %v288 = vmul.f32 %v287, 0.015625
          %290 = vrot.lane.b32.xlu0 %v288, 2
          %v291 = vpop.permute.xlu0 %290
          %v293 = vsub.f32 %v275, %v291
          %295 = vrot.lane.b32.xlu0 %v293, 127
          %v296 = vpop.permute.xlu0 %295
          %v298 = vmul.f32 %v267, %v296
          %300 = vrot.lane.b32.xlu0 %v286, 1
          %v301 = vpop.permute.xlu0 %300
          %v303 = vmul.f32 %v274, %v301
          %305 = vrot.lane.b32.xlu0 %v303, 127
          %v306 = vpop.permute.xlu0 %305
          %v308 = vsub.f32 %v298, %v306
          %310 = vrot.lane.b32.xlu0 %v308, 127
          %v311 = vpop.permute.xlu0 %310
          %v313 = vmul.f32 %v239, %v311
          %314 = vrot.lane.b32.xlu0 %v293, 126
          %v315 = vpop.permute.xlu0 %314
          %v317 = vmul.f32 %v260, %v315
          %319 = vrot.lane.b32.xlu0 %v279, 2
          %v320 = vpop.permute.xlu0 %319
          %v322 = vmul.f32 %v274, %v320
          %324 = vrot.lane.b32.xlu0 %v322, 126
          %v325 = vpop.permute.xlu0 %324
          %v327 = vsub.f32 %v317, %v325
          %329 = vrot.lane.b32.xlu0 %v327, 1
          %v330 = vpop.permute.xlu0 %329
          %v332 = vmul.f32 %v247, %v330
          %334 = vrot.lane.b32.xlu0 %v332, 127
          %v335 = vpop.permute.xlu0 %334
          %v337 = vsub.f32 %v313, %v335
          %338 = vrot.lane.b32.xlu0 %v286, 127
          %v339 = vpop.permute.xlu0 %338
          %v341 = vmul.f32 %v260, %v339
          %342 = vrot.lane.b32.xlu0 %v279, 1
          %v343 = vpop.permute.xlu0 %342
          %v345 = vmul.f32 %v267, %v343
          %347 = vrot.lane.b32.xlu0 %v345, 127
          %v348 = vpop.permute.xlu0 %347
          %v350 = vsub.f32 %v341, %v348
          %352 = vrot.lane.b32.xlu0 %v350, 2
          %v353 = vpop.permute.xlu0 %352
          %v355 = vmul.f32 %v255, %v353
          %357 = vrot.lane.b32.xlu0 %v355, 126
          %v358 = vpop.permute.xlu0 %357
          %v360 = vadd.f32 %v337, %v358
          %vm361 = vcmp.lt.f32.partialorder %v360, 0.0
          %v362 = vsel %vm361, -1.0, 1.0
          %364 = vrot.lane.b32.xlu0 %v317, 2
          %v365 = vpop.permute.xlu0 %364
          %v367 = vsub.f32 %v322, %v365
          %369 = vrot.lane.b32.xlu0 %v255, 127
          %v370 = vpop.permute.xlu0 %369
          %v372 = vmul.f32 %v286, %v370
          %374 = vrot.lane.b32.xlu0 %v247, 1
          %v375 = vpop.permute.xlu0 %374
          %v377 = vmul.f32 %v293, %v375
          %379 = vrot.lane.b32.xlu0 %v377, 127
          %v380 = vpop.permute.xlu0 %379
          %v382 = vsub.f32 %v372, %v380
          %384 = vrot.lane.b32.xlu0 %v239, 2
          %v385 = vpop.permute.xlu0 %384
          %v387 = vmul.f32 %v293, %v385
          %388 = vrot.lane.b32.xlu0 %v255, 126
          %v389 = vpop.permute.xlu0 %388
          %v391 = vmul.f32 %v279, %v389
          %393 = vrot.lane.b32.xlu0 %v391, 2
          %v394 = vpop.permute.xlu0 %393
          %v396 = vsub.f32 %v387, %v394
          %397 = vrot.lane.b32.xlu0 %v247, 127
          %v398 = vpop.permute.xlu0 %397
          %v400 = vmul.f32 %v279, %v398
          %401 = vrot.lane.b32.xlu0 %v239, 1
          %v402 = vpop.permute.xlu0 %401
          %v404 = vmul.f32 %v286, %v402
          %406 = vrot.lane.b32.xlu0 %v404, 127
          %v407 = vpop.permute.xlu0 %406
          %v409 = vsub.f32 %v400, %v407
          %411 = vrot.lane.b32.xlu0 %v274, 127
          %v412 = vpop.permute.xlu0 %411
          %v414 = vmul.f32 %v247, %v412
          %416 = vrot.lane.b32.xlu0 %v267, 1
          %v417 = vpop.permute.xlu0 %416
          %v419 = vmul.f32 %v255, %v417
          %421 = vrot.lane.b32.xlu0 %v419, 127
          %v422 = vpop.permute.xlu0 %421
          %v424 = vsub.f32 %v414, %v422
          %426 = vrot.lane.b32.xlu0 %v260, 2
          %v427 = vpop.permute.xlu0 %426
          %v429 = vmul.f32 %v255, %v427
          %430 = vrot.lane.b32.xlu0 %v274, 126
          %v431 = vpop.permute.xlu0 %430
          %v433 = vmul.f32 %v239, %v431
          %435 = vrot.lane.b32.xlu0 %v433, 2
          %v436 = vpop.permute.xlu0 %435
          %v438 = vsub.f32 %v429, %v436
          %439 = vrot.lane.b32.xlu0 %v267, 127
          %v440 = vpop.permute.xlu0 %439
          %v442 = vmul.f32 %v239, %v440
          %443 = vrot.lane.b32.xlu0 %v260, 1
          %v444 = vpop.permute.xlu0 %443
          %v446 = vmul.f32 %v247, %v444
          %448 = vrot.lane.b32.xlu0 %v446, 127
          %v449 = vpop.permute.xlu0 %448
          %v451 = vsub.f32 %v442, %v449
          %v452 = vand.u32 2147483647, %v360
          %v453 = vadd.f32 %v452, 1e-30
          %v454 = vlog2.pop %v453
          %v455 = vmul.f32 %v454, 0.6931472
          %v456 = vmul.f32 %v455, -0.33333334
          %v457 = vmul.f32 %v456, 1.442695
          %v458 = vpow.pop %v457
          %v459 = vsub.f32 %v360, 1e-30
          %v460 = vadd.f32 %v360, 1e-30
          %v461 = vsel %vm361, %v459, %v460
          %v462 = vmul.f32 %v458, %v461
          %v463 = vrcp.pop %v462
          %v464 = vmul.f32 1.0, %v463
          %v465 = vmul.f32 %v458, %v239
          %v466 = vmul.f32 %v464, %v311
          %v467 = vadd.f32 %v465, %v466
          %v468 = vmul.f32 %v467, 0.5
          %v469 = vmul.f32 %v458, %v398
          %471 = vrot.lane.b32.xlu0 %v367, 126
          %v472 = vpop.permute.xlu0 %471
          %v474 = vmul.f32 %v464, %v472
          %v475 = vadd.f32 %v469, %v474
          %v476 = vmul.f32 %v475, 0.5
          %v477 = vmul.f32 %v458, %v389
          %v478 = vmul.f32 %v464, %v350
          %v479 = vadd.f32 %v477, %v478
          %v480 = vmul.f32 %v479, 0.5
          %v481 = vmul.f32 %v458, %v260
          %483 = vrot.lane.b32.xlu0 %v382, 127
          %v484 = vpop.permute.xlu0 %483
          %v486 = vmul.f32 %v464, %v484
          %v487 = vadd.f32 %v481, %v486
          %v488 = vmul.f32 %v487, 0.5
          %v489 = vmul.f32 %v458, %v440
          %491 = vrot.lane.b32.xlu0 %v396, 126
          %v492 = vpop.permute.xlu0 %491
          %v494 = vmul.f32 %v464, %v492
          %v495 = vadd.f32 %v489, %v494
          %v496 = vmul.f32 %v495, 0.5
          %v497 = vmul.f32 %v458, %v431
          %v498 = vmul.f32 %v464, %v409
          %v499 = vadd.f32 %v497, %v498
          %v500 = vmul.f32 %v499, 0.5
          %v501 = vmul.f32 %v458, %v279
          %503 = vrot.lane.b32.xlu0 %v424, 127
          %v504 = vpop.permute.xlu0 %503
          %v506 = vmul.f32 %v464, %v504
          %v507 = vadd.f32 %v501, %v506
          %v508 = vmul.f32 %v507, 0.5
          %v509 = vmul.f32 %v458, %v339
          %511 = vrot.lane.b32.xlu0 %v438, 126
          %v512 = vpop.permute.xlu0 %511
          %v514 = vmul.f32 %v464, %v512
          %v515 = vadd.f32 %v509, %v514
          %v516 = vmul.f32 %v515, 0.5
          %v517 = vmul.f32 %v458, %v315
          %v518 = vmul.f32 %v464, %v451
          %v519 = vadd.f32 %v517, %v518
          %v520 = vmul.f32 %v519, 0.5
          %v521 = vmul.f32 %v496, %v520
          %v522 = vmul.f32 %v500, %v516
          %v523 = vsub.f32 %v521, %v522
          %v524 = vmul.f32 %v468, %v523
          %v525 = vmul.f32 %v488, %v520
          %v526 = vmul.f32 %v500, %v508
          %v527 = vsub.f32 %v525, %v526
          %v528 = vmul.f32 %v476, %v527
          %v529 = vsub.f32 %v524, %v528
          %v530 = vmul.f32 %v488, %v516
          %v531 = vmul.f32 %v496, %v508
          %v532 = vsub.f32 %v530, %v531
          %v533 = vmul.f32 %v480, %v532
          %v534 = vadd.f32 %v529, %v533
          %v535 = vsub.f32 %v526, %v525
          %v536 = vmul.f32 %v516, %v480
          %v537 = vmul.f32 %v520, %v476
          %v538 = vsub.f32 %v536, %v537
          %v539 = vmul.f32 %v520, %v468
          %v540 = vmul.f32 %v508, %v480
          %v541 = vsub.f32 %v539, %v540
          %v542 = vmul.f32 %v508, %v476
          %v543 = vmul.f32 %v516, %v468
          %v544 = vsub.f32 %v542, %v543
          %v545 = vmul.f32 %v476, %v500
          %v546 = vmul.f32 %v480, %v496
          %v547 = vsub.f32 %v545, %v546
          %v548 = vmul.f32 %v480, %v488
          %v549 = vmul.f32 %v468, %v500
          %v550 = vsub.f32 %v548, %v549
          %v551 = vmul.f32 %v468, %v496
          %v552 = vmul.f32 %v476, %v488
          %v553 = vsub.f32 %v551, %v552
          %v554 = vand.u32 2147483647, %v534
          %v555 = vadd.f32 %v554, 1e-30
          %v556 = vlog2.pop %v555
          %v557 = vmul.f32 %v556, 0.6931472
          %v558 = vmul.f32 %v557, -0.33333334
          %v559 = vmul.f32 %v558, 1.442695
          %v560 = vpow.pop %v559
          %vm561 = vcmp.lt.f32.partialorder %v534, 0.0
          %v562 = vsub.f32 %v534, 1e-30
          %v563 = vadd.f32 %v534, 1e-30
          %v564 = vsel %vm561, %v562, %v563
          %v565 = vmul.f32 %v560, %v564
          %v566 = vrcp.pop %v565
          %v567 = vmul.f32 1.0, %v566
          %v568 = vmul.f32 %v560, %v468
          %v569 = vmul.f32 %v567, %v523
          %v570 = vadd.f32 %v568, %v569
          %v571 = vmul.f32 %v570, 0.5
          %v572 = vmul.f32 %v560, %v476
          %v573 = vmul.f32 %v567, %v535
          %v574 = vadd.f32 %v572, %v573
          %v575 = vmul.f32 %v574, 0.5
          %v576 = vmul.f32 %v560, %v480
          %v577 = vmul.f32 %v567, %v532
          %v578 = vadd.f32 %v576, %v577
          %v579 = vmul.f32 %v578, 0.5
          %v580 = vmul.f32 %v560, %v488
          %v581 = vmul.f32 %v567, %v538
          %v582 = vadd.f32 %v580, %v581
          %v583 = vmul.f32 %v582, 0.5
          %v584 = vmul.f32 %v560, %v496
          %v585 = vmul.f32 %v567, %v541
          %v586 = vadd.f32 %v584, %v585
          %v587 = vmul.f32 %v586, 0.5
          %v588 = vmul.f32 %v560, %v500
          %v589 = vmul.f32 %v567, %v544
          %v590 = vadd.f32 %v588, %v589
          %v591 = vmul.f32 %v590, 0.5
          %v592 = vmul.f32 %v560, %v508
          %v593 = vmul.f32 %v567, %v547
          %v594 = vadd.f32 %v592, %v593
          %v595 = vmul.f32 %v594, 0.5
          %v596 = vmul.f32 %v560, %v516
          %v597 = vmul.f32 %v567, %v550
          %v598 = vadd.f32 %v596, %v597
          %v599 = vmul.f32 %v598, 0.5
          %v600 = vmul.f32 %v560, %v520
          %v601 = vmul.f32 %v567, %v553
          %v602 = vadd.f32 %v600, %v601
          %v603 = vmul.f32 %v602, 0.5
          %v604 = vmul.f32 %v587, %v603
          %v605 = vmul.f32 %v591, %v599
          %v606 = vsub.f32 %v604, %v605
          %v607 = vmul.f32 %v571, %v606
          %v608 = vmul.f32 %v583, %v603
          %v609 = vmul.f32 %v591, %v595
          %v610 = vsub.f32 %v608, %v609
          %v611 = vmul.f32 %v575, %v610
          %v612 = vsub.f32 %v607, %v611
          %v613 = vmul.f32 %v583, %v599
          %v614 = vmul.f32 %v587, %v595
          %v615 = vsub.f32 %v613, %v614
          %v616 = vmul.f32 %v579, %v615
          %v617 = vadd.f32 %v612, %v616
          %v618 = vsub.f32 %v609, %v608
          %v619 = vmul.f32 %v599, %v579
          %v620 = vmul.f32 %v603, %v575
          %v621 = vsub.f32 %v619, %v620
          %v622 = vmul.f32 %v603, %v571
          %v623 = vmul.f32 %v595, %v579
          %v624 = vsub.f32 %v622, %v623
          %v625 = vmul.f32 %v595, %v575
          %v626 = vmul.f32 %v599, %v571
          %v627 = vsub.f32 %v625, %v626
          %v628 = vmul.f32 %v575, %v591
          %v629 = vmul.f32 %v579, %v587
          %v630 = vsub.f32 %v628, %v629
          %v631 = vmul.f32 %v579, %v583
          %v632 = vmul.f32 %v571, %v591
          %v633 = vsub.f32 %v631, %v632
          %v634 = vmul.f32 %v571, %v587
          %v635 = vmul.f32 %v575, %v583
          %v636 = vsub.f32 %v634, %v635
          %v637 = vand.u32 2147483647, %v617
          %v638 = vadd.f32 %v637, 1e-30
          %v639 = vlog2.pop %v638
          %v640 = vmul.f32 %v639, 0.6931472
          %v641 = vmul.f32 %v640, -0.33333334
          %v642 = vmul.f32 %v641, 1.442695
          %v643 = vpow.pop %v642
          %vm644 = vcmp.lt.f32.partialorder %v617, 0.0
          %v645 = vsub.f32 %v617, 1e-30
          %v646 = vadd.f32 %v617, 1e-30
          %v647 = vsel %vm644, %v645, %v646
          %v648 = vmul.f32 %v643, %v647
          %v649 = vrcp.pop %v648
          %v650 = vmul.f32 1.0, %v649
          %v651 = vmul.f32 %v643, %v571
          %v652 = vmul.f32 %v650, %v606
          %v653 = vadd.f32 %v651, %v652
          %v654 = vmul.f32 %v653, 0.5
          %v655 = vmul.f32 %v643, %v575
          %v656 = vmul.f32 %v650, %v618
          %v657 = vadd.f32 %v655, %v656
          %v658 = vmul.f32 %v657, 0.5
          %v659 = vmul.f32 %v643, %v579
          %v660 = vmul.f32 %v650, %v615
          %v661 = vadd.f32 %v659, %v660
          %v662 = vmul.f32 %v661, 0.5
          %v663 = vmul.f32 %v643, %v583
          %v664 = vmul.f32 %v650, %v621
          %v665 = vadd.f32 %v663, %v664
          %v666 = vmul.f32 %v665, 0.5
          %v667 = vmul.f32 %v643, %v587
          %v668 = vmul.f32 %v650, %v624
          %v669 = vadd.f32 %v667, %v668
          %v670 = vmul.f32 %v669, 0.5
          %v671 = vmul.f32 %v643, %v591
          %v672 = vmul.f32 %v650, %v627
          %v673 = vadd.f32 %v671, %v672
          %v674 = vmul.f32 %v673, 0.5
          %v675 = vmul.f32 %v643, %v595
          %v676 = vmul.f32 %v650, %v630
          %v677 = vadd.f32 %v675, %v676
          %v678 = vmul.f32 %v677, 0.5
          %v679 = vmul.f32 %v643, %v599
          %v680 = vmul.f32 %v650, %v633
          %v681 = vadd.f32 %v679, %v680
          %v682 = vmul.f32 %v681, 0.5
          %v683 = vmul.f32 %v643, %v603
          %v684 = vmul.f32 %v650, %v636
          %v685 = vadd.f32 %v683, %v684
          %v686 = vmul.f32 %v685, 0.5
          %v687 = vmul.f32 %v670, %v686
          %v688 = vmul.f32 %v674, %v682
          %v689 = vsub.f32 %v687, %v688
          %v690 = vmul.f32 %v654, %v689
          %v691 = vmul.f32 %v666, %v686
          %v692 = vmul.f32 %v674, %v678
          %v693 = vsub.f32 %v691, %v692
          %v694 = vmul.f32 %v658, %v693
          %v695 = vsub.f32 %v690, %v694
          %v696 = vmul.f32 %v666, %v682
          %v697 = vmul.f32 %v670, %v678
          %v698 = vsub.f32 %v696, %v697
          %v699 = vmul.f32 %v662, %v698
          %v700 = vadd.f32 %v695, %v699
          %v701 = vsub.f32 %v692, %v691
          %v702 = vmul.f32 %v682, %v662
          %v703 = vmul.f32 %v686, %v658
          %v704 = vsub.f32 %v702, %v703
          %v705 = vmul.f32 %v686, %v654
          %v706 = vmul.f32 %v678, %v662
          %v707 = vsub.f32 %v705, %v706
          %v708 = vmul.f32 %v678, %v658
          %v709 = vmul.f32 %v682, %v654
          %v710 = vsub.f32 %v708, %v709
          %v711 = vmul.f32 %v658, %v674
          %v712 = vmul.f32 %v662, %v670
          %v713 = vsub.f32 %v711, %v712
          %v714 = vmul.f32 %v662, %v666
          %v715 = vmul.f32 %v654, %v674
          %v716 = vsub.f32 %v714, %v715
          %v717 = vmul.f32 %v654, %v670
          %v718 = vmul.f32 %v658, %v666
          %v719 = vsub.f32 %v717, %v718
          %v720 = vand.u32 2147483647, %v700
          %v721 = vadd.f32 %v720, 1e-30
          %v722 = vlog2.pop %v721
          %v723 = vmul.f32 %v722, 0.6931472
          %v724 = vmul.f32 %v723, -0.33333334
          %v725 = vmul.f32 %v724, 1.442695
          %v726 = vpow.pop %v725
          %vm727 = vcmp.lt.f32.partialorder %v700, 0.0
          %v728 = vsub.f32 %v700, 1e-30
          %v729 = vadd.f32 %v700, 1e-30
          %v730 = vsel %vm727, %v728, %v729
          %v731 = vmul.f32 %v726, %v730
          %v732 = vrcp.pop %v731
          %v733 = vmul.f32 1.0, %v732
          %v734 = vmul.f32 %v726, %v654
          %v735 = vmul.f32 %v733, %v689
          %v736 = vadd.f32 %v734, %v735
          %v737 = vmul.f32 %v736, 0.5
          %v738 = vmul.f32 %v726, %v658
          %v739 = vmul.f32 %v733, %v701
          %v740 = vadd.f32 %v738, %v739
          %v741 = vmul.f32 %v740, 0.5
          %v742 = vmul.f32 %v726, %v662
          %v743 = vmul.f32 %v733, %v698
          %v744 = vadd.f32 %v742, %v743
          %v745 = vmul.f32 %v744, 0.5
          %v746 = vmul.f32 %v726, %v666
          %v747 = vmul.f32 %v733, %v704
          %v748 = vadd.f32 %v746, %v747
          %v749 = vmul.f32 %v748, 0.5
          %v750 = vmul.f32 %v726, %v670
          %v751 = vmul.f32 %v733, %v707
          %v752 = vadd.f32 %v750, %v751
          %v753 = vmul.f32 %v752, 0.5
          %v754 = vmul.f32 %v726, %v674
          %v755 = vmul.f32 %v733, %v710
          %v756 = vadd.f32 %v754, %v755
          %v757 = vmul.f32 %v756, 0.5
          %v758 = vmul.f32 %v726, %v678
          %v759 = vmul.f32 %v733, %v713
          %v760 = vadd.f32 %v758, %v759
          %v761 = vmul.f32 %v760, 0.5
          %v762 = vmul.f32 %v726, %v682
          %v763 = vmul.f32 %v733, %v716
          %v764 = vadd.f32 %v762, %v763
          %v765 = vmul.f32 %v764, 0.5
          %v766 = vmul.f32 %v726, %v686
          %v767 = vmul.f32 %v733, %v719
          %v768 = vadd.f32 %v766, %v767
          %v769 = vmul.f32 %v768, 0.5
          %v770 = vmul.f32 %v753, %v769
          %v771 = vmul.f32 %v757, %v765
          %v772 = vsub.f32 %v770, %v771
          %v773 = vmul.f32 %v737, %v772
          %v774 = vmul.f32 %v749, %v769
          %v775 = vmul.f32 %v757, %v761
          %v776 = vsub.f32 %v774, %v775
          %v777 = vmul.f32 %v741, %v776
          %v778 = vsub.f32 %v773, %v777
          %v779 = vmul.f32 %v749, %v765
          %v780 = vmul.f32 %v753, %v761
          %v781 = vsub.f32 %v779, %v780
          %v782 = vmul.f32 %v745, %v781
          %v783 = vadd.f32 %v778, %v782
          %v784 = vsub.f32 %v775, %v774
          %v785 = vmul.f32 %v765, %v745
          %v786 = vmul.f32 %v769, %v741
          %v787 = vsub.f32 %v785, %v786
          %v788 = vmul.f32 %v769, %v737
          %v789 = vmul.f32 %v761, %v745
          %v790 = vsub.f32 %v788, %v789
          %v791 = vmul.f32 %v761, %v741
          %v792 = vmul.f32 %v765, %v737
          %v793 = vsub.f32 %v791, %v792
          %v794 = vmul.f32 %v741, %v757
          %v795 = vmul.f32 %v745, %v753
          %v796 = vsub.f32 %v794, %v795
          %v797 = vmul.f32 %v745, %v749
          %v798 = vmul.f32 %v737, %v757
          %v799 = vsub.f32 %v797, %v798
          %v800 = vmul.f32 %v737, %v753
          %v801 = vmul.f32 %v741, %v749
          %v802 = vsub.f32 %v800, %v801
          %v803 = vand.u32 2147483647, %v783
          %v804 = vadd.f32 %v803, 1e-30
          %v805 = vlog2.pop %v804
          %v806 = vmul.f32 %v805, 0.6931472
          %v807 = vmul.f32 %v806, -0.33333334
          %v808 = vmul.f32 %v807, 1.442695
          %v809 = vpow.pop %v808
          %vm810 = vcmp.lt.f32.partialorder %v783, 0.0
          %v811 = vsub.f32 %v783, 1e-30
          %v812 = vadd.f32 %v783, 1e-30
          %v813 = vsel %vm810, %v811, %v812
          %v814 = vmul.f32 %v809, %v813
          %v815 = vrcp.pop %v814
          %v816 = vmul.f32 1.0, %v815
          %v817 = vmul.f32 %v809, %v737
          %v818 = vmul.f32 %v816, %v772
          %v819 = vadd.f32 %v817, %v818
          %v820 = vmul.f32 %v819, 0.5
          %v821 = vmul.f32 %v809, %v741
          %v822 = vmul.f32 %v816, %v784
          %v823 = vadd.f32 %v821, %v822
          %v824 = vmul.f32 %v823, 0.5
          %v825 = vmul.f32 %v809, %v745
          %v826 = vmul.f32 %v816, %v781
          %v827 = vadd.f32 %v825, %v826
          %v828 = vmul.f32 %v827, 0.5
          %v829 = vmul.f32 %v809, %v749
          %v830 = vmul.f32 %v816, %v787
          %v831 = vadd.f32 %v829, %v830
          %v832 = vmul.f32 %v831, 0.5
          %v833 = vmul.f32 %v809, %v753
          %v834 = vmul.f32 %v816, %v790
          %v835 = vadd.f32 %v833, %v834
          %v836 = vmul.f32 %v835, 0.5
          %v837 = vmul.f32 %v809, %v757
          %v838 = vmul.f32 %v816, %v793
          %v839 = vadd.f32 %v837, %v838
          %v840 = vmul.f32 %v839, 0.5
          %v841 = vmul.f32 %v809, %v761
          %v842 = vmul.f32 %v816, %v796
          %v843 = vadd.f32 %v841, %v842
          %v844 = vmul.f32 %v843, 0.5
          %v845 = vmul.f32 %v809, %v765
          %v846 = vmul.f32 %v816, %v799
          %v847 = vadd.f32 %v845, %v846
          %v848 = vmul.f32 %v847, 0.5
          %v849 = vmul.f32 %v809, %v769
          %v850 = vmul.f32 %v816, %v802
          %v851 = vadd.f32 %v849, %v850
          %v852 = vmul.f32 %v851, 0.5
          %v853 = vmul.f32 %v836, %v852
          %v854 = vmul.f32 %v840, %v848
          %v855 = vsub.f32 %v853, %v854
          %v856 = vmul.f32 %v820, %v855
          %v857 = vmul.f32 %v832, %v852
          %v858 = vmul.f32 %v840, %v844
          %v859 = vsub.f32 %v857, %v858
          %v860 = vmul.f32 %v824, %v859
          %v861 = vsub.f32 %v856, %v860
          %v862 = vmul.f32 %v832, %v848
          %v863 = vmul.f32 %v836, %v844
          %v864 = vsub.f32 %v862, %v863
          %v865 = vmul.f32 %v828, %v864
          %v866 = vadd.f32 %v861, %v865
          %v867 = vsub.f32 %v858, %v857
          %v868 = vmul.f32 %v848, %v828
          %v869 = vmul.f32 %v852, %v824
          %v870 = vsub.f32 %v868, %v869
          %v871 = vmul.f32 %v852, %v820
          %v872 = vmul.f32 %v844, %v828
          %v873 = vsub.f32 %v871, %v872
          %v874 = vmul.f32 %v844, %v824
          %v875 = vmul.f32 %v848, %v820
          %v876 = vsub.f32 %v874, %v875
          %v877 = vmul.f32 %v824, %v840
          %v878 = vmul.f32 %v828, %v836
          %v879 = vsub.f32 %v877, %v878
          %v880 = vmul.f32 %v828, %v832
          %v881 = vmul.f32 %v820, %v840
          %v882 = vsub.f32 %v880, %v881
          %v883 = vmul.f32 %v820, %v836
          %v884 = vmul.f32 %v824, %v832
          %v885 = vsub.f32 %v883, %v884
          %v886 = vand.u32 2147483647, %v866
          %v887 = vadd.f32 %v886, 1e-30
          %v888 = vlog2.pop %v887
          %v889 = vmul.f32 %v888, 0.6931472
          %v890 = vmul.f32 %v889, -0.33333334
          %v891 = vmul.f32 %v890, 1.442695
          %v892 = vpow.pop %v891
          %vm893 = vcmp.lt.f32.partialorder %v866, 0.0
          %v894 = vsub.f32 %v866, 1e-30
          %v895 = vadd.f32 %v866, 1e-30
          %v896 = vsel %vm893, %v894, %v895
          %v897 = vmul.f32 %v892, %v896
          %v898 = vrcp.pop %v897
          %v899 = vmul.f32 1.0, %v898
          %v900 = vmul.f32 %v892, %v820
          %v901 = vmul.f32 %v899, %v855
          %v902 = vadd.f32 %v900, %v901
          %v903 = vmul.f32 %v902, 0.5
          %v904 = vmul.f32 %v892, %v824
          %v905 = vmul.f32 %v899, %v867
          %v906 = vadd.f32 %v904, %v905
          %v907 = vmul.f32 %v906, 0.5
          %v908 = vmul.f32 %v892, %v828
          %v909 = vmul.f32 %v899, %v864
          %v910 = vadd.f32 %v908, %v909
          %v911 = vmul.f32 %v910, 0.5
          %v912 = vmul.f32 %v892, %v832
          %v913 = vmul.f32 %v899, %v870
          %v914 = vadd.f32 %v912, %v913
          %v915 = vmul.f32 %v914, 0.5
          %v916 = vmul.f32 %v892, %v836
          %v917 = vmul.f32 %v899, %v873
          %v918 = vadd.f32 %v916, %v917
          %v919 = vmul.f32 %v918, 0.5
          %v920 = vmul.f32 %v892, %v840
          %v921 = vmul.f32 %v899, %v876
          %v922 = vadd.f32 %v920, %v921
          %v923 = vmul.f32 %v922, 0.5
          %v924 = vmul.f32 %v892, %v844
          %v925 = vmul.f32 %v899, %v879
          %v926 = vadd.f32 %v924, %v925
          %v927 = vmul.f32 %v926, 0.5
          %v928 = vmul.f32 %v892, %v848
          %v929 = vmul.f32 %v899, %v882
          %v930 = vadd.f32 %v928, %v929
          %v931 = vmul.f32 %v930, 0.5
          %v932 = vmul.f32 %v892, %v852
          %v933 = vmul.f32 %v899, %v885
          %v934 = vadd.f32 %v932, %v933
          %v935 = vmul.f32 %v934, 0.5
          %v936 = vmul.f32 %v919, %v935
          %v937 = vmul.f32 %v923, %v931
          %v938 = vsub.f32 %v936, %v937
          %v939 = vmul.f32 %v903, %v938
          %v940 = vmul.f32 %v915, %v935
          %v941 = vmul.f32 %v923, %v927
          %v942 = vsub.f32 %v940, %v941
          %v943 = vmul.f32 %v907, %v942
          %v944 = vsub.f32 %v939, %v943
          %v945 = vmul.f32 %v915, %v931
          %v946 = vmul.f32 %v919, %v927
          %v947 = vsub.f32 %v945, %v946
          %v948 = vmul.f32 %v911, %v947
          %v949 = vadd.f32 %v944, %v948
          %v950 = vsub.f32 %v941, %v940
          %v951 = vmul.f32 %v931, %v911
          %v952 = vmul.f32 %v935, %v907
          %v953 = vsub.f32 %v951, %v952
          %v954 = vmul.f32 %v935, %v903
          %v955 = vmul.f32 %v927, %v911
          %v956 = vsub.f32 %v954, %v955
          %v957 = vmul.f32 %v927, %v907
          %v958 = vmul.f32 %v931, %v903
          %v959 = vsub.f32 %v957, %v958
          %v960 = vmul.f32 %v907, %v923
          %v961 = vmul.f32 %v911, %v919
          %v962 = vsub.f32 %v960, %v961
          %v963 = vmul.f32 %v911, %v915
          %v964 = vmul.f32 %v903, %v923
          %v965 = vsub.f32 %v963, %v964
          %v966 = vmul.f32 %v903, %v919
          %v967 = vmul.f32 %v907, %v915
          %v968 = vsub.f32 %v966, %v967
          %v969 = vand.u32 2147483647, %v949
          %v970 = vadd.f32 %v969, 1e-30
          %v971 = vlog2.pop %v970
          %v972 = vmul.f32 %v971, 0.6931472
          %v973 = vmul.f32 %v972, -0.33333334
          %v974 = vmul.f32 %v973, 1.442695
          %v975 = vpow.pop %v974
          %vm976 = vcmp.lt.f32.partialorder %v949, 0.0
          %v977 = vsub.f32 %v949, 1e-30
          %v978 = vadd.f32 %v949, 1e-30
          %v979 = vsel %vm976, %v977, %v978
          %v980 = vmul.f32 %v975, %v979
          %v981 = vrcp.pop %v980
          %v982 = vmul.f32 1.0, %v981
          %v983 = vmul.f32 %v975, %v903
          %v984 = vmul.f32 %v982, %v938
          %v985 = vadd.f32 %v983, %v984
          %v986 = vmul.f32 %v985, 0.5
          %v987 = vmul.f32 %v975, %v907
          %v988 = vmul.f32 %v982, %v950
          %v989 = vadd.f32 %v987, %v988
          %v990 = vmul.f32 %v989, 0.5
          %v991 = vmul.f32 %v975, %v911
          %v992 = vmul.f32 %v982, %v947
          %v993 = vadd.f32 %v991, %v992
          %v994 = vmul.f32 %v993, 0.5
          %v995 = vmul.f32 %v975, %v915
          %v996 = vmul.f32 %v982, %v953
          %v997 = vadd.f32 %v995, %v996
          %v998 = vmul.f32 %v997, 0.5
          %v999 = vmul.f32 %v975, %v919
          %v1000 = vmul.f32 %v982, %v956
          %v1001 = vadd.f32 %v999, %v1000
          %v1002 = vmul.f32 %v1001, 0.5
          %v1003 = vmul.f32 %v975, %v923
          %v1004 = vmul.f32 %v982, %v959
          %v1005 = vadd.f32 %v1003, %v1004
          %v1006 = vmul.f32 %v1005, 0.5
          %v1007 = vmul.f32 %v975, %v927
          %v1008 = vmul.f32 %v982, %v962
          %v1009 = vadd.f32 %v1007, %v1008
          %v1010 = vmul.f32 %v1009, 0.5
          %v1011 = vmul.f32 %v975, %v931
          %v1012 = vmul.f32 %v982, %v965
          %v1013 = vadd.f32 %v1011, %v1012
          %v1014 = vmul.f32 %v1013, 0.5
          %v1015 = vmul.f32 %v975, %v935
          %v1016 = vmul.f32 %v982, %v968
          %v1017 = vadd.f32 %v1015, %v1016
          %v1018 = vmul.f32 %v1017, 0.5
          %v1019 = vmul.f32 %v1002, %v1018
          %v1020 = vmul.f32 %v1006, %v1014
          %v1021 = vsub.f32 %v1019, %v1020
          %v1022 = vmul.f32 %v986, %v1021
          %v1023 = vmul.f32 %v998, %v1018
          %v1024 = vmul.f32 %v1006, %v1010
          %v1025 = vsub.f32 %v1023, %v1024
          %v1026 = vmul.f32 %v990, %v1025
          %v1027 = vsub.f32 %v1022, %v1026
          %v1028 = vmul.f32 %v998, %v1014
          %v1029 = vmul.f32 %v1002, %v1010
          %v1030 = vsub.f32 %v1028, %v1029
          %v1031 = vmul.f32 %v994, %v1030
          %v1032 = vadd.f32 %v1027, %v1031
          %v1033 = vsub.f32 %v1024, %v1023
          %v1034 = vmul.f32 %v1014, %v994
          %v1035 = vmul.f32 %v1018, %v990
          %v1036 = vsub.f32 %v1034, %v1035
          %v1037 = vmul.f32 %v1018, %v986
          %v1038 = vmul.f32 %v1010, %v994
          %v1039 = vsub.f32 %v1037, %v1038
          %v1040 = vmul.f32 %v1010, %v990
          %v1041 = vmul.f32 %v1014, %v986
          %v1042 = vsub.f32 %v1040, %v1041
          %v1043 = vmul.f32 %v990, %v1006
          %v1044 = vmul.f32 %v994, %v1002
          %v1045 = vsub.f32 %v1043, %v1044
          %v1046 = vmul.f32 %v994, %v998
          %v1047 = vmul.f32 %v986, %v1006
          %v1048 = vsub.f32 %v1046, %v1047
          %v1049 = vmul.f32 %v986, %v1002
          %v1050 = vmul.f32 %v990, %v998
          %v1051 = vsub.f32 %v1049, %v1050
          %v1052 = vand.u32 2147483647, %v1032
          %v1053 = vadd.f32 %v1052, 1e-30
          %v1054 = vlog2.pop %v1053
          %v1055 = vmul.f32 %v1054, 0.6931472
          %v1056 = vmul.f32 %v1055, -0.33333334
          %v1057 = vmul.f32 %v1056, 1.442695
          %v1058 = vpow.pop %v1057
          %vm1059 = vcmp.lt.f32.partialorder %v1032, 0.0
          %v1060 = vsub.f32 %v1032, 1e-30
          %v1061 = vadd.f32 %v1032, 1e-30
          %v1062 = vsel %vm1059, %v1060, %v1061
          %v1063 = vmul.f32 %v1058, %v1062
          %v1064 = vrcp.pop %v1063
          %v1065 = vmul.f32 1.0, %v1064
          %v1066 = vmul.f32 %v1058, %v986
          %v1067 = vmul.f32 %v1065, %v1021
          %v1068 = vadd.f32 %v1066, %v1067
          %v1069 = vmul.f32 %v1068, 0.5
          %v1070 = vmul.f32 %v1058, %v990
          %v1071 = vmul.f32 %v1065, %v1033
          %v1072 = vadd.f32 %v1070, %v1071
          %v1073 = vmul.f32 %v1072, 0.5
          %v1074 = vmul.f32 %v1058, %v994
          %v1075 = vmul.f32 %v1065, %v1030
          %v1076 = vadd.f32 %v1074, %v1075
          %v1077 = vmul.f32 %v1076, 0.5
          %v1078 = vmul.f32 %v1058, %v998
          %v1079 = vmul.f32 %v1065, %v1036
          %v1080 = vadd.f32 %v1078, %v1079
          %v1081 = vmul.f32 %v1080, 0.5
          %v1082 = vmul.f32 %v1058, %v1002
          %v1083 = vmul.f32 %v1065, %v1039
          %v1084 = vadd.f32 %v1082, %v1083
          %v1085 = vmul.f32 %v1084, 0.5
          %v1086 = vmul.f32 %v1058, %v1006
          %v1087 = vmul.f32 %v1065, %v1042
          %v1088 = vadd.f32 %v1086, %v1087
          %v1089 = vmul.f32 %v1088, 0.5
          %v1090 = vmul.f32 %v1058, %v1010
          %v1091 = vmul.f32 %v1065, %v1045
          %v1092 = vadd.f32 %v1090, %v1091
          %v1093 = vmul.f32 %v1092, 0.5
          %v1094 = vmul.f32 %v1058, %v1014
          %v1095 = vmul.f32 %v1065, %v1048
          %v1096 = vadd.f32 %v1094, %v1095
          %v1097 = vmul.f32 %v1096, 0.5
          %v1098 = vmul.f32 %v1058, %v1018
          %v1099 = vmul.f32 %v1065, %v1051
          %v1100 = vadd.f32 %v1098, %v1099
          %v1101 = vmul.f32 %v1100, 0.5
          %v1102 = vmul.f32 %v1085, %v1101
          %v1103 = vmul.f32 %v1089, %v1097
          %v1104 = vsub.f32 %v1102, %v1103
          %v1105 = vmul.f32 %v1069, %v1104
          %v1106 = vmul.f32 %v1081, %v1101
          %v1107 = vmul.f32 %v1089, %v1093
          %v1108 = vsub.f32 %v1106, %v1107
          %v1109 = vmul.f32 %v1073, %v1108
          %v1110 = vsub.f32 %v1105, %v1109
          %v1111 = vmul.f32 %v1081, %v1097
          %v1112 = vmul.f32 %v1085, %v1093
          %v1113 = vsub.f32 %v1111, %v1112
          %v1114 = vmul.f32 %v1077, %v1113
          %v1115 = vadd.f32 %v1110, %v1114
          %v1116 = vsub.f32 %v1107, %v1106
          %v1117 = vmul.f32 %v1097, %v1077
          %v1118 = vmul.f32 %v1101, %v1073
          %v1119 = vsub.f32 %v1117, %v1118
          %v1120 = vmul.f32 %v1101, %v1069
          %v1121 = vmul.f32 %v1093, %v1077
          %v1122 = vsub.f32 %v1120, %v1121
          %v1123 = vmul.f32 %v1093, %v1073
          %v1124 = vmul.f32 %v1097, %v1069
          %v1125 = vsub.f32 %v1123, %v1124
          %v1126 = vmul.f32 %v1073, %v1089
          %v1127 = vmul.f32 %v1077, %v1085
          %v1128 = vsub.f32 %v1126, %v1127
          %v1129 = vmul.f32 %v1077, %v1081
          %v1130 = vmul.f32 %v1069, %v1089
          %v1131 = vsub.f32 %v1129, %v1130
          %v1132 = vmul.f32 %v1069, %v1085
          %v1133 = vmul.f32 %v1073, %v1081
          %v1134 = vsub.f32 %v1132, %v1133
          %v1135 = vand.u32 2147483647, %v1115
          %v1136 = vadd.f32 %v1135, 1e-30
          %v1137 = vlog2.pop %v1136
          %v1138 = vmul.f32 %v1137, 0.6931472
          %v1139 = vmul.f32 %v1138, -0.33333334
          %v1140 = vmul.f32 %v1139, 1.442695
          %v1141 = vpow.pop %v1140
          %vm1142 = vcmp.lt.f32.partialorder %v1115, 0.0
          %v1143 = vsub.f32 %v1115, 1e-30
          %v1144 = vadd.f32 %v1115, 1e-30
          %v1145 = vsel %vm1142, %v1143, %v1144
          %v1146 = vmul.f32 %v1141, %v1145
          %v1147 = vrcp.pop %v1146
          %v1148 = vmul.f32 1.0, %v1147
          %v1149 = vmul.f32 %v1141, %v1069
          %v1150 = vmul.f32 %v1148, %v1104
          %v1151 = vadd.f32 %v1149, %v1150
          %v1152 = vmul.f32 %v1151, 0.5
          %v1153 = vmul.f32 %v1141, %v1073
          %v1154 = vmul.f32 %v1148, %v1116
          %v1155 = vadd.f32 %v1153, %v1154
          %v1156 = vmul.f32 %v1155, 0.5
          %v1157 = vmul.f32 %v1141, %v1077
          %v1158 = vmul.f32 %v1148, %v1113
          %v1159 = vadd.f32 %v1157, %v1158
          %v1160 = vmul.f32 %v1159, 0.5
          %v1161 = vmul.f32 %v1141, %v1081
          %v1162 = vmul.f32 %v1148, %v1119
          %v1163 = vadd.f32 %v1161, %v1162
          %v1164 = vmul.f32 %v1163, 0.5
          %v1165 = vmul.f32 %v1141, %v1085
          %v1166 = vmul.f32 %v1148, %v1122
          %v1167 = vadd.f32 %v1165, %v1166
          %v1168 = vmul.f32 %v1167, 0.5
          %v1169 = vmul.f32 %v1141, %v1089
          %v1170 = vmul.f32 %v1148, %v1125
          %v1171 = vadd.f32 %v1169, %v1170
          %v1172 = vmul.f32 %v1171, 0.5
          %v1173 = vmul.f32 %v1141, %v1093
          %v1174 = vmul.f32 %v1148, %v1128
          %v1175 = vadd.f32 %v1173, %v1174
          %v1176 = vmul.f32 %v1175, 0.5
          %v1177 = vmul.f32 %v1141, %v1097
          %v1178 = vmul.f32 %v1148, %v1131
          %v1179 = vadd.f32 %v1177, %v1178
          %v1180 = vmul.f32 %v1179, 0.5
          %v1181 = vmul.f32 %v1141, %v1101
          %v1182 = vmul.f32 %v1148, %v1134
          %v1183 = vadd.f32 %v1181, %v1182
          %v1184 = vmul.f32 %v1183, 0.5
          %v1185 = vmul.f32 %v1168, %v1184
          %v1186 = vmul.f32 %v1172, %v1180
          %v1187 = vsub.f32 %v1185, %v1186
          %v1188 = vmul.f32 %v1152, %v1187
          %v1189 = vmul.f32 %v1164, %v1184
          %v1190 = vmul.f32 %v1172, %v1176
          %v1191 = vsub.f32 %v1189, %v1190
          %v1192 = vmul.f32 %v1156, %v1191
          %v1193 = vsub.f32 %v1188, %v1192
          %v1194 = vmul.f32 %v1164, %v1180
          %v1195 = vmul.f32 %v1168, %v1176
          %v1196 = vsub.f32 %v1194, %v1195
          %v1197 = vmul.f32 %v1160, %v1196
          %v1198 = vadd.f32 %v1193, %v1197
          %v1199 = vsub.f32 %v1190, %v1189
          %v1200 = vmul.f32 %v1180, %v1160
          %v1201 = vmul.f32 %v1184, %v1156
          %v1202 = vsub.f32 %v1200, %v1201
          %v1203 = vmul.f32 %v1184, %v1152
          %v1204 = vmul.f32 %v1176, %v1160
          %v1205 = vsub.f32 %v1203, %v1204
          %v1206 = vmul.f32 %v1176, %v1156
          %v1207 = vmul.f32 %v1180, %v1152
          %v1208 = vsub.f32 %v1206, %v1207
          %v1209 = vmul.f32 %v1156, %v1172
          %v1210 = vmul.f32 %v1160, %v1168
          %v1211 = vsub.f32 %v1209, %v1210
          %v1212 = vmul.f32 %v1160, %v1164
          %v1213 = vmul.f32 %v1152, %v1172
          %v1214 = vsub.f32 %v1212, %v1213
          %v1215 = vmul.f32 %v1152, %v1168
          %v1216 = vmul.f32 %v1156, %v1164
          %v1217 = vsub.f32 %v1215, %v1216
          %v1218 = vand.u32 2147483647, %v1198
          %v1219 = vadd.f32 %v1218, 1e-30
          %v1220 = vlog2.pop %v1219
          %v1221 = vmul.f32 %v1220, 0.6931472
          %v1222 = vmul.f32 %v1221, -0.33333334
          %v1223 = vmul.f32 %v1222, 1.442695
          %v1224 = vpow.pop %v1223
          %vm1225 = vcmp.lt.f32.partialorder %v1198, 0.0
          %v1226 = vsub.f32 %v1198, 1e-30
          %v1227 = vadd.f32 %v1198, 1e-30
          %v1228 = vsel %vm1225, %v1226, %v1227
          %v1229 = vmul.f32 %v1224, %v1228
          %v1230 = vrcp.pop %v1229
          %v1231 = vmul.f32 1.0, %v1230
          %v1232 = vmul.f32 %v1224, %v1152
          %v1233 = vmul.f32 %v1231, %v1187
          %v1234 = vadd.f32 %v1232, %v1233
          %v1235 = vmul.f32 %v1234, 0.5
          %v1236 = vmul.f32 %v1224, %v1156
          %v1237 = vmul.f32 %v1231, %v1199
          %v1238 = vadd.f32 %v1236, %v1237
          %v1239 = vmul.f32 %v1238, 0.5
          %v1240 = vmul.f32 %v1224, %v1160
          %v1241 = vmul.f32 %v1231, %v1196
          %v1242 = vadd.f32 %v1240, %v1241
          %v1243 = vmul.f32 %v1242, 0.5
          %v1244 = vmul.f32 %v1224, %v1164
          %v1245 = vmul.f32 %v1231, %v1202
          %v1246 = vadd.f32 %v1244, %v1245
          %v1247 = vmul.f32 %v1246, 0.5
          %v1248 = vmul.f32 %v1224, %v1168
          %v1249 = vmul.f32 %v1231, %v1205
          %v1250 = vadd.f32 %v1248, %v1249
          %v1251 = vmul.f32 %v1250, 0.5
          %v1252 = vmul.f32 %v1224, %v1172
          %v1253 = vmul.f32 %v1231, %v1208
          %v1254 = vadd.f32 %v1252, %v1253
          %v1255 = vmul.f32 %v1254, 0.5
          %v1256 = vmul.f32 %v1224, %v1176
          %v1257 = vmul.f32 %v1231, %v1211
          %v1258 = vadd.f32 %v1256, %v1257
          %v1259 = vmul.f32 %v1258, 0.5
          %v1260 = vmul.f32 %v1224, %v1180
          %v1261 = vmul.f32 %v1231, %v1214
          %v1262 = vadd.f32 %v1260, %v1261
          %v1263 = vmul.f32 %v1262, 0.5
          %v1264 = vmul.f32 %v1224, %v1184
          %v1265 = vmul.f32 %v1231, %v1217
          %v1266 = vadd.f32 %v1264, %v1265
          %v1267 = vmul.f32 %v1266, 0.5
          %v1268 = vmul.f32 %v1251, %v1267
          %v1269 = vmul.f32 %v1255, %v1263
          %v1270 = vsub.f32 %v1268, %v1269
          %v1271 = vmul.f32 %v1235, %v1270
          %v1272 = vmul.f32 %v1247, %v1267
          %v1273 = vmul.f32 %v1255, %v1259
          %v1274 = vsub.f32 %v1272, %v1273
          %v1275 = vmul.f32 %v1239, %v1274
          %v1276 = vsub.f32 %v1271, %v1275
          %v1277 = vmul.f32 %v1247, %v1263
          %v1278 = vmul.f32 %v1251, %v1259
          %v1279 = vsub.f32 %v1277, %v1278
          %v1280 = vmul.f32 %v1243, %v1279
          %v1281 = vadd.f32 %v1276, %v1280
          %v1282 = vsub.f32 %v1273, %v1272
          %v1283 = vmul.f32 %v1263, %v1243
          %v1284 = vmul.f32 %v1267, %v1239
          %v1285 = vsub.f32 %v1283, %v1284
          %v1286 = vmul.f32 %v1267, %v1235
          %v1287 = vmul.f32 %v1259, %v1243
          %v1288 = vsub.f32 %v1286, %v1287
          %v1289 = vmul.f32 %v1259, %v1239
          %v1290 = vmul.f32 %v1263, %v1235
          %v1291 = vsub.f32 %v1289, %v1290
          %v1292 = vmul.f32 %v1239, %v1255
          %v1293 = vmul.f32 %v1243, %v1251
          %v1294 = vsub.f32 %v1292, %v1293
          %v1295 = vmul.f32 %v1243, %v1247
          %v1296 = vmul.f32 %v1235, %v1255
          %v1297 = vsub.f32 %v1295, %v1296
          %v1298 = vmul.f32 %v1235, %v1251
          %v1299 = vmul.f32 %v1239, %v1247
          %v1300 = vsub.f32 %v1298, %v1299
          %v1301 = vand.u32 2147483647, %v1281
          %v1302 = vadd.f32 %v1301, 1e-30
          %v1303 = vlog2.pop %v1302
          %v1304 = vmul.f32 %v1303, 0.6931472
          %v1305 = vmul.f32 %v1304, -0.33333334
          %v1306 = vmul.f32 %v1305, 1.442695
          %v1307 = vpow.pop %v1306
          %vm1308 = vcmp.lt.f32.partialorder %v1281, 0.0
          %v1309 = vsub.f32 %v1281, 1e-30
          %v1310 = vadd.f32 %v1281, 1e-30
          %v1311 = vsel %vm1308, %v1309, %v1310
          %v1312 = vmul.f32 %v1307, %v1311
          %v1313 = vrcp.pop %v1312
          %v1314 = vmul.f32 1.0, %v1313
          %v1315 = vmul.f32 %v1307, %v1235
          %v1316 = vmul.f32 %v1314, %v1270
          %v1317 = vadd.f32 %v1315, %v1316
          %v1318 = vmul.f32 %v1317, 0.5
          %v1319 = vmul.f32 %v1307, %v1239
          %v1320 = vmul.f32 %v1314, %v1282
          %v1321 = vadd.f32 %v1319, %v1320
          %v1322 = vmul.f32 %v1321, 0.5
          %v1323 = vmul.f32 %v1307, %v1243
          %v1324 = vmul.f32 %v1314, %v1279
          %v1325 = vadd.f32 %v1323, %v1324
          %v1326 = vmul.f32 %v1325, 0.5
          %v1327 = vmul.f32 %v1307, %v1247
          %v1328 = vmul.f32 %v1314, %v1285
          %v1329 = vadd.f32 %v1327, %v1328
          %v1330 = vmul.f32 %v1329, 0.5
          %v1331 = vmul.f32 %v1307, %v1251
          %v1332 = vmul.f32 %v1314, %v1288
          %v1333 = vadd.f32 %v1331, %v1332
          %v1334 = vmul.f32 %v1333, 0.5
          %v1335 = vmul.f32 %v1307, %v1255
          %v1336 = vmul.f32 %v1314, %v1291
          %v1337 = vadd.f32 %v1335, %v1336
          %v1338 = vmul.f32 %v1337, 0.5
          %v1339 = vmul.f32 %v1307, %v1259
          %v1340 = vmul.f32 %v1314, %v1294
          %v1341 = vadd.f32 %v1339, %v1340
          %v1342 = vmul.f32 %v1341, 0.5
          %v1343 = vmul.f32 %v1307, %v1263
          %v1344 = vmul.f32 %v1314, %v1297
          %v1345 = vadd.f32 %v1343, %v1344
          %v1346 = vmul.f32 %v1345, 0.5
          %v1347 = vmul.f32 %v1307, %v1267
          %v1348 = vmul.f32 %v1314, %v1300
          %v1349 = vadd.f32 %v1347, %v1348
          %v1350 = vmul.f32 %v1349, 0.5
          %v1351 = vmul.f32 %v1334, %v1350
          %v1352 = vmul.f32 %v1338, %v1346
          %v1353 = vsub.f32 %v1351, %v1352
          %v1354 = vmul.f32 %v1318, %v1353
          %v1355 = vmul.f32 %v1330, %v1350
          %v1356 = vmul.f32 %v1338, %v1342
          %v1357 = vsub.f32 %v1355, %v1356
          %v1358 = vmul.f32 %v1322, %v1357
          %v1359 = vsub.f32 %v1354, %v1358
          %v1360 = vmul.f32 %v1330, %v1346
          %v1361 = vmul.f32 %v1334, %v1342
          %v1362 = vsub.f32 %v1360, %v1361
          %v1363 = vmul.f32 %v1326, %v1362
          %v1364 = vadd.f32 %v1359, %v1363
          %v1365 = vsub.f32 %v1356, %v1355
          %v1366 = vmul.f32 %v1346, %v1326
          %v1367 = vmul.f32 %v1350, %v1322
          %v1368 = vsub.f32 %v1366, %v1367
          %v1369 = vmul.f32 %v1350, %v1318
          %v1370 = vmul.f32 %v1342, %v1326
          %v1371 = vsub.f32 %v1369, %v1370
          %v1372 = vmul.f32 %v1342, %v1322
          %v1373 = vmul.f32 %v1346, %v1318
          %v1374 = vsub.f32 %v1372, %v1373
          %v1375 = vmul.f32 %v1322, %v1338
          %v1376 = vmul.f32 %v1326, %v1334
          %v1377 = vsub.f32 %v1375, %v1376
          %v1378 = vmul.f32 %v1326, %v1330
          %v1379 = vmul.f32 %v1318, %v1338
          %v1380 = vsub.f32 %v1378, %v1379
          %v1381 = vmul.f32 %v1318, %v1334
          %v1382 = vmul.f32 %v1322, %v1330
          %v1383 = vsub.f32 %v1381, %v1382
          %v1384 = vand.u32 2147483647, %v1364
          %v1385 = vadd.f32 %v1384, 1e-30
          %v1386 = vlog2.pop %v1385
          %v1387 = vmul.f32 %v1386, 0.6931472
          %v1388 = vmul.f32 %v1387, -0.33333334
          %v1389 = vmul.f32 %v1388, 1.442695
          %v1390 = vpow.pop %v1389
          %vm1391 = vcmp.lt.f32.partialorder %v1364, 0.0
          %v1392 = vsub.f32 %v1364, 1e-30
          %v1393 = vadd.f32 %v1364, 1e-30
          %v1394 = vsel %vm1391, %v1392, %v1393
          %v1395 = vmul.f32 %v1390, %v1394
          %v1396 = vrcp.pop %v1395
          %v1397 = vmul.f32 1.0, %v1396
          %v1398 = vmul.f32 %v1390, %v1318
          %v1399 = vmul.f32 %v1397, %v1353
          %v1400 = vadd.f32 %v1398, %v1399
          %v1401 = vmul.f32 %v1400, 0.5
          %v1402 = vmul.f32 %v1390, %v1322
          %v1403 = vmul.f32 %v1397, %v1365
          %v1404 = vadd.f32 %v1402, %v1403
          %v1405 = vmul.f32 %v1404, 0.5
          %v1406 = vmul.f32 %v1390, %v1326
          %v1407 = vmul.f32 %v1397, %v1362
          %v1408 = vadd.f32 %v1406, %v1407
          %v1409 = vmul.f32 %v1408, 0.5
          %v1410 = vmul.f32 %v1390, %v1330
          %v1411 = vmul.f32 %v1397, %v1368
          %v1412 = vadd.f32 %v1410, %v1411
          %v1413 = vmul.f32 %v1412, 0.5
          %v1414 = vmul.f32 %v1390, %v1334
          %v1415 = vmul.f32 %v1397, %v1371
          %v1416 = vadd.f32 %v1414, %v1415
          %v1417 = vmul.f32 %v1416, 0.5
          %v1418 = vmul.f32 %v1390, %v1338
          %v1419 = vmul.f32 %v1397, %v1374
          %v1420 = vadd.f32 %v1418, %v1419
          %v1421 = vmul.f32 %v1420, 0.5
          %v1422 = vmul.f32 %v1390, %v1342
          %v1423 = vmul.f32 %v1397, %v1377
          %v1424 = vadd.f32 %v1422, %v1423
          %v1425 = vmul.f32 %v1424, 0.5
          %v1426 = vmul.f32 %v1390, %v1346
          %v1427 = vmul.f32 %v1397, %v1380
          %v1428 = vadd.f32 %v1426, %v1427
          %v1429 = vmul.f32 %v1428, 0.5
          %v1430 = vmul.f32 %v1390, %v1350
          %v1431 = vmul.f32 %v1397, %v1383
          %v1432 = vadd.f32 %v1430, %v1431
          %v1433 = vmul.f32 %v1432, 0.5
          %v1434 = vmul.f32 %v1409, %v362
          %v1435 = vmul.f32 %v1421, %v362
          %v1436 = vmul.f32 %v1433, %v362
          %vm1437 = vcmask 0
          %1438 = vst.msk [vmem:[#allocation5] sm:$0x1] %vm1437, %v1401
          %1440 = vrot.lane.b32.xlu0 %v1405, 1
          %v1441 = vpop.permute.xlu0 %1440
          %vm1443 = vcmask 8200
          %1444 = vst.msk [vmem:[#allocation5] sm:$0x1] %vm1443, %v1441
          %1446 = vrot.lane.b32.xlu0 %v1434, 2
          %v1447 = vpop.permute.xlu0 %1446
          %vm1449 = vcmask 16400
          %1450 = vst.msk [vmem:[#allocation5] sm:$0x1] %vm1449, %v1447
          %1451 = vst.msk [vmem:[#allocation5 + $0x1] sm:$0x1] %vm1437, %v1413
          %1453 = vrot.lane.b32.xlu0 %v1417, 1
          %v1454 = vpop.permute.xlu0 %1453
          %1456 = vst.msk [vmem:[#allocation5 + $0x1] sm:$0x1] %vm1443, %v1454
          %1458 = vrot.lane.b32.xlu0 %v1435, 2
          %v1459 = vpop.permute.xlu0 %1458
          %1461 = vst.msk [vmem:[#allocation5 + $0x1] sm:$0x1] %vm1449, %v1459
          %1462 = vst.msk [vmem:[#allocation5 + $0x2] sm:$0x1] %vm1437, %v1425
          %1464 = vrot.lane.b32.xlu0 %v1429, 1
          %v1465 = vpop.permute.xlu0 %1464
          %1467 = vst.msk [vmem:[#allocation5 + $0x2] sm:$0x1] %vm1443, %v1465
          %1469 = vrot.lane.b32.xlu0 %v1436, 2
          %v1470 = vpop.permute.xlu0 %1469
          %1472 = vst.msk [vmem:[#allocation5 + $0x2] sm:$0x1] %vm1449, %v1470
        $region48: #{tpu_custom_call.1} parent=27 // pred_fallthru
          _
        // Predicated region
        $region49: #{tpu_custom_call.1} parent=27 // pred_check
          %p1473 = pneg %p229
        $region50: #{tpu_custom_call.1} parent=27 // pred_check_branch
          %1475 = sbr.rel (%p1473) target = $region52
        $region51: #{tpu_custom_call.1} parent=27 // pred_region
          %v1476 = vld [vmem:[#allocation2] sm:$0x7]
          %v1477 = vmul.f32 %v1476, 0.015625
          %v1478 = vld [vmem:[#allocation3] sm:$0x7]
          %v1479 = vmul.f32 %v1478, 0.015625
          %1481 = vset.pattern.permute.xlu0 0
          %1482 = vperm.xlu0 %1481, %v1477
          %v1483 = vpop.permute.xlu0 %1482
          %v1485 = vsub.f32 %v175, %v1483
          %1487 = vset.pattern.permute.xlu0 0
          %1488 = vperm.xlu0 %1487, %v1479
          %v1489 = vpop.permute.xlu0 %1488
          %v1491 = vsub.f32 %v176, %v1489
          %v1492 = vld [vmem:[#allocation5] sm:$0x1]
          %1494 = vset.pattern.permute.xlu0 0
          %1495 = vperm.xlu0 %1494, %v1492
          %v1496 = vpop.permute.xlu0 %1495
          %v1498 = vmul.f32 %v1496, %v1485
          %v1499 = vld [vmem:[#allocation5 + $0x1] sm:$0x1]
          %1501 = vset.pattern.permute.xlu0 0
          %1502 = vperm.xlu0 %1501, %v1499
          %v1503 = vpop.permute.xlu0 %1502
          %v1506 = vrot.slane %v1485, 1
          %v1508 = vmul.f32 %v1503, %v1506
          %v1509 = vadd.f32 %v1498, %v1508
          %v1510 = vld [vmem:[#allocation5 + $0x2] sm:$0x1]
          %1512 = vset.pattern.permute.xlu0 0
          %1513 = vperm.xlu0 %1512, %v1510
          %v1514 = vpop.permute.xlu0 %1513
          %v1516 = vrot.slane %v1485, 2
          %v1518 = vmul.f32 %v1514, %v1516
          %v1519 = vadd.f32 %v1509, %v1518
          %v1520 = vsub.f32 %v1519, %v1491
          %v1521 = vmul.f32 %v1520, %v1520
          %v1522 = vadd.f32 %v1521, 0.0
          %1523 = vset.pattern.permute.xlu0 1
          %1524 = vperm.xlu0 %1523, %v1492
          %v1525 = vpop.permute.xlu0 %1524
          %v1527 = vmul.f32 %v1525, %v1485
          %1528 = vset.pattern.permute.xlu0 1
          %1529 = vperm.xlu0 %1528, %v1499
          %v1530 = vpop.permute.xlu0 %1529
          %v1532 = vmul.f32 %v1530, %v1506
          %v1533 = vadd.f32 %v1527, %v1532
          %1534 = vset.pattern.permute.xlu0 1
          %1535 = vperm.xlu0 %1534, %v1510
          %v1536 = vpop.permute.xlu0 %1535
          %v1538 = vmul.f32 %v1536, %v1516
          %v1539 = vadd.f32 %v1533, %v1538
          %v1541 = vrot.slane %v1491, 1
          %v1543 = vsub.f32 %v1539, %v1541
          %v1544 = vmul.f32 %v1543, %v1543
          %v1545 = vadd.f32 %v1522, %v1544
          %1546 = vset.pattern.permute.xlu0 2
          %1547 = vperm.xlu0 %1546, %v1492
          %v1548 = vpop.permute.xlu0 %1547
          %v1550 = vmul.f32 %v1548, %v1485
          %1551 = vset.pattern.permute.xlu0 2
          %1552 = vperm.xlu0 %1551, %v1499
          %v1553 = vpop.permute.xlu0 %1552
          %v1555 = vmul.f32 %v1553, %v1506
          %v1556 = vadd.f32 %v1550, %v1555
          %1557 = vset.pattern.permute.xlu0 2
          %1558 = vperm.xlu0 %1557, %v1510
          %v1559 = vpop.permute.xlu0 %1558
          %v1561 = vmul.f32 %v1559, %v1516
          %v1562 = vadd.f32 %v1556, %v1561
          %v1563 = vrot.slane %v1491, 2
          %v1565 = vsub.f32 %v1562, %v1563
          %v1566 = vmul.f32 %v1565, %v1565
          %v1567 = vadd.f32 %v1545, %v1566
          %v1568 = vmul.f32 %v1567, 0.13343795
          %v1569 = vadd.f32 %v1568, 1.0
          %v1570 = vrcp.pop %v1569
          %v1571 = vmul.f32 1.0, %v1570
          %v1572 = vlaneseq
          %v1573 = vand.u32 %v1572, 127
          %s1574 = smul.u32 %s21, 128
          %v1575 = vstv %s1574
          %v1576 = vadd.s32 %v1575, %v1573
          %vm1577 = vcmp.lt.s32.totalorder %v1576, 64
          %v1578 = vsel %vm1577, %v1571, 0.0
          %v1579 = vld [vmem:[#allocation6] sm:$0x1]
          %vm1580 = vcmask 1040384
          %v1581 = vsel %vm1580, %v1578, 0.0
          %1582 = vadd.xlane.f32.xlu0 %v1581
          %v1583 = vpop.xlane.xlu0 %1582
          %v1584 = vadd.f32 %v1579, %v1583
          %vm1585 = vcmask 0
          %1586 = vst.msk [vmem:[#allocation6] sm:$0x1] %vm1585, %v1584
        $region52: #{tpu_custom_call.1} parent=27 // pred_fallthru
          _
        // Predicated region
        $region53: #{tpu_custom_call.1} parent=27 // pred_check
          _
        $region54: #{tpu_custom_call.1} parent=27 // pred_check_branch
          %1588 = sbr.rel (%p230) target = $region56
        $region55: #{tpu_custom_call.1} parent=27 // pred_region
          %v1589 = vld [vmem:[#allocation6] sm:$0x1]
          %v1590 = vmul.f32 %v1589, 0.015625
          %vm1591 = vcmask 0
          %1592 = vst.msk [vmem:[#allocation12] sm:$0x1] %vm1591, %v1590
        $region56: #{tpu_custom_call.1} parent=27 // pred_fallthru
          _
        // Predicated region
        $region57: #{tpu_custom_call.1} parent=27 // pred_check
          %p1593 = pneg %p93
        $region58: #{tpu_custom_call.1} parent=27 // pred_check_branch
          %1595 = sbr.rel (%p1593) target = $region60
        $region59: #{tpu_custom_call.1} parent=27 // pred_region
          %s1597 = ssub.s32 16, 16
          %1598 = vsyncadd [#allocation9], %s1597
          %s1600 = sshll.u32 [#allocation12], 4
          %s1601 = int_to_ptr.vmem [resolvable:$true] %s1600
          %1603 = dma.vmem_to_hbm [thread:$0]  %s1601, 16, %s2, [#allocation9]
        $region60: #{tpu_custom_call.1} parent=27 // pred_fallthru
          _
        // Predicated region
        $region61: #{tpu_custom_call.1} parent=27 // pred_check
          %p1604 = pneg %p93
        $region62: #{tpu_custom_call.1} parent=27 // pred_check_branch
          %1606 = sbr.rel (%p1604) target = $region64
        $region63: #{tpu_custom_call.1} parent=27 // pred_region
          %1607 = dma.done [#allocation9], 16
        $region64: #{tpu_custom_call.1} parent=27 // pred_fallthru
          _
      $region28: #{tpu_custom_call.1} parent=5 // pred_fallthru
        _
      %p1608 = scmp.le.s32.totalorder 2, %s11
      // Predicated region
      $region65: #{tpu_custom_call.1} parent=5 // pred_check
        %p1609 = pneg %p1608
      $region66: #{tpu_custom_call.1} parent=5 // pred_check_branch
        %1611 = sbr.rel (%p1609) target = $region68
      $region67: #{tpu_custom_call.1} parent=5 // pred_region
        %s1612 = ssub.s32 %s11, 2
      $region68: #{tpu_custom_call.1} parent=5 // pred_fallthru
        _
    $region6: #{tpu_custom_call.1} parent=1 // loop_footer
      %s15 = sadd.s32 1, %s11
    $region7: #{tpu_custom_call.1} parent=1 // loop_footer_branch
      %10 = sbr.rel target = $region3
    $region8: #{tpu_custom_call.1} parent=1 // loop_exit
      _
    %1613 = vsyncpa [#allocation8], 1
    %s1614 = scalar_lea.sflag [#allocation8], 1
    %1615 = vsyncpa %s1614, 1
    %1616 = vsyncpa [#allocation11], 1
    %1617 = vsyncpa [#allocation9], 1
    %s1618 = scalar_lea.sflag [#allocation9], 1
    %1619 = vsyncpa %s1618, 1

</llo_original>
